<compile_context>
chip_gen: v7x
topology: tpu7x:2x2x1
jax: 0.10.0
libtpu: 0.0.40
codegen_flags: <defaults>
</compile_context>

<pallas_src>
import functools

import jax
import jax.numpy as jnp
from jax import lax
from jax.experimental import pallas as pl
from jax.experimental.pallas import tpu as pltpu

LANE = 128
SUBLANE = 8


def _round_up(x, m):
    return (x + m - 1) // m * m


def _largest_divisor_leq(n, cap):
    cap = max(1, min(n, cap))
    for d in range(cap, 0, -1):
        if n % d == 0:
            return d
    return 1


def _pick_groups_per_block(G, H, W):
    """Plane-groups (128 planes each) per grid step.

    Honors the (8,128) block rule (sublane block dim must be a multiple of 8 or
    cover the whole padded group axis), targets ~6 MB of in+out block bytes per
    step (~12 MB double-buffered), minimizes plane-group padding, and prefers
    >= 2 plane steps when that is free.
    """
    per_group = ((H + 2) * (W + 2) + H * W) * LANE * 4   # dense f32 in+out per group
    budget = 6 * 1024 * 1024
    cap = max(1, budget // per_group)
    if G <= cap:
        if G >= 16 and (G // 2) % SUBLANE == 0:
            return G // 2                     # two plane steps, no padding needed
        return G                              # one plane step (H-split adds parallelism)
    if cap >= SUBLANE:
        s_max = (cap // SUBLANE) * SUBLANE
        # 8-multiple with minimal plane padding; tie-break towards bigger blocks.
        return min(range(SUBLANE, s_max + 1, SUBLANE),
                   key=lambda s: (_round_up(G, s), -s))
    # Very large spatial planes: the smallest legal multi-step block is 8 groups.
    # TODO(synk): for huge H*W also split H in the *input* (manual DMA of the halo).
    return SUBLANE if G >= SUBLANE else G


def _dwconv_kernel(w_ref, b_ref, x_ref, o_ref, *, act, hc, split_h):
    # w_ref: SMEM (3, 3) f32   -- shared 3x3 filter
    # b_ref: SMEM (1,)  f32    -- shared bias
    # x_ref: VMEM (H+2, W+2, S, 128) zero-haloed planes-last block (full H extent)
    # o_ref: VMEM (Hb,  W,   S, 128) output block (Hb = H, or H//2 when split_h)
    Hb, W, _, _ = o_ref.shape
    h0 = pl.program_id(1) * Hb if split_h else 0

    # Hoist the 9 shared weights + bias into scalars once (SMEM reads).
    w = [[w_ref[di, dj] for dj in range(3)] for di in range(3)]
    bias = b_ref[0]

    n_chunks = Hb // hc

    def chunk_body(r, carry):
        row = h0 + r * hc
        acc = None
        for di in range(3):
            for dj in range(3):
                # Both slice axes are major (untiled) dims -> pure offset loads.
                tap = x_ref[pl.ds(row + di, hc), dj:dj + W, :, :].astype(jnp.float32)
                if acc is None:
                    acc = w[di][dj] * tap + bias      # bias folded into the init
                else:
                    acc = acc + w[di][dj] * tap
        if act:
            acc = jnp.maximum(acc, 0.0)               # ReLU
        o_ref[pl.ds(r * hc, hc), :, :, :] = acc.astype(o_ref.dtype)
        return carry

    # Real loop (not unrolled) bounds the accumulator live range per chunk.
    lax.fori_loop(0, n_chunks, chunk_body, 0)


def depthwise_block_forward(x, weight, bias, act=True):
    """x: (B, C, H, W). weight: (3, 3). bias: (1,). Shared 3x3 conv (+ReLU) per plane."""
    B, C, H, W = x.shape
    N = B * C

    G = (N + LANE - 1) // LANE                 # 128-plane groups
    S = _pick_groups_per_block(G, H, W)        # groups per grid step
    Gpad = _round_up(G, S)
    npad = Gpad * LANE

    # Single relayout pass: plane padding + spatial zero halo + split planes into
    # (group, lane) and move them onto the two minor (sublane, lane) dims.
    xs = jnp.pad(x.reshape(N, H, W), ((0, npad - N), (1, 1), (1, 1)))
    xt = jnp.transpose(xs.reshape(Gpad, LANE, H + 2, W + 2), (2, 3, 0, 1))

    n_plane_blocks = Gpad // S
    split_h = (n_plane_blocks == 1) and (H % 2 == 0) and (H >= 4)
    n_h_blocks = 2 if split_h else 1
    Hb = H // n_h_blocks

    # Inner row-chunk size: keep each chunk's f32 accumulator at ~16-32 vregs.
    hc = _largest_divisor_leq(Hb, max(1, 256 // (W * S)))

    kernel = functools.partial(_dwconv_kernel, act=act, hc=hc, split_h=split_h)

    # VMEM accounting: double-buffered in+out blocks, sublane dim padded to x8.
    s_eff = _round_up(S, SUBLANE)
    vmem_needed = 2 * ((H + 2) * (W + 2) + Hb * W) * s_eff * LANE * 4
    vmem_limit = min(96 << 20, max(32 << 20, vmem_needed + (4 << 20)))

    out_t = pl.pallas_call(
        kernel,
        out_shape=jax.ShapeDtypeStruct((H, W, Gpad, LANE), x.dtype),
        grid=(n_plane_blocks, n_h_blocks),
        in_specs=[
            pl.BlockSpec(memory_space=pltpu.MemorySpace.SMEM),               # 3x3 weight
            pl.BlockSpec(memory_space=pltpu.MemorySpace.SMEM),               # bias
            pl.BlockSpec((H + 2, W + 2, S, LANE), lambda p, h: (0, 0, p, 0)),
        ],
        out_specs=pl.BlockSpec((Hb, W, S, LANE), lambda p, h: (h, 0, p, 0)),
        compiler_params=pltpu.CompilerParams(
            dimension_semantics=("parallel", "parallel"),
            vmem_limit_bytes=vmem_limit,
        ),
    )(weight.astype(jnp.float32), bias.astype(jnp.float32), xt)

    # Inverse relayout: back to NCHW, dropping lane/group padding planes.
    out = jnp.transpose(out_t, (2, 3, 0, 1)).reshape(npad, H, W)[:N]
    return out.reshape(B, C, H, W)


def _reference(x, weight, bias, act=True):
    # Pure-JAX reference: shared 3x3 conv applied per (b, c) plane.
    B, C, H, W = x.shape
    xp = x.reshape(B * C, 1, H, W)
    w = weight.reshape(1, 1, 3, 3)
    y = jax.lax.conv_general_dilated(
        xp, w, window_strides=(1, 1), padding=((1, 1), (1, 1)),
        dimension_numbers=("NCHW", "OIHW", "NCHW"))
    y = y + bias.reshape(1, 1, 1, 1)
    if act:
        y = jnp.maximum(y, 0.0)
    return y.reshape(B, C, H, W)


if __name__ == "__main__":
    key = jax.random.PRNGKey(0)
    kx, kw, kb = jax.random.split(key, 3)

    B, C, H, W = 2, 4, 16, 16
    x = jax.random.normal(kx, (B, C, H, W), dtype=jnp.float32)

    # Deterministic parameter init (Conv2d(1,1,3): fan_in = 9, bound = 1/3).
    bound = 1.0 / 3.0
    weight = jax.random.uniform(kw, (3, 3), jnp.float32, -bound, bound)
    bias = jax.random.uniform(kb, (1,), jnp.float32, -bound, bound)

    out = depthwise_block_forward(x, weight, bias, act=True)
    out = jax.block_until_ready(out)

    ref = _reference(x, weight, bias, act=True)
    assert out.shape == (B, C, H, W)
    assert jnp.allclose(out, ref, atol=1e-5, rtol=1e-5)

    print("KERNEL_OK")
</pallas_src>

<mosaic_0001>
module attributes {stable_mosaic.version = 11 : i64} {
  func.func @_dwconv_kernel(%arg0: i32, %arg1: i32, %arg2: memref<3x3xf32, #tpu.memory_space<smem>>, %arg3: memref<1xf32, #tpu.memory_space<smem>>, %arg4: memref<18x18x1x128xf32, #tpu.memory_space<vmem>>, %arg5: memref<8x16x1x128xf32, #tpu.memory_space<vmem>>) attributes {dimension_semantics = [#tpu.dimension_semantics<parallel>, #tpu.dimension_semantics<parallel>], iteration_bounds = array<i64: 1, 2>, scalar_prefetch = 0 : i64, scratch_operands = 0 : i64, tpu.core_type = #tpu.core_type<tc>, window_params = [{transform_indices = @transform_0, window_bounds = array<i64: 3, 3>}, {transform_indices = @transform_1, window_bounds = array<i64: 1>}, {transform_indices = @transform_2, window_bounds = array<i64: 18, 18, 1, 128>}, {transform_indices = @transform_3, window_bounds = array<i64: 8, 16, 1, 128>}]} {
    %c8_i32 = arith.constant 8 : i32
    %0 = arith.muli %arg1, %c8_i32 : i32
    %c0 = arith.constant 0 : index
    %c0_0 = arith.constant 0 : index
    %1 = memref.load %arg2[%c0, %c0_0] : memref<3x3xf32, #tpu.memory_space<smem>>
    %c0_1 = arith.constant 0 : index
    %c1 = arith.constant 1 : index
    %2 = memref.load %arg2[%c0_1, %c1] : memref<3x3xf32, #tpu.memory_space<smem>>
    %c0_2 = arith.constant 0 : index
    %c2 = arith.constant 2 : index
    %3 = memref.load %arg2[%c0_2, %c2] : memref<3x3xf32, #tpu.memory_space<smem>>
    %c1_3 = arith.constant 1 : index
    %c0_4 = arith.constant 0 : index
    %4 = memref.load %arg2[%c1_3, %c0_4] : memref<3x3xf32, #tpu.memory_space<smem>>
    %c1_5 = arith.constant 1 : index
    %c1_6 = arith.constant 1 : index
    %5 = memref.load %arg2[%c1_5, %c1_6] : memref<3x3xf32, #tpu.memory_space<smem>>
    %c1_7 = arith.constant 1 : index
    %c2_8 = arith.constant 2 : index
    %6 = memref.load %arg2[%c1_7, %c2_8] : memref<3x3xf32, #tpu.memory_space<smem>>
    %c2_9 = arith.constant 2 : index
    %c0_10 = arith.constant 0 : index
    %7 = memref.load %arg2[%c2_9, %c0_10] : memref<3x3xf32, #tpu.memory_space<smem>>
    %c2_11 = arith.constant 2 : index
    %c1_12 = arith.constant 1 : index
    %8 = memref.load %arg2[%c2_11, %c1_12] : memref<3x3xf32, #tpu.memory_space<smem>>
    %c2_13 = arith.constant 2 : index
    %c2_14 = arith.constant 2 : index
    %9 = memref.load %arg2[%c2_13, %c2_14] : memref<3x3xf32, #tpu.memory_space<smem>>
    %c0_15 = arith.constant 0 : index
    %10 = memref.load %arg3[%c0_15] : memref<1xf32, #tpu.memory_space<smem>>
    %c0_i32 = arith.constant 0 : i32
    %c8_i32_16 = arith.constant 8 : i32
    %11 = arith.muli %c0_i32, %c8_i32_16 : i32
    %12 = arith.addi %0, %11 : i32
    %c0_i32_17 = arith.constant 0 : i32
    %13 = arith.addi %12, %c0_i32_17 : i32
    %14 = arith.index_cast %13 : i32 to index
    %c0_18 = arith.constant 0 : index
    %c0_19 = arith.constant 0 : index
    %c0_20 = arith.constant 0 : index
    %15 = vector.load %arg4[%14, %c0_18, %c0_19, %c0_20] : memref<18x18x1x128xf32, #tpu.memory_space<vmem>>, vector<8x16x1x128xf32>
    %16 = vector.broadcast %1 : f32 to vector<8x16x1x128xf32>
    %17 = arith.mulf %16, %15 : vector<8x16x1x128xf32>
    %18 = vector.broadcast %10 : f32 to vector<8x16x1x128xf32>
    %19 = arith.addf %17, %18 : vector<8x16x1x128xf32>
    %c0_i32_21 = arith.constant 0 : i32
    %20 = arith.addi %12, %c0_i32_21 : i32
    %21 = arith.index_cast %20 : i32 to index
    %c1_22 = arith.constant 1 : index
    %c0_23 = arith.constant 0 : index
    %c0_24 = arith.constant 0 : index
    %22 = vector.load %arg4[%21, %c1_22, %c0_23, %c0_24] : memref<18x18x1x128xf32, #tpu.memory_space<vmem>>, vector<8x16x1x128xf32>
    %23 = vector.broadcast %2 : f32 to vector<8x16x1x128xf32>
    %24 = arith.mulf %23, %22 : vector<8x16x1x128xf32>
    %25 = arith.addf %19, %24 : vector<8x16x1x128xf32>
    %c0_i32_25 = arith.constant 0 : i32
    %26 = arith.addi %12, %c0_i32_25 : i32
    %27 = arith.index_cast %26 : i32 to index
    %c2_26 = arith.constant 2 : index
    %c0_27 = arith.constant 0 : index
    %c0_28 = arith.constant 0 : index
    %28 = vector.load %arg4[%27, %c2_26, %c0_27, %c0_28] : memref<18x18x1x128xf32, #tpu.memory_space<vmem>>, vector<8x16x1x128xf32>
    %29 = vector.broadcast %3 : f32 to vector<8x16x1x128xf32>
    %30 = arith.mulf %29, %28 : vector<8x16x1x128xf32>
    %31 = arith.addf %25, %30 : vector<8x16x1x128xf32>
    %c1_i32 = arith.constant 1 : i32
    %32 = arith.addi %12, %c1_i32 : i32
    %33 = arith.index_cast %32 : i32 to index
    %c0_29 = arith.constant 0 : index
    %c0_30 = arith.constant 0 : index
    %c0_31 = arith.constant 0 : index
    %34 = vector.load %arg4[%33, %c0_29, %c0_30, %c0_31] : memref<18x18x1x128xf32, #tpu.memory_space<vmem>>, vector<8x16x1x128xf32>
    %35 = vector.broadcast %4 : f32 to vector<8x16x1x128xf32>
    %36 = arith.mulf %35, %34 : vector<8x16x1x128xf32>
    %37 = arith.addf %31, %36 : vector<8x16x1x128xf32>
    %c1_i32_32 = arith.constant 1 : i32
    %38 = arith.addi %12, %c1_i32_32 : i32
    %39 = arith.index_cast %38 : i32 to index
    %c1_33 = arith.constant 1 : index
    %c0_34 = arith.constant 0 : index
    %c0_35 = arith.constant 0 : index
    %40 = vector.load %arg4[%39, %c1_33, %c0_34, %c0_35] : memref<18x18x1x128xf32, #tpu.memory_space<vmem>>, vector<8x16x1x128xf32>
    %41 = vector.broadcast %5 : f32 to vector<8x16x1x128xf32>
    %42 = arith.mulf %41, %40 : vector<8x16x1x128xf32>
    %43 = arith.addf %37, %42 : vector<8x16x1x128xf32>
    %c1_i32_36 = arith.constant 1 : i32
    %44 = arith.addi %12, %c1_i32_36 : i32
    %45 = arith.index_cast %44 : i32 to index
    %c2_37 = arith.constant 2 : index
    %c0_38 = arith.constant 0 : index
    %c0_39 = arith.constant 0 : index
    %46 = vector.load %arg4[%45, %c2_37, %c0_38, %c0_39] : memref<18x18x1x128xf32, #tpu.memory_space<vmem>>, vector<8x16x1x128xf32>
    %47 = vector.broadcast %6 : f32 to vector<8x16x1x128xf32>
    %48 = arith.mulf %47, %46 : vector<8x16x1x128xf32>
    %49 = arith.addf %43, %48 : vector<8x16x1x128xf32>
    %c2_i32 = arith.constant 2 : i32
    %50 = arith.addi %12, %c2_i32 : i32
    %51 = arith.index_cast %50 : i32 to index
    %c0_40 = arith.constant 0 : index
    %c0_41 = arith.constant 0 : index
    %c0_42 = arith.constant 0 : index
    %52 = vector.load %arg4[%51, %c0_40, %c0_41, %c0_42] : memref<18x18x1x128xf32, #tpu.memory_space<vmem>>, vector<8x16x1x128xf32>
    %53 = vector.broadcast %7 : f32 to vector<8x16x1x128xf32>
    %54 = arith.mulf %53, %52 : vector<8x16x1x128xf32>
    %55 = arith.addf %49, %54 : vector<8x16x1x128xf32>
    %c2_i32_43 = arith.constant 2 : i32
    %56 = arith.addi %12, %c2_i32_43 : i32
    %57 = arith.index_cast %56 : i32 to index
    %c1_44 = arith.constant 1 : index
    %c0_45 = arith.constant 0 : index
    %c0_46 = arith.constant 0 : index
    %58 = vector.load %arg4[%57, %c1_44, %c0_45, %c0_46] : memref<18x18x1x128xf32, #tpu.memory_space<vmem>>, vector<8x16x1x128xf32>
    %59 = vector.broadcast %8 : f32 to vector<8x16x1x128xf32>
    %60 = arith.mulf %59, %58 : vector<8x16x1x128xf32>
    %61 = arith.addf %55, %60 : vector<8x16x1x128xf32>
    %c2_i32_47 = arith.constant 2 : i32
    %62 = arith.addi %12, %c2_i32_47 : i32
    %63 = arith.index_cast %62 : i32 to index
    %c2_48 = arith.constant 2 : index
    %c0_49 = arith.constant 0 : index
    %c0_50 = arith.constant 0 : index
    %64 = vector.load %arg4[%63, %c2_48, %c0_49, %c0_50] : memref<18x18x1x128xf32, #tpu.memory_space<vmem>>, vector<8x16x1x128xf32>
    %65 = vector.broadcast %9 : f32 to vector<8x16x1x128xf32>
    %66 = arith.mulf %65, %64 : vector<8x16x1x128xf32>
    %67 = arith.addf %61, %66 : vector<8x16x1x128xf32>
    %cst = arith.constant 0.000000e+00 : f32
    %68 = vector.broadcast %cst : f32 to vector<8x16x1x128xf32>
    %69 = arith.maximumf %67, %68 : vector<8x16x1x128xf32>
    %c8_i32_51 = arith.constant 8 : i32
    %70 = arith.muli %c0_i32, %c8_i32_51 : i32
    %71 = arith.index_cast %70 : i32 to index
    %c0_52 = arith.constant 0 : index
    %c0_53 = arith.constant 0 : index
    %c0_54 = arith.constant 0 : index
    %72 = vector.load %arg5[%71, %c0_52, %c0_53, %c0_54] : memref<8x16x1x128xf32, #tpu.memory_space<vmem>>, vector<8x16x1x128xf32>
    tpu.vector_store %arg5[%71, %c0_52, %c0_53, %c0_54], %69 {strides = array<i32>} : memref<8x16x1x128xf32, #tpu.memory_space<vmem>>, vector<8x16x1x128xf32>,
    %c1_i32_55 = arith.constant 1 : i32
    return
  }
  func.func @transform_0(%arg0: i32, %arg1: i32) -> (i32, i32) {
    %c0_i32 = arith.constant 0 : i32
    %c0_i32_0 = arith.constant 0 : i32
    %c0_i32_1 = arith.constant 0 : i32
    return %c0_i32, %c0_i32_0 : i32, i32
  }
  func.func @transform_1(%arg0: i32, %arg1: i32) -> i32 {
    %c0_i32 = arith.constant 0 : i32
    %c0_i32_0 = arith.constant 0 : i32
    return %c0_i32 : i32
  }
  func.func @transform_2(%arg0: i32, %arg1: i32) -> (i32, i32, i32, i32) {
    %c0_i32 = arith.constant 0 : i32
    %c0_i32_0 = arith.constant 0 : i32
    %c0_i32_1 = arith.constant 0 : i32
    %c0_i32_2 = arith.constant 0 : i32
    return %c0_i32, %c0_i32_0, %arg0, %c0_i32_1 : i32, i32, i32, i32
  }
  func.func @transform_3(%arg0: i32, %arg1: i32) -> (i32, i32, i32, i32) {
    %c0_i32 = arith.constant 0 : i32
    %c0_i32_0 = arith.constant 0 : i32
    %c0_i32_1 = arith.constant 0 : i32
    return %arg1, %c0_i32, %arg0, %c0_i32_0 : i32, i32, i32, i32
  }
}

</mosaic_0001>

<llo_original>
// kernel: tpu_custom_call.1
$region0: #{tpu_custom_call.1}
  #allocation0 [shape = 'u32[]', space=smem, size = 0x4, offset = 0x4, fixed_abs, tag = 'smem constant byte address 0x4 - core index']
  #allocation1 [shape = 'u32[144,128]{1,0:T(1,128)}', space=vmem, size = 0x12000, scoped, tag = 'internal scratch']
  #allocation2 [shape = 'f32[1]{0:T(128)S(6)}', space=smem, size = 0x200, scoped, tag = 'scoped memory for tpu_custom_call.1']
  %s0 = inlined_call_operand.hbm [shape: f32[3,3], index: 0, kind: input, shape index: {}]
  %s1 = inlined_call_operand.<no memory space> [shape: f32[1], index: 1, kind: input, shape index: {}]
  %s2 = inlined_call_operand.hbm [shape: f32[18,18,1,128], index: 2, kind: input, shape index: {}]
  %s3 = inlined_call_operand.hbm [shape: f32[16,16,1,128], index: 3, kind: output, shape index: {}]
  %s4 = sld [smem:[#allocation0]]
  $region53: #{tpu_custom_call.1} parent=0
    _
  %s6 = ssub.s32 1, %s4
  %s7 = scalar_select 0, %s6, %s4
  %8 = sst [smem:[#allocation2]] %s1
  $region1: #{tpu_custom_call.1} parent=0
    #allocation3 [shape = 'u8[2048]{0}', space=smem, size = 0x800, scoped, tag = 'input window, operand 0, single buffered']
    #allocation4 [shape = 's32[2]{0}', space=sflag, size = 0x8, scoped, tag = 'scoped memory for tpu_custom_call.1']
    #allocation5 [shape = 's32[2]{0}', space=sflag, size = 0x8, scoped, tag = 'scoped memory for tpu_custom_call.1']
    #allocation6 [shape = 's32[2]{0}', space=sflag, size = 0x8, scoped, tag = 'scoped memory for tpu_custom_call.1']
    #allocation7 [shape = 'u8[165888]{0}', space=vmem, size = 0x28800, scoped, tag = 'input window, operand 2, single buffered']
    #allocation8 [shape = 'u8[131072]{0}', space=vmem, size = 0x20000, scoped, tag = 'output window, operand 0']
    %9 = vsyncpa [#allocation6], 0
    %10 = vsyncpa [#allocation4], 0
    %11 = vsyncpa [#allocation5], 0
    %s12 = scalar_lea.sflag [#allocation5], 1
    %13 = vsyncpa %s12, 0
    loop: start=0, step=1, limit=4
    $region2: #{tpu_custom_call.1} parent=1 // loop_pre_header
      _
    $region3: #{tpu_custom_call.1} parent=1 // loop_header
      %s15 = sphi 0, %s19
      %p16 = scmp.ge.s32.totalorder %s15, 4
      %s22 = sphi 0, %s34
      %s23 = sphi 0, %s30
      %s24 = sphi 0, %s22
      %s25 = sphi 0, %s23
      %s26 = sphi 0, %s24
      %s27 = sphi 0, %s25
      %s35 = sphi 0, %s35
      %s37 = sphi 0, %s35
      %s38 = sphi 0, %s37
      %s52 = sphi 0, %s38
      %s56 = sphi 0, %s56
      %s58 = sphi 0, %s56
      %s59 = sphi 0, %s58
      %s73 = sphi 0, %s59
      %s79 = sphi 0, %s81
      %s82 = sphi 0, %s79
      %s83 = sphi 0, %s82
      %s99 = sphi 0, %s83
      %s107 = sphi 0, %s109
      %s110 = sphi 0, %s107
      %s111 = sphi 0, %s110
      %s127 = sphi 0, %s111
    $region4: #{tpu_custom_call.1} parent=1 // loop_header_branch
      %18 = sbr.rel (%p16) target = $region8
    $region5: #{tpu_custom_call.1} parent=1 // loop_body
      %s20 = ssub.s32 %s15, 1
      %s21 = ssub.s32 %s15, 2
      %s28 = sadd.s32 1, %s23
      %p29 = scmp.ge.s32.totalorder %s28, 2
      %s30 = scalar_select %p29, 0, %s28
      %s31 = sadd.s32 1, %s22
      %s32 = scalar_select %p29, %s31, %s22
      %p33 = scmp.ge.s32.totalorder %s32, 1
      %s34 = scalar_select %p33, 0, %s32
      %s36 = sadd.s32 %s35, 1
      %p39 = scmp.eq.s32.totalorder %s15, 1
      %p40 = scmp.ne.s32.totalorder %s35, %s37
      %p41 = scmp.eq.s32.totalorder %s15, 0
      %p42 = por %p40, %p41
      %p43 = scmp.ne.s32.totalorder %s35, %s37
      %p44 = scmp.eq.s32.totalorder %s20, 1
      %p45 = por %p43, %p44
      %p46 = scmp.ne.s32.totalorder %s37, %s38
      %p47 = scmp.eq.s32.totalorder %s20, 0
      %p48 = por %p46, %p47
      %p49 = scmp.ne.s32.totalorder %s37, %s38
      %p50 = scmp.eq.s32.totalorder %s21, 1
      %p51 = por %p49, %p50
      %p53 = scmp.ne.s32.totalorder %s38, %s52
      %p54 = scmp.eq.s32.totalorder %s21, 0
      %p55 = por %p53, %p54
      %s57 = sadd.s32 %s56, 1
      %p60 = scmp.eq.s32.totalorder %s15, 1
      %p61 = scmp.ne.s32.totalorder %s56, %s58
      %p62 = scmp.eq.s32.totalorder %s15, 0
      %p63 = por %p61, %p62
      %p64 = scmp.ne.s32.totalorder %s56, %s58
      %p65 = scmp.eq.s32.totalorder %s20, 1
      %p66 = por %p64, %p65
      %p67 = scmp.ne.s32.totalorder %s58, %s59
      %p68 = scmp.eq.s32.totalorder %s20, 0
      %p69 = por %p67, %p68
      %p70 = scmp.ne.s32.totalorder %s58, %s59
      %p71 = scmp.eq.s32.totalorder %s21, 1
      %p72 = por %p70, %p71
      %p74 = scmp.ne.s32.totalorder %s59, %s73
      %p75 = scmp.eq.s32.totalorder %s21, 0
      %p76 = por %p74, %p75
      %s77 = ssub.s32 %s22, %s34
      %p78 = scmp.eq.s32.totalorder %s77, 0
      %s80 = sadd.s32 %s79, 1
      %s81 = scalar_select %p78, %s79, %s80
      %p84 = pneg %p78
      %p85 = scmp.eq.s32.totalorder %s15, 1
      %p86 = por %p84, %p85
      %p87 = scmp.ne.s32.totalorder %s79, %s82
      %p88 = scmp.eq.s32.totalorder %s15, 0
      %p89 = por %p87, %p88
      %p90 = scmp.ne.s32.totalorder %s79, %s82
      %p91 = scmp.eq.s32.totalorder %s20, 1
      %p92 = por %p90, %p91
      %p93 = scmp.ne.s32.totalorder %s82, %s83
      %p94 = scmp.eq.s32.totalorder %s20, 0
      %p95 = por %p93, %p94
      %p96 = scmp.ne.s32.totalorder %s82, %s83
      %p97 = scmp.eq.s32.totalorder %s21, 1
      %p98 = por %p96, %p97
      %p100 = scmp.ne.s32.totalorder %s83, %s99
      %p101 = scmp.eq.s32.totalorder %s21, 0
      %p102 = por %p100, %p101
      %s103 = ssub.s32 %s23, %s30
      %s104 = ssub.s32 %s22, %s34
      %s105 = sor.u32 %s103, %s104
      %p106 = scmp.eq.s32.totalorder %s105, 0
      %s108 = sadd.s32 %s107, 1
      %s109 = scalar_select %p106, %s107, %s108
      %p112 = pneg %p106
      %p113 = scmp.eq.s32.totalorder %s15, 1
      %p114 = por %p112, %p113
      %p115 = scmp.ne.s32.totalorder %s107, %s110
      %p116 = scmp.eq.s32.totalorder %s15, 0
      %p117 = por %p115, %p116
      %p118 = scmp.ne.s32.totalorder %s107, %s110
      %p119 = scmp.eq.s32.totalorder %s20, 1
      %p120 = por %p118, %p119
      %p121 = scmp.ne.s32.totalorder %s110, %s111
      %p122 = scmp.eq.s32.totalorder %s20, 0
      %p123 = por %p121, %p122
      %p124 = scmp.ne.s32.totalorder %s110, %s111
      %p125 = scmp.eq.s32.totalorder %s21, 1
      %p126 = por %p124, %p125
      %p128 = scmp.ne.s32.totalorder %s111, %s127
      %p129 = scmp.eq.s32.totalorder %s21, 0
      %p130 = por %p128, %p129
      %p131 = scmp.le.s32.totalorder 1, %s15
      %p132 = scmp.lt.s32.totalorder %s15, 3
      %p133 = pnand %p131, %p132
      %p134 = pneg %p133
      // Predicated region
      $region9: #{tpu_custom_call.1} parent=5 // pred_check
        _
      $region10: #{tpu_custom_call.1} parent=5 // pred_check_branch
        %136 = sbr.rel (%p133) target = $region12
      $region11: #{tpu_custom_call.1} parent=5 // pred_region
        %s137 = ssub.s32 %s15, 1
        // Predicated region
        $region13: #{tpu_custom_call.1} parent=11 // pred_check
          %p138 = pneg %p48
        $region14: #{tpu_custom_call.1} parent=11 // pred_check_branch
          %140 = sbr.rel (%p138) target = $region16
        $region15: #{tpu_custom_call.1} parent=11 // pred_region
          %s142 = ssub.s32 64, 64
          %143 = vsyncadd [#allocation6], %s142
          %146 = dma.hbm_to_smem %s0, 64, [#allocation3], [#allocation6]
        $region16: #{tpu_custom_call.1} parent=11 // pred_fallthru
          _
        // Predicated region
        $region17: #{tpu_custom_call.1} parent=11 // pred_check
          %p147 = pneg %p69
        $region18: #{tpu_custom_call.1} parent=11 // pred_check_branch
          %149 = sbr.rel (%p147) target = $region20
        $region19: #{tpu_custom_call.1} parent=11 // pred_region
          _
        $region20: #{tpu_custom_call.1} parent=11 // pred_fallthru
          _
        // Predicated region
        $region21: #{tpu_custom_call.1} parent=11 // pred_check
          %p150 = pneg %p95
        $region22: #{tpu_custom_call.1} parent=11 // pred_check_branch
          %152 = sbr.rel (%p150) target = $region24
        $region23: #{tpu_custom_call.1} parent=11 // pred_region
          %s154 = ssub.s32 5184, 5184
          %155 = vsyncadd [#allocation4], %s154
          %s156 = smul.addr %s24, 16
          %s157 = scalar_lea.hbm %s2, %s156
          %s158 = sshll.u32 [#allocation7], 4
          %s159 = int_to_ptr.vmem [resolvable:$true] %s158
          %164 = dma.hbm_to_vmem [thread:$0]  %s157, 5184, %s159, [#allocation4], 16, 16, 1
        $region24: #{tpu_custom_call.1} parent=11 // pred_fallthru
          _
      $region12: #{tpu_custom_call.1} parent=5 // pred_fallthru
        _
      %p165 = scmp.lt.s32.totalorder %s15, 2
      // Predicated region
      $region25: #{tpu_custom_call.1} parent=5 // pred_check
        %p166 = pneg %p165
      $region26: #{tpu_custom_call.1} parent=5 // pred_check_branch
        %168 = sbr.rel (%p166) target = $region28
      $region27: #{tpu_custom_call.1} parent=5 // pred_region
        _
      $region28: #{tpu_custom_call.1} parent=5 // pred_fallthru
        _
      %p169 = scmp.le.s32.totalorder 1, %s15
      %p170 = scmp.lt.s32.totalorder %s15, 3
      %p171 = pnand %p169, %p170
      %p172 = pneg %p171
      // Predicated region
      $region29: #{tpu_custom_call.1} parent=5 // pred_check
        _
      $region30: #{tpu_custom_call.1} parent=5 // pred_check_branch
        %174 = sbr.rel (%p171) target = $region32
      $region31: #{tpu_custom_call.1} parent=5 // pred_region
        %s175 = ssub.s32 %s15, 1
        // Predicated region
        $region33: #{tpu_custom_call.1} parent=31 // pred_check
          %p176 = pneg %p48
        $region34: #{tpu_custom_call.1} parent=31 // pred_check_branch
          %178 = sbr.rel (%p176) target = $region36
        $region35: #{tpu_custom_call.1} parent=31 // pred_region
          %179 = dma.done [#allocation6], 64
        $region36: #{tpu_custom_call.1} parent=31 // pred_fallthru
          _
        // Predicated region
        $region37: #{tpu_custom_call.1} parent=31 // pred_check
          %p180 = pneg %p95
        $region38: #{tpu_custom_call.1} parent=31 // pred_check_branch
          %182 = sbr.rel (%p180) target = $region40
        $region39: #{tpu_custom_call.1} parent=31 // pred_region
          %183 = dma.done [#allocation4], 5184
        $region40: #{tpu_custom_call.1} parent=31 // pred_fallthru
          _
        %184 = sfence
        %p185 = pneg %p48
        %p186 = pneg %p45
        %p187 = pneg %p69
        %p188 = pneg %p66
        %p189 = pneg %p95
        %p190 = pneg %p92
        %p191 = pneg %p123
        %p192 = pneg %p120
        %s193 = sand.u32 %s110, 1
        %s194 = scalar_lea.sflag [#allocation5], %s193
        %s195 = sand.u32 %s110, 1
        %s196 = smul.addr %s195, 128
        %s197 = scalar_lea.vmem [#allocation8], %s196
        %s198 = smul.u32 8, %s25
        %s199 = smul.u32 %s25, 8
        %s200 = sld [smem:[#allocation3]]
        %s201 = sld [smem:[#allocation3 + $0x1]]
        %s202 = sld [smem:[#allocation3 + $0x2]]
        %s203 = sld [smem:[#allocation3 + $0x80]]
        %s204 = sld [smem:[#allocation3 + $0x81]]
        %s205 = sld [smem:[#allocation3 + $0x82]]
        %s206 = sld [smem:[#allocation3 + $0x100]]
        %s207 = sld [smem:[#allocation3 + $0x101]]
        %s208 = sld [smem:[#allocation3 + $0x102]]
        %s209 = sld [smem:[#allocation2]]
        %s210 = smul.u32 %s199, 18
        %s211 = scalar_lea.vmem [#allocation7], %s210
        %v212 = vld [vmem:[%s211] sm:$0x1]
        %v213 = vld [vmem:[%s211 + $0x1] sm:$0x1]
        %v214 = vld [vmem:[%s211 + $0x2] sm:$0x1]
        %v215 = vld [vmem:[%s211 + $0x3] sm:$0x1]
        %v216 = vld [vmem:[%s211 + $0x4] sm:$0x1]
        %v217 = vld [vmem:[%s211 + $0x5] sm:$0x1]
        %v218 = vld [vmem:[%s211 + $0x6] sm:$0x1]
        %v219 = vld [vmem:[%s211 + $0x7] sm:$0x1]
        %v220 = vld [vmem:[%s211 + $0x8] sm:$0x1]
        %v221 = vld [vmem:[%s211 + $0x9] sm:$0x1]
        %v222 = vld [vmem:[%s211 + $0xa] sm:$0x1]
        %v223 = vld [vmem:[%s211 + $0xb] sm:$0x1]
        %v224 = vld [vmem:[%s211 + $0xc] sm:$0x1]
        %v225 = vld [vmem:[%s211 + $0xd] sm:$0x1]
        %v226 = vld [vmem:[%s211 + $0xe] sm:$0x1]
        %v227 = vld [vmem:[%s211 + $0xf] sm:$0x1]
        %v228 = vld [vmem:[%s211 + $0x12] sm:$0x1]
        %v229 = vld [vmem:[%s211 + $0x13] sm:$0x1]
        %v230 = vld [vmem:[%s211 + $0x14] sm:$0x1]
        %v231 = vld [vmem:[%s211 + $0x15] sm:$0x1]
        %v232 = vld [vmem:[%s211 + $0x16] sm:$0x1]
        %v233 = vld [vmem:[%s211 + $0x17] sm:$0x1]
        %v234 = vld [vmem:[%s211 + $0x18] sm:$0x1]
        %v235 = vld [vmem:[%s211 + $0x19] sm:$0x1]
        %v236 = vld [vmem:[%s211 + $0x1a] sm:$0x1]
        %v237 = vld [vmem:[%s211 + $0x1b] sm:$0x1]
        %v238 = vld [vmem:[%s211 + $0x1c] sm:$0x1]
        %v239 = vld [vmem:[%s211 + $0x1d] sm:$0x1]
        %v240 = vld [vmem:[%s211 + $0x1e] sm:$0x1]
        %v241 = vld [vmem:[%s211 + $0x1f] sm:$0x1]
        %v242 = vld [vmem:[%s211 + $0x20] sm:$0x1]
        %v243 = vld [vmem:[%s211 + $0x21] sm:$0x1]
        %v244 = vld [vmem:[%s211 + $0x24] sm:$0x1]
        %v245 = vld [vmem:[%s211 + $0x25] sm:$0x1]
        %v246 = vld [vmem:[%s211 + $0x26] sm:$0x1]
        %v247 = vld [vmem:[%s211 + $0x27] sm:$0x1]
        %v248 = vld [vmem:[%s211 + $0x28] sm:$0x1]
        %v249 = vld [vmem:[%s211 + $0x29] sm:$0x1]
        %v250 = vld [vmem:[%s211 + $0x2a] sm:$0x1]
        %v251 = vld [vmem:[%s211 + $0x2b] sm:$0x1]
        %v252 = vld [vmem:[%s211 + $0x2c] sm:$0x1]
        %v253 = vld [vmem:[%s211 + $0x2d] sm:$0x1]
        %v254 = vld [vmem:[%s211 + $0x2e] sm:$0x1]
        %v255 = vld [vmem:[%s211 + $0x2f] sm:$0x1]
        %v256 = vld [vmem:[%s211 + $0x30] sm:$0x1]
        %v257 = vld [vmem:[%s211 + $0x31] sm:$0x1]
        %v258 = vld [vmem:[%s211 + $0x32] sm:$0x1]
        %v259 = vld [vmem:[%s211 + $0x33] sm:$0x1]
        %v260 = vld [vmem:[%s211 + $0x36] sm:$0x1]
        %v261 = vld [vmem:[%s211 + $0x37] sm:$0x1]
        %v262 = vld [vmem:[%s211 + $0x38] sm:$0x1]
        %v263 = vld [vmem:[%s211 + $0x39] sm:$0x1]
        %v264 = vld [vmem:[%s211 + $0x3a] sm:$0x1]
        %v265 = vld [vmem:[%s211 + $0x3b] sm:$0x1]
        %v266 = vld [vmem:[%s211 + $0x3c] sm:$0x1]
        %v267 = vld [vmem:[%s211 + $0x3d] sm:$0x1]
        %v268 = vld [vmem:[%s211 + $0x3e] sm:$0x1]
        %v269 = vld [vmem:[%s211 + $0x3f] sm:$0x1]
        %v270 = vld [vmem:[%s211 + $0x40] sm:$0x1]
        %v271 = vld [vmem:[%s211 + $0x41] sm:$0x1]
        %v272 = vld [vmem:[%s211 + $0x42] sm:$0x1]
        %v273 = vld [vmem:[%s211 + $0x43] sm:$0x1]
        %v274 = vld [vmem:[%s211 + $0x44] sm:$0x1]
        %v275 = vld [vmem:[%s211 + $0x45] sm:$0x1]
        %v276 = vld [vmem:[%s211 + $0x48] sm:$0x1]
        %v277 = vld [vmem:[%s211 + $0x49] sm:$0x1]
        %v278 = vld [vmem:[%s211 + $0x4a] sm:$0x1]
        %v279 = vld [vmem:[%s211 + $0x4b] sm:$0x1]
        %v280 = vld [vmem:[%s211 + $0x4c] sm:$0x1]
        %v281 = vld [vmem:[%s211 + $0x4d] sm:$0x1]
        %v282 = vld [vmem:[%s211 + $0x4e] sm:$0x1]
        %v283 = vld [vmem:[%s211 + $0x4f] sm:$0x1]
        %v284 = vld [vmem:[%s211 + $0x50] sm:$0x1]
        %v285 = vld [vmem:[%s211 + $0x51] sm:$0x1]
        %v286 = vld [vmem:[%s211 + $0x52] sm:$0x1]
        %v287 = vld [vmem:[%s211 + $0x53] sm:$0x1]
        %v288 = vld [vmem:[%s211 + $0x54] sm:$0x1]
        %v289 = vld [vmem:[%s211 + $0x55] sm:$0x1]
        %v290 = vld [vmem:[%s211 + $0x56] sm:$0x1]
        %v291 = vld [vmem:[%s211 + $0x57] sm:$0x1]
        %v292 = vld [vmem:[%s211 + $0x5a] sm:$0x1]
        %v293 = vld [vmem:[%s211 + $0x5b] sm:$0x1]
        %v294 = vld [vmem:[%s211 + $0x5c] sm:$0x1]
        %v295 = vld [vmem:[%s211 + $0x5d] sm:$0x1]
        %v296 = vld [vmem:[%s211 + $0x5e] sm:$0x1]
        %v297 = vld [vmem:[%s211 + $0x5f] sm:$0x1]
        %v298 = vld [vmem:[%s211 + $0x60] sm:$0x1]
        %v299 = vld [vmem:[%s211 + $0x61] sm:$0x1]
        %v300 = vld [vmem:[%s211 + $0x62] sm:$0x1]
        %v301 = vld [vmem:[%s211 + $0x63] sm:$0x1]
        %v302 = vld [vmem:[%s211 + $0x64] sm:$0x1]
        %v303 = vld [vmem:[%s211 + $0x65] sm:$0x1]
        %v304 = vld [vmem:[%s211 + $0x66] sm:$0x1]
        %v305 = vld [vmem:[%s211 + $0x67] sm:$0x1]
        %v306 = vld [vmem:[%s211 + $0x68] sm:$0x1]
        %v307 = vld [vmem:[%s211 + $0x69] sm:$0x1]
        %v308 = vld [vmem:[%s211 + $0x6c] sm:$0x1]
        %v309 = vld [vmem:[%s211 + $0x6d] sm:$0x1]
        %v310 = vld [vmem:[%s211 + $0x6e] sm:$0x1]
        %v311 = vld [vmem:[%s211 + $0x6f] sm:$0x1]
        %v312 = vld [vmem:[%s211 + $0x70] sm:$0x1]
        %v313 = vld [vmem:[%s211 + $0x71] sm:$0x1]
        %v314 = vld [vmem:[%s211 + $0x72] sm:$0x1]
        %v315 = vld [vmem:[%s211 + $0x73] sm:$0x1]
        %v316 = vld [vmem:[%s211 + $0x74] sm:$0x1]
        %v317 = vld [vmem:[%s211 + $0x75] sm:$0x1]
        %v318 = vld [vmem:[%s211 + $0x76] sm:$0x1]
        %v319 = vld [vmem:[%s211 + $0x77] sm:$0x1]
        %v320 = vld [vmem:[%s211 + $0x78] sm:$0x1]
        %v321 = vld [vmem:[%s211 + $0x79] sm:$0x1]
        %v322 = vld [vmem:[%s211 + $0x7a] sm:$0x1]
        %v323 = vld [vmem:[%s211 + $0x7b] sm:$0x1]
        %v324 = vld [vmem:[%s211 + $0x7e] sm:$0x1]
        %v325 = vld [vmem:[%s211 + $0x7f] sm:$0x1]
        %v326 = vld [vmem:[%s211 + $0x80] sm:$0x1]
        %v327 = vld [vmem:[%s211 + $0x81] sm:$0x1]
        %v328 = vld [vmem:[%s211 + $0x82] sm:$0x1]
        %v329 = vld [vmem:[%s211 + $0x83] sm:$0x1]
        %v330 = vld [vmem:[%s211 + $0x84] sm:$0x1]
        %v331 = vld [vmem:[%s211 + $0x85] sm:$0x1]
        %v332 = vld [vmem:[%s211 + $0x86] sm:$0x1]
        %v333 = vld [vmem:[%s211 + $0x87] sm:$0x1]
        %v334 = vld [vmem:[%s211 + $0x88] sm:$0x1]
        %v335 = vld [vmem:[%s211 + $0x89] sm:$0x1]
        %v336 = vld [vmem:[%s211 + $0x8a] sm:$0x1]
        %v337 = vld [vmem:[%s211 + $0x8b] sm:$0x1]
        %v338 = vld [vmem:[%s211 + $0x8c] sm:$0x1]
        %v339 = vld [vmem:[%s211 + $0x8d] sm:$0x1]
        %v340 = vstv %s200
        %v341 = vmul.f32 %v340, %v212
        %v342 = vmul.f32 %v340, %v213
        %v343 = vmul.f32 %v340, %v214
        %v344 = vmul.f32 %v340, %v215
        %v345 = vmul.f32 %v340, %v216
        %v346 = vmul.f32 %v340, %v217
        %v347 = vmul.f32 %v340, %v218
        %v348 = vmul.f32 %v340, %v219
        %v349 = vmul.f32 %v340, %v220
        %v350 = vmul.f32 %v340, %v221
        %v351 = vmul.f32 %v340, %v222
        %v352 = vmul.f32 %v340, %v223
        %v353 = vmul.f32 %v340, %v224
        %v354 = vmul.f32 %v340, %v225
        %v355 = vmul.f32 %v340, %v226
        %v356 = vmul.f32 %v340, %v227
        %v357 = vmul.f32 %v340, %v228
        %v358 = vmul.f32 %v340, %v229
        %v359 = vmul.f32 %v340, %v230
        %v360 = vmul.f32 %v340, %v231
        %v361 = vmul.f32 %v340, %v232
        %v362 = vmul.f32 %v340, %v233
        %v363 = vmul.f32 %v340, %v234
        %v364 = vmul.f32 %v340, %v235
        %v365 = vmul.f32 %v340, %v236
        %v366 = vmul.f32 %v340, %v237
        %v367 = vmul.f32 %v340, %v238
        %v368 = vmul.f32 %v340, %v239
        %v369 = vmul.f32 %v340, %v240
        %v370 = vmul.f32 %v340, %v241
        %v371 = vmul.f32 %v340, %v242
        %v372 = vmul.f32 %v340, %v243
        %v373 = vmul.f32 %v340, %v244
        %v374 = vmul.f32 %v340, %v245
        %v375 = vmul.f32 %v340, %v246
        %v376 = vmul.f32 %v340, %v247
        %v377 = vmul.f32 %v340, %v248
        %v378 = vmul.f32 %v340, %v249
        %v379 = vmul.f32 %v340, %v250
        %v380 = vmul.f32 %v340, %v251
        %v381 = vmul.f32 %v340, %v252
        %v382 = vmul.f32 %v340, %v253
        %v383 = vmul.f32 %v340, %v254
        %v384 = vmul.f32 %v340, %v255
        %v385 = vmul.f32 %v340, %v256
        %v386 = vmul.f32 %v340, %v257
        %v387 = vmul.f32 %v340, %v258
        %v388 = vmul.f32 %v340, %v259
        %v389 = vmul.f32 %v340, %v260
        %v390 = vmul.f32 %v340, %v261
        %v391 = vmul.f32 %v340, %v262
        %v392 = vmul.f32 %v340, %v263
        %v393 = vmul.f32 %v340, %v264
        %v394 = vmul.f32 %v340, %v265
        %v395 = vmul.f32 %v340, %v266
        %v396 = vmul.f32 %v340, %v267
        %v397 = vmul.f32 %v340, %v268
        %v398 = vmul.f32 %v340, %v269
        %v399 = vmul.f32 %v340, %v270
        %v400 = vmul.f32 %v340, %v271
        %v401 = vmul.f32 %v340, %v272
        %v402 = vmul.f32 %v340, %v273
        %v403 = vmul.f32 %v340, %v274
        %v404 = vmul.f32 %v340, %v275
        %v405 = vmul.f32 %v340, %v276
        %v406 = vmul.f32 %v340, %v277
        %v407 = vmul.f32 %v340, %v278
        %v408 = vmul.f32 %v340, %v279
        %v409 = vmul.f32 %v340, %v280
        %v410 = vmul.f32 %v340, %v281
        %v411 = vmul.f32 %v340, %v282
        %v412 = vmul.f32 %v340, %v283
        %v413 = vmul.f32 %v340, %v284
        %v414 = vmul.f32 %v340, %v285
        %v415 = vmul.f32 %v340, %v286
        %v416 = vmul.f32 %v340, %v287
        %v417 = vmul.f32 %v340, %v288
        %v418 = vmul.f32 %v340, %v289
        %v419 = vmul.f32 %v340, %v290
        %v420 = vmul.f32 %v340, %v291
        %v421 = vmul.f32 %v340, %v292
        %v422 = vmul.f32 %v340, %v293
        %v423 = vmul.f32 %v340, %v294
        %v424 = vmul.f32 %v340, %v295
        %v425 = vmul.f32 %v340, %v296
        %v426 = vmul.f32 %v340, %v297
        %v427 = vmul.f32 %v340, %v298
        %v428 = vmul.f32 %v340, %v299
        %v429 = vmul.f32 %v340, %v300
        %v430 = vmul.f32 %v340, %v301
        %v431 = vmul.f32 %v340, %v302
        %v432 = vmul.f32 %v340, %v303
        %v433 = vmul.f32 %v340, %v304
        %v434 = vmul.f32 %v340, %v305
        %v435 = vmul.f32 %v340, %v306
        %v436 = vmul.f32 %v340, %v307
        %v437 = vmul.f32 %v340, %v308
        %v438 = vmul.f32 %v340, %v309
        %v439 = vmul.f32 %v340, %v310
        %v440 = vmul.f32 %v340, %v311
        %v441 = vmul.f32 %v340, %v312
        %v442 = vmul.f32 %v340, %v313
        %v443 = vmul.f32 %v340, %v314
        %v444 = vmul.f32 %v340, %v315
        %v445 = vmul.f32 %v340, %v316
        %v446 = vmul.f32 %v340, %v317
        %v447 = vmul.f32 %v340, %v318
        %v448 = vmul.f32 %v340, %v319
        %v449 = vmul.f32 %v340, %v320
        %v450 = vmul.f32 %v340, %v321
        %v451 = vmul.f32 %v340, %v322
        %v452 = vmul.f32 %v340, %v323
        %v453 = vmul.f32 %v340, %v324
        %v454 = vmul.f32 %v340, %v325
        %v455 = vmul.f32 %v340, %v326
        %v456 = vmul.f32 %v340, %v327
        %v457 = vmul.f32 %v340, %v328
        %v458 = vmul.f32 %v340, %v329
        %v459 = vmul.f32 %v340, %v330
        %v460 = vmul.f32 %v340, %v331
        %v461 = vmul.f32 %v340, %v332
        %v462 = vmul.f32 %v340, %v333
        %v463 = vmul.f32 %v340, %v334
        %v464 = vmul.f32 %v340, %v335
        %v465 = vmul.f32 %v340, %v336
        %v466 = vmul.f32 %v340, %v337
        %v467 = vmul.f32 %v340, %v338
        %v468 = vmul.f32 %v340, %v339
        %v469 = vstv %s209
        %v470 = vadd.f32 %v341, %v469
        %v471 = vadd.f32 %v342, %v469
        %v472 = vadd.f32 %v343, %v469
        %v473 = vadd.f32 %v344, %v469
        %v474 = vadd.f32 %v345, %v469
        %v475 = vadd.f32 %v346, %v469
        %v476 = vadd.f32 %v347, %v469
        %v477 = vadd.f32 %v348, %v469
        %v478 = vadd.f32 %v349, %v469
        %v479 = vadd.f32 %v350, %v469
        %v480 = vadd.f32 %v351, %v469
        %v481 = vadd.f32 %v352, %v469
        %v482 = vadd.f32 %v353, %v469
        %v483 = vadd.f32 %v354, %v469
        %v484 = vadd.f32 %v355, %v469
        %v485 = vadd.f32 %v356, %v469
        %v486 = vadd.f32 %v357, %v469
        %v487 = vadd.f32 %v358, %v469
        %v488 = vadd.f32 %v359, %v469
        %v489 = vadd.f32 %v360, %v469
        %v490 = vadd.f32 %v361, %v469
        %v491 = vadd.f32 %v362, %v469
        %v492 = vadd.f32 %v363, %v469
        %v493 = vadd.f32 %v364, %v469
        %v494 = vadd.f32 %v365, %v469
        %v495 = vadd.f32 %v366, %v469
        %v496 = vadd.f32 %v367, %v469
        %v497 = vadd.f32 %v368, %v469
        %v498 = vadd.f32 %v369, %v469
        %v499 = vadd.f32 %v370, %v469
        %v500 = vadd.f32 %v371, %v469
        %v501 = vadd.f32 %v372, %v469
        %v502 = vadd.f32 %v373, %v469
        %v503 = vadd.f32 %v374, %v469
        %v504 = vadd.f32 %v375, %v469
        %v505 = vadd.f32 %v376, %v469
        %v506 = vadd.f32 %v377, %v469
        %v507 = vadd.f32 %v378, %v469
        %v508 = vadd.f32 %v379, %v469
        %v509 = vadd.f32 %v380, %v469
        %v510 = vadd.f32 %v381, %v469
        %v511 = vadd.f32 %v382, %v469
        %v512 = vadd.f32 %v383, %v469
        %v513 = vadd.f32 %v384, %v469
        %v514 = vadd.f32 %v385, %v469
        %v515 = vadd.f32 %v386, %v469
        %v516 = vadd.f32 %v387, %v469
        %v517 = vadd.f32 %v388, %v469
        %v518 = vadd.f32 %v389, %v469
        %v519 = vadd.f32 %v390, %v469
        %v520 = vadd.f32 %v391, %v469
        %v521 = vadd.f32 %v392, %v469
        %v522 = vadd.f32 %v393, %v469
        %v523 = vadd.f32 %v394, %v469
        %v524 = vadd.f32 %v395, %v469
        %v525 = vadd.f32 %v396, %v469
        %v526 = vadd.f32 %v397, %v469
        %v527 = vadd.f32 %v398, %v469
        %v528 = vadd.f32 %v399, %v469
        %v529 = vadd.f32 %v400, %v469
        %v530 = vadd.f32 %v401, %v469
        %v531 = vadd.f32 %v402, %v469
        %v532 = vadd.f32 %v403, %v469
        %v533 = vadd.f32 %v404, %v469
        %v534 = vadd.f32 %v405, %v469
        %v535 = vadd.f32 %v406, %v469
        %v536 = vadd.f32 %v407, %v469
        %v537 = vadd.f32 %v408, %v469
        %v538 = vadd.f32 %v409, %v469
        %v539 = vadd.f32 %v410, %v469
        %v540 = vadd.f32 %v411, %v469
        %v541 = vadd.f32 %v412, %v469
        %v542 = vadd.f32 %v413, %v469
        %v543 = vadd.f32 %v414, %v469
        %v544 = vadd.f32 %v415, %v469
        %v545 = vadd.f32 %v416, %v469
        %v546 = vadd.f32 %v417, %v469
        %v547 = vadd.f32 %v418, %v469
        %v548 = vadd.f32 %v419, %v469
        %v549 = vadd.f32 %v420, %v469
        %v550 = vadd.f32 %v421, %v469
        %v551 = vadd.f32 %v422, %v469
        %v552 = vadd.f32 %v423, %v469
        %v553 = vadd.f32 %v424, %v469
        %v554 = vadd.f32 %v425, %v469
        %v555 = vadd.f32 %v426, %v469
        %v556 = vadd.f32 %v427, %v469
        %v557 = vadd.f32 %v428, %v469
        %v558 = vadd.f32 %v429, %v469
        %v559 = vadd.f32 %v430, %v469
        %v560 = vadd.f32 %v431, %v469
        %v561 = vadd.f32 %v432, %v469
        %v562 = vadd.f32 %v433, %v469
        %v563 = vadd.f32 %v434, %v469
        %v564 = vadd.f32 %v435, %v469
        %v565 = vadd.f32 %v436, %v469
        %v566 = vadd.f32 %v437, %v469
        %v567 = vadd.f32 %v438, %v469
        %v568 = vadd.f32 %v439, %v469
        %v569 = vadd.f32 %v440, %v469
        %v570 = vadd.f32 %v441, %v469
        %v571 = vadd.f32 %v442, %v469
        %v572 = vadd.f32 %v443, %v469
        %v573 = vadd.f32 %v444, %v469
        %v574 = vadd.f32 %v445, %v469
        %v575 = vadd.f32 %v446, %v469
        %v576 = vadd.f32 %v447, %v469
        %v577 = vadd.f32 %v448, %v469
        %v578 = vadd.f32 %v449, %v469
        %v579 = vadd.f32 %v450, %v469
        %v580 = vadd.f32 %v451, %v469
        %v581 = vadd.f32 %v452, %v469
        %v582 = vadd.f32 %v453, %v469
        %v583 = vadd.f32 %v454, %v469
        %v584 = vadd.f32 %v455, %v469
        %v585 = vadd.f32 %v456, %v469
        %v586 = vadd.f32 %v457, %v469
        %v587 = vadd.f32 %v458, %v469
        %v588 = vadd.f32 %v459, %v469
        %v589 = vadd.f32 %v460, %v469
        %v590 = vadd.f32 %v461, %v469
        %v591 = vadd.f32 %v462, %v469
        %v592 = vadd.f32 %v463, %v469
        %v593 = vadd.f32 %v464, %v469
        %v594 = vadd.f32 %v465, %v469
        %v595 = vadd.f32 %v466, %v469
        %v596 = vadd.f32 %v467, %v469
        %v597 = vadd.f32 %v468, %v469
        %s598 = sadd.s32 1, %s210
        %s599 = scalar_lea.vmem [#allocation7], %s598
        %v600 = vld [vmem:[%s599] sm:$0x1]
        %v601 = vld [vmem:[%s599 + $0x1] sm:$0x1]
        %v602 = vld [vmem:[%s599 + $0x2] sm:$0x1]
        %v603 = vld [vmem:[%s599 + $0x3] sm:$0x1]
        %v604 = vld [vmem:[%s599 + $0x4] sm:$0x1]
        %v605 = vld [vmem:[%s599 + $0x5] sm:$0x1]
        %v606 = vld [vmem:[%s599 + $0x6] sm:$0x1]
        %v607 = vld [vmem:[%s599 + $0x7] sm:$0x1]
        %v608 = vld [vmem:[%s599 + $0x8] sm:$0x1]
        %v609 = vld [vmem:[%s599 + $0x9] sm:$0x1]
        %v610 = vld [vmem:[%s599 + $0xa] sm:$0x1]
        %v611 = vld [vmem:[%s599 + $0xb] sm:$0x1]
        %v612 = vld [vmem:[%s599 + $0xc] sm:$0x1]
        %v613 = vld [vmem:[%s599 + $0xd] sm:$0x1]
        %v614 = vld [vmem:[%s599 + $0xe] sm:$0x1]
        %v615 = vld [vmem:[%s599 + $0xf] sm:$0x1]
        %v616 = vld [vmem:[%s599 + $0x12] sm:$0x1]
        %v617 = vld [vmem:[%s599 + $0x13] sm:$0x1]
        %v618 = vld [vmem:[%s599 + $0x14] sm:$0x1]
        %v619 = vld [vmem:[%s599 + $0x15] sm:$0x1]
        %v620 = vld [vmem:[%s599 + $0x16] sm:$0x1]
        %v621 = vld [vmem:[%s599 + $0x17] sm:$0x1]
        %v622 = vld [vmem:[%s599 + $0x18] sm:$0x1]
        %v623 = vld [vmem:[%s599 + $0x19] sm:$0x1]
        %v624 = vld [vmem:[%s599 + $0x1a] sm:$0x1]
        %v625 = vld [vmem:[%s599 + $0x1b] sm:$0x1]
        %v626 = vld [vmem:[%s599 + $0x1c] sm:$0x1]
        %v627 = vld [vmem:[%s599 + $0x1d] sm:$0x1]
        %v628 = vld [vmem:[%s599 + $0x1e] sm:$0x1]
        %v629 = vld [vmem:[%s599 + $0x1f] sm:$0x1]
        %v630 = vld [vmem:[%s599 + $0x20] sm:$0x1]
        %v631 = vld [vmem:[%s599 + $0x21] sm:$0x1]
        %v632 = vld [vmem:[%s599 + $0x24] sm:$0x1]
        %v633 = vld [vmem:[%s599 + $0x25] sm:$0x1]
        %v634 = vld [vmem:[%s599 + $0x26] sm:$0x1]
        %v635 = vld [vmem:[%s599 + $0x27] sm:$0x1]
        %v636 = vld [vmem:[%s599 + $0x28] sm:$0x1]
        %v637 = vld [vmem:[%s599 + $0x29] sm:$0x1]
        %v638 = vld [vmem:[%s599 + $0x2a] sm:$0x1]
        %v639 = vld [vmem:[%s599 + $0x2b] sm:$0x1]
        %v640 = vld [vmem:[%s599 + $0x2c] sm:$0x1]
        %v641 = vld [vmem:[%s599 + $0x2d] sm:$0x1]
        %v642 = vld [vmem:[%s599 + $0x2e] sm:$0x1]
        %v643 = vld [vmem:[%s599 + $0x2f] sm:$0x1]
        %v644 = vld [vmem:[%s599 + $0x30] sm:$0x1]
        %v645 = vld [vmem:[%s599 + $0x31] sm:$0x1]
        %v646 = vld [vmem:[%s599 + $0x32] sm:$0x1]
        %v647 = vld [vmem:[%s599 + $0x33] sm:$0x1]
        %v648 = vld [vmem:[%s599 + $0x36] sm:$0x1]
        %v649 = vld [vmem:[%s599 + $0x37] sm:$0x1]
        %v650 = vld [vmem:[%s599 + $0x38] sm:$0x1]
        %v651 = vld [vmem:[%s599 + $0x39] sm:$0x1]
        %v652 = vld [vmem:[%s599 + $0x3a] sm:$0x1]
        %v653 = vld [vmem:[%s599 + $0x3b] sm:$0x1]
        %v654 = vld [vmem:[%s599 + $0x3c] sm:$0x1]
        %v655 = vld [vmem:[%s599 + $0x3d] sm:$0x1]
        %v656 = vld [vmem:[%s599 + $0x3e] sm:$0x1]
        %v657 = vld [vmem:[%s599 + $0x3f] sm:$0x1]
        %v658 = vld [vmem:[%s599 + $0x40] sm:$0x1]
        %v659 = vld [vmem:[%s599 + $0x41] sm:$0x1]
        %v660 = vld [vmem:[%s599 + $0x42] sm:$0x1]
        %v661 = vld [vmem:[%s599 + $0x43] sm:$0x1]
        %v662 = vld [vmem:[%s599 + $0x44] sm:$0x1]
        %v663 = vld [vmem:[%s599 + $0x45] sm:$0x1]
        %v664 = vld [vmem:[%s599 + $0x48] sm:$0x1]
        %v665 = vld [vmem:[%s599 + $0x49] sm:$0x1]
        %v666 = vld [vmem:[%s599 + $0x4a] sm:$0x1]
        %v667 = vld [vmem:[%s599 + $0x4b] sm:$0x1]
        %v668 = vld [vmem:[%s599 + $0x4c] sm:$0x1]
        %v669 = vld [vmem:[%s599 + $0x4d] sm:$0x1]
        %v670 = vld [vmem:[%s599 + $0x4e] sm:$0x1]
        %v671 = vld [vmem:[%s599 + $0x4f] sm:$0x1]
        %v672 = vld [vmem:[%s599 + $0x50] sm:$0x1]
        %v673 = vld [vmem:[%s599 + $0x51] sm:$0x1]
        %v674 = vld [vmem:[%s599 + $0x52] sm:$0x1]
        %v675 = vld [vmem:[%s599 + $0x53] sm:$0x1]
        %v676 = vld [vmem:[%s599 + $0x54] sm:$0x1]
        %v677 = vld [vmem:[%s599 + $0x55] sm:$0x1]
        %v678 = vld [vmem:[%s599 + $0x56] sm:$0x1]
        %v679 = vld [vmem:[%s599 + $0x57] sm:$0x1]
        %v680 = vld [vmem:[%s599 + $0x5a] sm:$0x1]
        %v681 = vld [vmem:[%s599 + $0x5b] sm:$0x1]
        %v682 = vld [vmem:[%s599 + $0x5c] sm:$0x1]
        %v683 = vld [vmem:[%s599 + $0x5d] sm:$0x1]
        %v684 = vld [vmem:[%s599 + $0x5e] sm:$0x1]
        %v685 = vld [vmem:[%s599 + $0x5f] sm:$0x1]
        %v686 = vld [vmem:[%s599 + $0x60] sm:$0x1]
        %v687 = vld [vmem:[%s599 + $0x61] sm:$0x1]
        %v688 = vld [vmem:[%s599 + $0x62] sm:$0x1]
        %v689 = vld [vmem:[%s599 + $0x63] sm:$0x1]
        %v690 = vld [vmem:[%s599 + $0x64] sm:$0x1]
        %v691 = vld [vmem:[%s599 + $0x65] sm:$0x1]
        %v692 = vld [vmem:[%s599 + $0x66] sm:$0x1]
        %v693 = vld [vmem:[%s599 + $0x67] sm:$0x1]
        %v694 = vld [vmem:[%s599 + $0x68] sm:$0x1]
        %v695 = vld [vmem:[%s599 + $0x69] sm:$0x1]
        %v696 = vld [vmem:[%s599 + $0x6c] sm:$0x1]
        %v697 = vld [vmem:[%s599 + $0x6d] sm:$0x1]
        %v698 = vld [vmem:[%s599 + $0x6e] sm:$0x1]
        %v699 = vld [vmem:[%s599 + $0x6f] sm:$0x1]
        %v700 = vld [vmem:[%s599 + $0x70] sm:$0x1]
        %v701 = vld [vmem:[%s599 + $0x71] sm:$0x1]
        %v702 = vld [vmem:[%s599 + $0x72] sm:$0x1]
        %v703 = vld [vmem:[%s599 + $0x73] sm:$0x1]
        %v704 = vld [vmem:[%s599 + $0x74] sm:$0x1]
        %v705 = vld [vmem:[%s599 + $0x75] sm:$0x1]
        %v706 = vld [vmem:[%s599 + $0x76] sm:$0x1]
        %v707 = vld [vmem:[%s599 + $0x77] sm:$0x1]
        %v708 = vld [vmem:[%s599 + $0x78] sm:$0x1]
        %v709 = vld [vmem:[%s599 + $0x79] sm:$0x1]
        %v710 = vld [vmem:[%s599 + $0x7a] sm:$0x1]
        %v711 = vld [vmem:[%s599 + $0x7b] sm:$0x1]
        %v712 = vld [vmem:[%s599 + $0x7e] sm:$0x1]
        %v713 = vld [vmem:[%s599 + $0x7f] sm:$0x1]
        %v714 = vld [vmem:[%s599 + $0x80] sm:$0x1]
        %v715 = vld [vmem:[%s599 + $0x81] sm:$0x1]
        %v716 = vld [vmem:[%s599 + $0x82] sm:$0x1]
        %v717 = vld [vmem:[%s599 + $0x83] sm:$0x1]
        %v718 = vld [vmem:[%s599 + $0x84] sm:$0x1]
        %v719 = vld [vmem:[%s599 + $0x85] sm:$0x1]
        %v720 = vld [vmem:[%s599 + $0x86] sm:$0x1]
        %v721 = vld [vmem:[%s599 + $0x87] sm:$0x1]
        %v722 = vld [vmem:[%s599 + $0x88] sm:$0x1]
        %v723 = vld [vmem:[%s599 + $0x89] sm:$0x1]
        %v724 = vld [vmem:[%s599 + $0x8a] sm:$0x1]
        %v725 = vld [vmem:[%s599 + $0x8b] sm:$0x1]
        %v726 = vld [vmem:[%s599 + $0x8c] sm:$0x1]
        %v727 = vld [vmem:[%s599 + $0x8d] sm:$0x1]
        %v728 = vstv %s201
        %v729 = vmul.f32 %v728, %v600
        %v730 = vmul.f32 %v728, %v601
        %v731 = vmul.f32 %v728, %v602
        %v732 = vmul.f32 %v728, %v603
        %v733 = vmul.f32 %v728, %v604
        %v734 = vmul.f32 %v728, %v605
        %v735 = vmul.f32 %v728, %v606
        %v736 = vmul.f32 %v728, %v607
        %v737 = vmul.f32 %v728, %v608
        %v738 = vmul.f32 %v728, %v609
        %v739 = vmul.f32 %v728, %v610
        %v740 = vmul.f32 %v728, %v611
        %v741 = vmul.f32 %v728, %v612
        %v742 = vmul.f32 %v728, %v613
        %v743 = vmul.f32 %v728, %v614
        %v744 = vmul.f32 %v728, %v615
        %v745 = vmul.f32 %v728, %v616
        %v746 = vmul.f32 %v728, %v617
        %v747 = vmul.f32 %v728, %v618
        %v748 = vmul.f32 %v728, %v619
        %v749 = vmul.f32 %v728, %v620
        %v750 = vmul.f32 %v728, %v621
        %v751 = vmul.f32 %v728, %v622
        %v752 = vmul.f32 %v728, %v623
        %v753 = vmul.f32 %v728, %v624
        %v754 = vmul.f32 %v728, %v625
        %v755 = vmul.f32 %v728, %v626
        %v756 = vmul.f32 %v728, %v627
        %v757 = vmul.f32 %v728, %v628
        %v758 = vmul.f32 %v728, %v629
        %v759 = vmul.f32 %v728, %v630
        %v760 = vmul.f32 %v728, %v631
        %v761 = vmul.f32 %v728, %v632
        %v762 = vmul.f32 %v728, %v633
        %v763 = vmul.f32 %v728, %v634
        %v764 = vmul.f32 %v728, %v635
        %v765 = vmul.f32 %v728, %v636
        %v766 = vmul.f32 %v728, %v637
        %v767 = vmul.f32 %v728, %v638
        %v768 = vmul.f32 %v728, %v639
        %v769 = vmul.f32 %v728, %v640
        %v770 = vmul.f32 %v728, %v641
        %v771 = vmul.f32 %v728, %v642
        %v772 = vmul.f32 %v728, %v643
        %v773 = vmul.f32 %v728, %v644
        %v774 = vmul.f32 %v728, %v645
        %v775 = vmul.f32 %v728, %v646
        %v776 = vmul.f32 %v728, %v647
        %v777 = vmul.f32 %v728, %v648
        %v778 = vmul.f32 %v728, %v649
        %v779 = vmul.f32 %v728, %v650
        %v780 = vmul.f32 %v728, %v651
        %v781 = vmul.f32 %v728, %v652
        %v782 = vmul.f32 %v728, %v653
        %v783 = vmul.f32 %v728, %v654
        %v784 = vmul.f32 %v728, %v655
        %v785 = vmul.f32 %v728, %v656
        %v786 = vmul.f32 %v728, %v657
        %v787 = vmul.f32 %v728, %v658
        %v788 = vmul.f32 %v728, %v659
        %v789 = vmul.f32 %v728, %v660
        %v790 = vmul.f32 %v728, %v661
        %v791 = vmul.f32 %v728, %v662
        %v792 = vmul.f32 %v728, %v663
        %v793 = vmul.f32 %v728, %v664
        %v794 = vmul.f32 %v728, %v665
        %v795 = vmul.f32 %v728, %v666
        %v796 = vmul.f32 %v728, %v667
        %v797 = vmul.f32 %v728, %v668
        %v798 = vmul.f32 %v728, %v669
        %v799 = vmul.f32 %v728, %v670
        %v800 = vmul.f32 %v728, %v671
        %v801 = vmul.f32 %v728, %v672
        %v802 = vmul.f32 %v728, %v673
        %v803 = vmul.f32 %v728, %v674
        %v804 = vmul.f32 %v728, %v675
        %v805 = vmul.f32 %v728, %v676
        %v806 = vmul.f32 %v728, %v677
        %v807 = vmul.f32 %v728, %v678
        %v808 = vmul.f32 %v728, %v679
        %v809 = vmul.f32 %v728, %v680
        %v810 = vmul.f32 %v728, %v681
        %v811 = vmul.f32 %v728, %v682
        %v812 = vmul.f32 %v728, %v683
        %v813 = vmul.f32 %v728, %v684
        %v814 = vmul.f32 %v728, %v685
        %v815 = vmul.f32 %v728, %v686
        %v816 = vmul.f32 %v728, %v687
        %v817 = vmul.f32 %v728, %v688
        %v818 = vmul.f32 %v728, %v689
        %v819 = vmul.f32 %v728, %v690
        %v820 = vmul.f32 %v728, %v691
        %v821 = vmul.f32 %v728, %v692
        %v822 = vmul.f32 %v728, %v693
        %v823 = vmul.f32 %v728, %v694
        %v824 = vmul.f32 %v728, %v695
        %v825 = vmul.f32 %v728, %v696
        %v826 = vmul.f32 %v728, %v697
        %v827 = vmul.f32 %v728, %v698
        %v828 = vmul.f32 %v728, %v699
        %v829 = vmul.f32 %v728, %v700
        %v830 = vmul.f32 %v728, %v701
        %v831 = vmul.f32 %v728, %v702
        %v832 = vmul.f32 %v728, %v703
        %v833 = vmul.f32 %v728, %v704
        %v834 = vmul.f32 %v728, %v705
        %v835 = vmul.f32 %v728, %v706
        %v836 = vmul.f32 %v728, %v707
        %v837 = vmul.f32 %v728, %v708
        %v838 = vmul.f32 %v728, %v709
        %v839 = vmul.f32 %v728, %v710
        %v840 = vmul.f32 %v728, %v711
        %v841 = vmul.f32 %v728, %v712
        %v842 = vmul.f32 %v728, %v713
        %v843 = vmul.f32 %v728, %v714
        %v844 = vmul.f32 %v728, %v715
        %v845 = vmul.f32 %v728, %v716
        %v846 = vmul.f32 %v728, %v717
        %v847 = vmul.f32 %v728, %v718
        %v848 = vmul.f32 %v728, %v719
        %v849 = vmul.f32 %v728, %v720
        %v850 = vmul.f32 %v728, %v721
        %v851 = vmul.f32 %v728, %v722
        %v852 = vmul.f32 %v728, %v723
        %v853 = vmul.f32 %v728, %v724
        %v854 = vmul.f32 %v728, %v725
        %v855 = vmul.f32 %v728, %v726
        %v856 = vmul.f32 %v728, %v727
        %v857 = vadd.f32 %v470, %v729
        %v858 = vadd.f32 %v471, %v730
        %v859 = vadd.f32 %v472, %v731
        %v860 = vadd.f32 %v473, %v732
        %v861 = vadd.f32 %v474, %v733
        %v862 = vadd.f32 %v475, %v734
        %v863 = vadd.f32 %v476, %v735
        %v864 = vadd.f32 %v477, %v736
        %v865 = vadd.f32 %v478, %v737
        %v866 = vadd.f32 %v479, %v738
        %v867 = vadd.f32 %v480, %v739
        %v868 = vadd.f32 %v481, %v740
        %v869 = vadd.f32 %v482, %v741
        %v870 = vadd.f32 %v483, %v742
        %v871 = vadd.f32 %v484, %v743
        %v872 = vadd.f32 %v485, %v744
        %v873 = vadd.f32 %v486, %v745
        %v874 = vadd.f32 %v487, %v746
        %v875 = vadd.f32 %v488, %v747
        %v876 = vadd.f32 %v489, %v748
        %v877 = vadd.f32 %v490, %v749
        %v878 = vadd.f32 %v491, %v750
        %v879 = vadd.f32 %v492, %v751
        %v880 = vadd.f32 %v493, %v752
        %v881 = vadd.f32 %v494, %v753
        %v882 = vadd.f32 %v495, %v754
        %v883 = vadd.f32 %v496, %v755
        %v884 = vadd.f32 %v497, %v756
        %v885 = vadd.f32 %v498, %v757
        %v886 = vadd.f32 %v499, %v758
        %v887 = vadd.f32 %v500, %v759
        %v888 = vadd.f32 %v501, %v760
        %v889 = vadd.f32 %v502, %v761
        %v890 = vadd.f32 %v503, %v762
        %v891 = vadd.f32 %v504, %v763
        %v892 = vadd.f32 %v505, %v764
        %v893 = vadd.f32 %v506, %v765
        %v894 = vadd.f32 %v507, %v766
        %v895 = vadd.f32 %v508, %v767
        %v896 = vadd.f32 %v509, %v768
        %v897 = vadd.f32 %v510, %v769
        %v898 = vadd.f32 %v511, %v770
        %v899 = vadd.f32 %v512, %v771
        %v900 = vadd.f32 %v513, %v772
        %v901 = vadd.f32 %v514, %v773
        %v902 = vadd.f32 %v515, %v774
        %v903 = vadd.f32 %v516, %v775
        %v904 = vadd.f32 %v517, %v776
        %v905 = vadd.f32 %v518, %v777
        %v906 = vadd.f32 %v519, %v778
        %v907 = vadd.f32 %v520, %v779
        %v908 = vadd.f32 %v521, %v780
        %v909 = vadd.f32 %v522, %v781
        %v910 = vadd.f32 %v523, %v782
        %v911 = vadd.f32 %v524, %v783
        %v912 = vadd.f32 %v525, %v784
        %v913 = vadd.f32 %v526, %v785
        %v914 = vadd.f32 %v527, %v786
        %v915 = vadd.f32 %v528, %v787
        %v916 = vadd.f32 %v529, %v788
        %v917 = vadd.f32 %v530, %v789
        %v918 = vadd.f32 %v531, %v790
        %v919 = vadd.f32 %v532, %v791
        %v920 = vadd.f32 %v533, %v792
        %v921 = vadd.f32 %v534, %v793
        %v922 = vadd.f32 %v535, %v794
        %v923 = vadd.f32 %v536, %v795
        %v924 = vadd.f32 %v537, %v796
        %v925 = vadd.f32 %v538, %v797
        %v926 = vadd.f32 %v539, %v798
        %v927 = vadd.f32 %v540, %v799
        %v928 = vadd.f32 %v541, %v800
        %v929 = vadd.f32 %v542, %v801
        %v930 = vadd.f32 %v543, %v802
        %v931 = vadd.f32 %v544, %v803
        %v932 = vadd.f32 %v545, %v804
        %v933 = vadd.f32 %v546, %v805
        %v934 = vadd.f32 %v547, %v806
        %v935 = vadd.f32 %v548, %v807
        %v936 = vadd.f32 %v549, %v808
        %v937 = vadd.f32 %v550, %v809
        %v938 = vadd.f32 %v551, %v810
        %v939 = vadd.f32 %v552, %v811
        %v940 = vadd.f32 %v553, %v812
        %v941 = vadd.f32 %v554, %v813
        %v942 = vadd.f32 %v555, %v814
        %v943 = vadd.f32 %v556, %v815
        %v944 = vadd.f32 %v557, %v816
        %v945 = vadd.f32 %v558, %v817
        %v946 = vadd.f32 %v559, %v818
        %v947 = vadd.f32 %v560, %v819
        %v948 = vadd.f32 %v561, %v820
        %v949 = vadd.f32 %v562, %v821
        %v950 = vadd.f32 %v563, %v822
        %v951 = vadd.f32 %v564, %v823
        %v952 = vadd.f32 %v565, %v824
        %v953 = vadd.f32 %v566, %v825
        %v954 = vadd.f32 %v567, %v826
        %v955 = vadd.f32 %v568, %v827
        %v956 = vadd.f32 %v569, %v828
        %v957 = vadd.f32 %v570, %v829
        %v958 = vadd.f32 %v571, %v830
        %v959 = vadd.f32 %v572, %v831
        %v960 = vadd.f32 %v573, %v832
        %v961 = vadd.f32 %v574, %v833
        %v962 = vadd.f32 %v575, %v834
        %v963 = vadd.f32 %v576, %v835
        %v964 = vadd.f32 %v577, %v836
        %v965 = vadd.f32 %v578, %v837
        %v966 = vadd.f32 %v579, %v838
        %v967 = vadd.f32 %v580, %v839
        %v968 = vadd.f32 %v581, %v840
        %v969 = vadd.f32 %v582, %v841
        %v970 = vadd.f32 %v583, %v842
        %v971 = vadd.f32 %v584, %v843
        %v972 = vadd.f32 %v585, %v844
        %v973 = vadd.f32 %v586, %v845
        %v974 = vadd.f32 %v587, %v846
        %v975 = vadd.f32 %v588, %v847
        %v976 = vadd.f32 %v589, %v848
        %v977 = vadd.f32 %v590, %v849
        %v978 = vadd.f32 %v591, %v850
        %v979 = vadd.f32 %v592, %v851
        %v980 = vadd.f32 %v593, %v852
        %v981 = vadd.f32 %v594, %v853
        %v982 = vadd.f32 %v595, %v854
        %v983 = vadd.f32 %v596, %v855
        %v984 = vadd.f32 %v597, %v856
        %s985 = sadd.s32 2, %s210
        %s986 = scalar_lea.vmem [#allocation7], %s985
        %v987 = vld [vmem:[%s986] sm:$0x1]
        %v988 = vld [vmem:[%s986 + $0x1] sm:$0x1]
        %v989 = vld [vmem:[%s986 + $0x2] sm:$0x1]
        %v990 = vld [vmem:[%s986 + $0x3] sm:$0x1]
        %v991 = vld [vmem:[%s986 + $0x4] sm:$0x1]
        %v992 = vld [vmem:[%s986 + $0x5] sm:$0x1]
        %v993 = vld [vmem:[%s986 + $0x6] sm:$0x1]
        %v994 = vld [vmem:[%s986 + $0x7] sm:$0x1]
        %v995 = vld [vmem:[%s986 + $0x8] sm:$0x1]
        %v996 = vld [vmem:[%s986 + $0x9] sm:$0x1]
        %v997 = vld [vmem:[%s986 + $0xa] sm:$0x1]
        %v998 = vld [vmem:[%s986 + $0xb] sm:$0x1]
        %v999 = vld [vmem:[%s986 + $0xc] sm:$0x1]
        %v1000 = vld [vmem:[%s986 + $0xd] sm:$0x1]
        %v1001 = vld [vmem:[%s986 + $0xe] sm:$0x1]
        %v1002 = vld [vmem:[%s986 + $0xf] sm:$0x1]
        %v1003 = vld [vmem:[%s986 + $0x12] sm:$0x1]
        %v1004 = vld [vmem:[%s986 + $0x13] sm:$0x1]
        %v1005 = vld [vmem:[%s986 + $0x14] sm:$0x1]
        %v1006 = vld [vmem:[%s986 + $0x15] sm:$0x1]
        %v1007 = vld [vmem:[%s986 + $0x16] sm:$0x1]
        %v1008 = vld [vmem:[%s986 + $0x17] sm:$0x1]
        %v1009 = vld [vmem:[%s986 + $0x18] sm:$0x1]
        %v1010 = vld [vmem:[%s986 + $0x19] sm:$0x1]
        %v1011 = vld [vmem:[%s986 + $0x1a] sm:$0x1]
        %v1012 = vld [vmem:[%s986 + $0x1b] sm:$0x1]
        %v1013 = vld [vmem:[%s986 + $0x1c] sm:$0x1]
        %v1014 = vld [vmem:[%s986 + $0x1d] sm:$0x1]
        %v1015 = vld [vmem:[%s986 + $0x1e] sm:$0x1]
        %v1016 = vld [vmem:[%s986 + $0x1f] sm:$0x1]
        %v1017 = vld [vmem:[%s986 + $0x20] sm:$0x1]
        %v1018 = vld [vmem:[%s986 + $0x21] sm:$0x1]
        %v1019 = vld [vmem:[%s986 + $0x24] sm:$0x1]
        %v1020 = vld [vmem:[%s986 + $0x25] sm:$0x1]
        %v1021 = vld [vmem:[%s986 + $0x26] sm:$0x1]
        %v1022 = vld [vmem:[%s986 + $0x27] sm:$0x1]
        %v1023 = vld [vmem:[%s986 + $0x28] sm:$0x1]
        %v1024 = vld [vmem:[%s986 + $0x29] sm:$0x1]
        %v1025 = vld [vmem:[%s986 + $0x2a] sm:$0x1]
        %v1026 = vld [vmem:[%s986 + $0x2b] sm:$0x1]
        %v1027 = vld [vmem:[%s986 + $0x2c] sm:$0x1]
        %v1028 = vld [vmem:[%s986 + $0x2d] sm:$0x1]
        %v1029 = vld [vmem:[%s986 + $0x2e] sm:$0x1]
        %v1030 = vld [vmem:[%s986 + $0x2f] sm:$0x1]
        %v1031 = vld [vmem:[%s986 + $0x30] sm:$0x1]
        %v1032 = vld [vmem:[%s986 + $0x31] sm:$0x1]
        %v1033 = vld [vmem:[%s986 + $0x32] sm:$0x1]
        %v1034 = vld [vmem:[%s986 + $0x33] sm:$0x1]
        %v1035 = vld [vmem:[%s986 + $0x36] sm:$0x1]
        %v1036 = vld [vmem:[%s986 + $0x37] sm:$0x1]
        %v1037 = vld [vmem:[%s986 + $0x38] sm:$0x1]
        %v1038 = vld [vmem:[%s986 + $0x39] sm:$0x1]
        %v1039 = vld [vmem:[%s986 + $0x3a] sm:$0x1]
        %v1040 = vld [vmem:[%s986 + $0x3b] sm:$0x1]
        %v1041 = vld [vmem:[%s986 + $0x3c] sm:$0x1]
        %v1042 = vld [vmem:[%s986 + $0x3d] sm:$0x1]
        %v1043 = vld [vmem:[%s986 + $0x3e] sm:$0x1]
        %v1044 = vld [vmem:[%s986 + $0x3f] sm:$0x1]
        %v1045 = vld [vmem:[%s986 + $0x40] sm:$0x1]
        %v1046 = vld [vmem:[%s986 + $0x41] sm:$0x1]
        %v1047 = vld [vmem:[%s986 + $0x42] sm:$0x1]
        %v1048 = vld [vmem:[%s986 + $0x43] sm:$0x1]
        %v1049 = vld [vmem:[%s986 + $0x44] sm:$0x1]
        %v1050 = vld [vmem:[%s986 + $0x45] sm:$0x1]
        %v1051 = vld [vmem:[%s986 + $0x48] sm:$0x1]
        %v1052 = vld [vmem:[%s986 + $0x49] sm:$0x1]
        %v1053 = vld [vmem:[%s986 + $0x4a] sm:$0x1]
        %v1054 = vld [vmem:[%s986 + $0x4b] sm:$0x1]
        %v1055 = vld [vmem:[%s986 + $0x4c] sm:$0x1]
        %v1056 = vld [vmem:[%s986 + $0x4d] sm:$0x1]
        %v1057 = vld [vmem:[%s986 + $0x4e] sm:$0x1]
        %v1058 = vld [vmem:[%s986 + $0x4f] sm:$0x1]
        %v1059 = vld [vmem:[%s986 + $0x50] sm:$0x1]
        %v1060 = vld [vmem:[%s986 + $0x51] sm:$0x1]
        %v1061 = vld [vmem:[%s986 + $0x52] sm:$0x1]
        %v1062 = vld [vmem:[%s986 + $0x53] sm:$0x1]
        %v1063 = vld [vmem:[%s986 + $0x54] sm:$0x1]
        %v1064 = vld [vmem:[%s986 + $0x55] sm:$0x1]
        %v1065 = vld [vmem:[%s986 + $0x56] sm:$0x1]
        %v1066 = vld [vmem:[%s986 + $0x57] sm:$0x1]
        %v1067 = vld [vmem:[%s986 + $0x5a] sm:$0x1]
        %v1068 = vld [vmem:[%s986 + $0x5b] sm:$0x1]
        %v1069 = vld [vmem:[%s986 + $0x5c] sm:$0x1]
        %v1070 = vld [vmem:[%s986 + $0x5d] sm:$0x1]
        %v1071 = vld [vmem:[%s986 + $0x5e] sm:$0x1]
        %v1072 = vld [vmem:[%s986 + $0x5f] sm:$0x1]
        %v1073 = vld [vmem:[%s986 + $0x60] sm:$0x1]
        %v1074 = vld [vmem:[%s986 + $0x61] sm:$0x1]
        %v1075 = vld [vmem:[%s986 + $0x62] sm:$0x1]
        %v1076 = vld [vmem:[%s986 + $0x63] sm:$0x1]
        %v1077 = vld [vmem:[%s986 + $0x64] sm:$0x1]
        %v1078 = vld [vmem:[%s986 + $0x65] sm:$0x1]
        %v1079 = vld [vmem:[%s986 + $0x66] sm:$0x1]
        %v1080 = vld [vmem:[%s986 + $0x67] sm:$0x1]
        %v1081 = vld [vmem:[%s986 + $0x68] sm:$0x1]
        %v1082 = vld [vmem:[%s986 + $0x69] sm:$0x1]
        %v1083 = vld [vmem:[%s986 + $0x6c] sm:$0x1]
        %v1084 = vld [vmem:[%s986 + $0x6d] sm:$0x1]
        %v1085 = vld [vmem:[%s986 + $0x6e] sm:$0x1]
        %v1086 = vld [vmem:[%s986 + $0x6f] sm:$0x1]
        %v1087 = vld [vmem:[%s986 + $0x70] sm:$0x1]
        %v1088 = vld [vmem:[%s986 + $0x71] sm:$0x1]
        %v1089 = vld [vmem:[%s986 + $0x72] sm:$0x1]
        %v1090 = vld [vmem:[%s986 + $0x73] sm:$0x1]
        %v1091 = vld [vmem:[%s986 + $0x74] sm:$0x1]
        %v1092 = vld [vmem:[%s986 + $0x75] sm:$0x1]
        %v1093 = vld [vmem:[%s986 + $0x76] sm:$0x1]
        %v1094 = vld [vmem:[%s986 + $0x77] sm:$0x1]
        %v1095 = vld [vmem:[%s986 + $0x78] sm:$0x1]
        %v1096 = vld [vmem:[%s986 + $0x79] sm:$0x1]
        %v1097 = vld [vmem:[%s986 + $0x7a] sm:$0x1]
        %v1098 = vld [vmem:[%s986 + $0x7b] sm:$0x1]
        %v1099 = vld [vmem:[%s986 + $0x7e] sm:$0x1]
        %v1100 = vld [vmem:[%s986 + $0x7f] sm:$0x1]
        %v1101 = vld [vmem:[%s986 + $0x80] sm:$0x1]
        %v1102 = vld [vmem:[%s986 + $0x81] sm:$0x1]
        %v1103 = vld [vmem:[%s986 + $0x82] sm:$0x1]
        %v1104 = vld [vmem:[%s986 + $0x83] sm:$0x1]
        %v1105 = vld [vmem:[%s986 + $0x84] sm:$0x1]
        %v1106 = vld [vmem:[%s986 + $0x85] sm:$0x1]
        %v1107 = vld [vmem:[%s986 + $0x86] sm:$0x1]
        %v1108 = vld [vmem:[%s986 + $0x87] sm:$0x1]
        %v1109 = vld [vmem:[%s986 + $0x88] sm:$0x1]
        %v1110 = vld [vmem:[%s986 + $0x89] sm:$0x1]
        %v1111 = vld [vmem:[%s986 + $0x8a] sm:$0x1]
        %v1112 = vld [vmem:[%s986 + $0x8b] sm:$0x1]
        %v1113 = vld [vmem:[%s986 + $0x8c] sm:$0x1]
        %v1114 = vld [vmem:[%s986 + $0x8d] sm:$0x1]
        %v1115 = vstv %s202
        %v1116 = vmul.f32 %v1115, %v987
        %v1117 = vmul.f32 %v1115, %v988
        %v1118 = vmul.f32 %v1115, %v989
        %v1119 = vmul.f32 %v1115, %v990
        %v1120 = vmul.f32 %v1115, %v991
        %v1121 = vmul.f32 %v1115, %v992
        %v1122 = vmul.f32 %v1115, %v993
        %v1123 = vmul.f32 %v1115, %v994
        %v1124 = vmul.f32 %v1115, %v995
        %v1125 = vmul.f32 %v1115, %v996
        %v1126 = vmul.f32 %v1115, %v997
        %v1127 = vmul.f32 %v1115, %v998
        %v1128 = vmul.f32 %v1115, %v999
        %v1129 = vmul.f32 %v1115, %v1000
        %v1130 = vmul.f32 %v1115, %v1001
        %v1131 = vmul.f32 %v1115, %v1002
        %v1132 = vmul.f32 %v1115, %v1003
        %v1133 = vmul.f32 %v1115, %v1004
        %v1134 = vmul.f32 %v1115, %v1005
        %v1135 = vmul.f32 %v1115, %v1006
        %v1136 = vmul.f32 %v1115, %v1007
        %v1137 = vmul.f32 %v1115, %v1008
        %v1138 = vmul.f32 %v1115, %v1009
        %v1139 = vmul.f32 %v1115, %v1010
        %v1140 = vmul.f32 %v1115, %v1011
        %v1141 = vmul.f32 %v1115, %v1012
        %v1142 = vmul.f32 %v1115, %v1013
        %v1143 = vmul.f32 %v1115, %v1014
        %v1144 = vmul.f32 %v1115, %v1015
        %v1145 = vmul.f32 %v1115, %v1016
        %v1146 = vmul.f32 %v1115, %v1017
        %v1147 = vmul.f32 %v1115, %v1018
        %v1148 = vmul.f32 %v1115, %v1019
        %v1149 = vmul.f32 %v1115, %v1020
        %v1150 = vmul.f32 %v1115, %v1021
        %v1151 = vmul.f32 %v1115, %v1022
        %v1152 = vmul.f32 %v1115, %v1023
        %v1153 = vmul.f32 %v1115, %v1024
        %v1154 = vmul.f32 %v1115, %v1025
        %v1155 = vmul.f32 %v1115, %v1026
        %v1156 = vmul.f32 %v1115, %v1027
        %v1157 = vmul.f32 %v1115, %v1028
        %v1158 = vmul.f32 %v1115, %v1029
        %v1159 = vmul.f32 %v1115, %v1030
        %v1160 = vmul.f32 %v1115, %v1031
        %v1161 = vmul.f32 %v1115, %v1032
        %v1162 = vmul.f32 %v1115, %v1033
        %v1163 = vmul.f32 %v1115, %v1034
        %v1164 = vmul.f32 %v1115, %v1035
        %v1165 = vmul.f32 %v1115, %v1036
        %v1166 = vmul.f32 %v1115, %v1037
        %v1167 = vmul.f32 %v1115, %v1038
        %v1168 = vmul.f32 %v1115, %v1039
        %v1169 = vmul.f32 %v1115, %v1040
        %v1170 = vmul.f32 %v1115, %v1041
        %v1171 = vmul.f32 %v1115, %v1042
        %v1172 = vmul.f32 %v1115, %v1043
        %v1173 = vmul.f32 %v1115, %v1044
        %v1174 = vmul.f32 %v1115, %v1045
        %v1175 = vmul.f32 %v1115, %v1046
        %v1176 = vmul.f32 %v1115, %v1047
        %v1177 = vmul.f32 %v1115, %v1048
        %v1178 = vmul.f32 %v1115, %v1049
        %v1179 = vmul.f32 %v1115, %v1050
        %v1180 = vmul.f32 %v1115, %v1051
        %v1181 = vmul.f32 %v1115, %v1052
        %v1182 = vmul.f32 %v1115, %v1053
        %v1183 = vmul.f32 %v1115, %v1054
        %v1184 = vmul.f32 %v1115, %v1055
        %v1185 = vmul.f32 %v1115, %v1056
        %v1186 = vmul.f32 %v1115, %v1057
        %v1187 = vmul.f32 %v1115, %v1058
        %v1188 = vmul.f32 %v1115, %v1059
        %v1189 = vmul.f32 %v1115, %v1060
        %v1190 = vmul.f32 %v1115, %v1061
        %v1191 = vmul.f32 %v1115, %v1062
        %v1192 = vmul.f32 %v1115, %v1063
        %v1193 = vmul.f32 %v1115, %v1064
        %v1194 = vmul.f32 %v1115, %v1065
        %v1195 = vmul.f32 %v1115, %v1066
        %v1196 = vmul.f32 %v1115, %v1067
        %v1197 = vmul.f32 %v1115, %v1068
        %v1198 = vmul.f32 %v1115, %v1069
        %v1199 = vmul.f32 %v1115, %v1070
        %v1200 = vmul.f32 %v1115, %v1071
        %v1201 = vmul.f32 %v1115, %v1072
        %v1202 = vmul.f32 %v1115, %v1073
        %v1203 = vmul.f32 %v1115, %v1074
        %v1204 = vmul.f32 %v1115, %v1075
        %v1205 = vmul.f32 %v1115, %v1076
        %v1206 = vmul.f32 %v1115, %v1077
        %v1207 = vmul.f32 %v1115, %v1078
        %v1208 = vmul.f32 %v1115, %v1079
        %v1209 = vmul.f32 %v1115, %v1080
        %v1210 = vmul.f32 %v1115, %v1081
        %v1211 = vmul.f32 %v1115, %v1082
        %v1212 = vmul.f32 %v1115, %v1083
        %v1213 = vmul.f32 %v1115, %v1084
        %v1214 = vmul.f32 %v1115, %v1085
        %v1215 = vmul.f32 %v1115, %v1086
        %v1216 = vmul.f32 %v1115, %v1087
        %v1217 = vmul.f32 %v1115, %v1088
        %v1218 = vmul.f32 %v1115, %v1089
        %v1219 = vmul.f32 %v1115, %v1090
        %v1220 = vmul.f32 %v1115, %v1091
        %v1221 = vmul.f32 %v1115, %v1092
        %v1222 = vmul.f32 %v1115, %v1093
        %v1223 = vmul.f32 %v1115, %v1094
        %v1224 = vmul.f32 %v1115, %v1095
        %v1225 = vmul.f32 %v1115, %v1096
        %v1226 = vmul.f32 %v1115, %v1097
        %v1227 = vmul.f32 %v1115, %v1098
        %v1228 = vmul.f32 %v1115, %v1099
        %v1229 = vmul.f32 %v1115, %v1100
        %v1230 = vmul.f32 %v1115, %v1101
        %v1231 = vmul.f32 %v1115, %v1102
        %v1232 = vmul.f32 %v1115, %v1103
        %v1233 = vmul.f32 %v1115, %v1104
        %v1234 = vmul.f32 %v1115, %v1105
        %v1235 = vmul.f32 %v1115, %v1106
        %v1236 = vmul.f32 %v1115, %v1107
        %v1237 = vmul.f32 %v1115, %v1108
        %v1238 = vmul.f32 %v1115, %v1109
        %v1239 = vmul.f32 %v1115, %v1110
        %v1240 = vmul.f32 %v1115, %v1111
        %v1241 = vmul.f32 %v1115, %v1112
        %v1242 = vmul.f32 %v1115, %v1113
        %v1243 = vmul.f32 %v1115, %v1114
        %v1244 = vadd.f32 %v857, %v1116
        %v1245 = vadd.f32 %v858, %v1117
        %v1246 = vadd.f32 %v859, %v1118
        %v1247 = vadd.f32 %v860, %v1119
        %v1248 = vadd.f32 %v861, %v1120
        %v1249 = vadd.f32 %v862, %v1121
        %v1250 = vadd.f32 %v863, %v1122
        %v1251 = vadd.f32 %v864, %v1123
        %v1252 = vadd.f32 %v865, %v1124
        %v1253 = vadd.f32 %v866, %v1125
        %v1254 = vadd.f32 %v867, %v1126
        %v1255 = vadd.f32 %v868, %v1127
        %v1256 = vadd.f32 %v869, %v1128
        %v1257 = vadd.f32 %v870, %v1129
        %v1258 = vadd.f32 %v871, %v1130
        %v1259 = vadd.f32 %v872, %v1131
        %v1260 = vadd.f32 %v873, %v1132
        %v1261 = vadd.f32 %v874, %v1133
        %v1262 = vadd.f32 %v875, %v1134
        %v1263 = vadd.f32 %v876, %v1135
        %v1264 = vadd.f32 %v877, %v1136
        %v1265 = vadd.f32 %v878, %v1137
        %v1266 = vadd.f32 %v879, %v1138
        %v1267 = vadd.f32 %v880, %v1139
        %v1268 = vadd.f32 %v881, %v1140
        %v1269 = vadd.f32 %v882, %v1141
        %v1270 = vadd.f32 %v883, %v1142
        %v1271 = vadd.f32 %v884, %v1143
        %v1272 = vadd.f32 %v885, %v1144
        %v1273 = vadd.f32 %v886, %v1145
        %v1274 = vadd.f32 %v887, %v1146
        %v1275 = vadd.f32 %v888, %v1147
        %v1276 = vadd.f32 %v889, %v1148
        %v1277 = vadd.f32 %v890, %v1149
        %v1278 = vadd.f32 %v891, %v1150
        %v1279 = vadd.f32 %v892, %v1151
        %v1280 = vadd.f32 %v893, %v1152
        %v1281 = vadd.f32 %v894, %v1153
        %v1282 = vadd.f32 %v895, %v1154
        %v1283 = vadd.f32 %v896, %v1155
        %v1284 = vadd.f32 %v897, %v1156
        %v1285 = vadd.f32 %v898, %v1157
        %v1286 = vadd.f32 %v899, %v1158
        %v1287 = vadd.f32 %v900, %v1159
        %v1288 = vadd.f32 %v901, %v1160
        %v1289 = vadd.f32 %v902, %v1161
        %v1290 = vadd.f32 %v903, %v1162
        %v1291 = vadd.f32 %v904, %v1163
        %v1292 = vadd.f32 %v905, %v1164
        %v1293 = vadd.f32 %v906, %v1165
        %v1294 = vadd.f32 %v907, %v1166
        %v1295 = vadd.f32 %v908, %v1167
        %v1296 = vadd.f32 %v909, %v1168
        %v1297 = vadd.f32 %v910, %v1169
        %v1298 = vadd.f32 %v911, %v1170
        %v1299 = vadd.f32 %v912, %v1171
        %v1300 = vadd.f32 %v913, %v1172
        %v1301 = vadd.f32 %v914, %v1173
        %v1302 = vadd.f32 %v915, %v1174
        %v1303 = vadd.f32 %v916, %v1175
        %v1304 = vadd.f32 %v917, %v1176
        %v1305 = vadd.f32 %v918, %v1177
        %v1306 = vadd.f32 %v919, %v1178
        %v1307 = vadd.f32 %v920, %v1179
        %v1308 = vadd.f32 %v921, %v1180
        %v1309 = vadd.f32 %v922, %v1181
        %v1310 = vadd.f32 %v923, %v1182
        %v1311 = vadd.f32 %v924, %v1183
        %v1312 = vadd.f32 %v925, %v1184
        %v1313 = vadd.f32 %v926, %v1185
        %v1314 = vadd.f32 %v927, %v1186
        %v1315 = vadd.f32 %v928, %v1187
        %v1316 = vadd.f32 %v929, %v1188
        %v1317 = vadd.f32 %v930, %v1189
        %v1318 = vadd.f32 %v931, %v1190
        %v1319 = vadd.f32 %v932, %v1191
        %v1320 = vadd.f32 %v933, %v1192
        %v1321 = vadd.f32 %v934, %v1193
        %v1322 = vadd.f32 %v935, %v1194
        %v1323 = vadd.f32 %v936, %v1195
        %v1324 = vadd.f32 %v937, %v1196
        %v1325 = vadd.f32 %v938, %v1197
        %v1326 = vadd.f32 %v939, %v1198
        %v1327 = vadd.f32 %v940, %v1199
        %v1328 = vadd.f32 %v941, %v1200
        %v1329 = vadd.f32 %v942, %v1201
        %v1330 = vadd.f32 %v943, %v1202
        %v1331 = vadd.f32 %v944, %v1203
        %v1332 = vadd.f32 %v945, %v1204
        %v1333 = vadd.f32 %v946, %v1205
        %v1334 = vadd.f32 %v947, %v1206
        %v1335 = vadd.f32 %v948, %v1207
        %v1336 = vadd.f32 %v949, %v1208
        %v1337 = vadd.f32 %v950, %v1209
        %v1338 = vadd.f32 %v951, %v1210
        %v1339 = vadd.f32 %v952, %v1211
        %v1340 = vadd.f32 %v953, %v1212
        %v1341 = vadd.f32 %v954, %v1213
        %v1342 = vadd.f32 %v955, %v1214
        %v1343 = vadd.f32 %v956, %v1215
        %v1344 = vadd.f32 %v957, %v1216
        %v1345 = vadd.f32 %v958, %v1217
        %v1346 = vadd.f32 %v959, %v1218
        %v1347 = vadd.f32 %v960, %v1219
        %v1348 = vadd.f32 %v961, %v1220
        %v1349 = vadd.f32 %v962, %v1221
        %v1350 = vadd.f32 %v963, %v1222
        %v1351 = vadd.f32 %v964, %v1223
        %v1352 = vadd.f32 %v965, %v1224
        %v1353 = vadd.f32 %v966, %v1225
        %v1354 = vadd.f32 %v967, %v1226
        %v1355 = vadd.f32 %v968, %v1227
        %v1356 = vadd.f32 %v969, %v1228
        %v1357 = vadd.f32 %v970, %v1229
        %v1358 = vadd.f32 %v971, %v1230
        %v1359 = vadd.f32 %v972, %v1231
        %v1360 = vadd.f32 %v973, %v1232
        %v1361 = vadd.f32 %v974, %v1233
        %v1362 = vadd.f32 %v975, %v1234
        %v1363 = vadd.f32 %v976, %v1235
        %v1364 = vadd.f32 %v977, %v1236
        %v1365 = vadd.f32 %v978, %v1237
        %v1366 = vadd.f32 %v979, %v1238
        %v1367 = vadd.f32 %v980, %v1239
        %v1368 = vadd.f32 %v981, %v1240
        %v1369 = vadd.f32 %v982, %v1241
        %v1370 = vadd.f32 %v983, %v1242
        %v1371 = vadd.f32 %v984, %v1243
        %s1372 = sadd.s32 %s199, 1
        %s1373 = smul.u32 %s1372, 18
        %s1374 = scalar_lea.vmem [#allocation7], %s1373
        %v1375 = vld [vmem:[%s1374] sm:$0x1]
        %v1376 = vld [vmem:[%s1374 + $0x1] sm:$0x1]
        %v1377 = vld [vmem:[%s1374 + $0x2] sm:$0x1]
        %v1378 = vld [vmem:[%s1374 + $0x3] sm:$0x1]
        %v1379 = vld [vmem:[%s1374 + $0x4] sm:$0x1]
        %v1380 = vld [vmem:[%s1374 + $0x5] sm:$0x1]
        %v1381 = vld [vmem:[%s1374 + $0x6] sm:$0x1]
        %v1382 = vld [vmem:[%s1374 + $0x7] sm:$0x1]
        %v1383 = vld [vmem:[%s1374 + $0x8] sm:$0x1]
        %v1384 = vld [vmem:[%s1374 + $0x9] sm:$0x1]
        %v1385 = vld [vmem:[%s1374 + $0xa] sm:$0x1]
        %v1386 = vld [vmem:[%s1374 + $0xb] sm:$0x1]
        %v1387 = vld [vmem:[%s1374 + $0xc] sm:$0x1]
        %v1388 = vld [vmem:[%s1374 + $0xd] sm:$0x1]
        %v1389 = vld [vmem:[%s1374 + $0xe] sm:$0x1]
        %v1390 = vld [vmem:[%s1374 + $0xf] sm:$0x1]
        %v1391 = vld [vmem:[%s1374 + $0x12] sm:$0x1]
        %v1392 = vld [vmem:[%s1374 + $0x13] sm:$0x1]
        %v1393 = vld [vmem:[%s1374 + $0x14] sm:$0x1]
        %v1394 = vld [vmem:[%s1374 + $0x15] sm:$0x1]
        %v1395 = vld [vmem:[%s1374 + $0x16] sm:$0x1]
        %v1396 = vld [vmem:[%s1374 + $0x17] sm:$0x1]
        %v1397 = vld [vmem:[%s1374 + $0x18] sm:$0x1]
        %v1398 = vld [vmem:[%s1374 + $0x19] sm:$0x1]
        %v1399 = vld [vmem:[%s1374 + $0x1a] sm:$0x1]
        %v1400 = vld [vmem:[%s1374 + $0x1b] sm:$0x1]
        %v1401 = vld [vmem:[%s1374 + $0x1c] sm:$0x1]
        %v1402 = vld [vmem:[%s1374 + $0x1d] sm:$0x1]
        %v1403 = vld [vmem:[%s1374 + $0x1e] sm:$0x1]
        %v1404 = vld [vmem:[%s1374 + $0x1f] sm:$0x1]
        %v1405 = vld [vmem:[%s1374 + $0x20] sm:$0x1]
        %v1406 = vld [vmem:[%s1374 + $0x21] sm:$0x1]
        %v1407 = vld [vmem:[%s1374 + $0x24] sm:$0x1]
        %v1408 = vld [vmem:[%s1374 + $0x25] sm:$0x1]
        %v1409 = vld [vmem:[%s1374 + $0x26] sm:$0x1]
        %v1410 = vld [vmem:[%s1374 + $0x27] sm:$0x1]
        %v1411 = vld [vmem:[%s1374 + $0x28] sm:$0x1]
        %v1412 = vld [vmem:[%s1374 + $0x29] sm:$0x1]
        %v1413 = vld [vmem:[%s1374 + $0x2a] sm:$0x1]
        %v1414 = vld [vmem:[%s1374 + $0x2b] sm:$0x1]
        %v1415 = vld [vmem:[%s1374 + $0x2c] sm:$0x1]
        %v1416 = vld [vmem:[%s1374 + $0x2d] sm:$0x1]
        %v1417 = vld [vmem:[%s1374 + $0x2e] sm:$0x1]
        %v1418 = vld [vmem:[%s1374 + $0x2f] sm:$0x1]
        %v1419 = vld [vmem:[%s1374 + $0x30] sm:$0x1]
        %v1420 = vld [vmem:[%s1374 + $0x31] sm:$0x1]
        %v1421 = vld [vmem:[%s1374 + $0x32] sm:$0x1]
        %v1422 = vld [vmem:[%s1374 + $0x33] sm:$0x1]
        %v1423 = vld [vmem:[%s1374 + $0x36] sm:$0x1]
        %v1424 = vld [vmem:[%s1374 + $0x37] sm:$0x1]
        %v1425 = vld [vmem:[%s1374 + $0x38] sm:$0x1]
        %v1426 = vld [vmem:[%s1374 + $0x39] sm:$0x1]
        %v1427 = vld [vmem:[%s1374 + $0x3a] sm:$0x1]
        %v1428 = vld [vmem:[%s1374 + $0x3b] sm:$0x1]
        %v1429 = vld [vmem:[%s1374 + $0x3c] sm:$0x1]
        %v1430 = vld [vmem:[%s1374 + $0x3d] sm:$0x1]
        %v1431 = vld [vmem:[%s1374 + $0x3e] sm:$0x1]
        %v1432 = vld [vmem:[%s1374 + $0x3f] sm:$0x1]
        %v1433 = vld [vmem:[%s1374 + $0x40] sm:$0x1]
        %v1434 = vld [vmem:[%s1374 + $0x41] sm:$0x1]
        %v1435 = vld [vmem:[%s1374 + $0x42] sm:$0x1]
        %v1436 = vld [vmem:[%s1374 + $0x43] sm:$0x1]
        %v1437 = vld [vmem:[%s1374 + $0x44] sm:$0x1]
        %v1438 = vld [vmem:[%s1374 + $0x45] sm:$0x1]
        %v1439 = vld [vmem:[%s1374 + $0x48] sm:$0x1]
        %v1440 = vld [vmem:[%s1374 + $0x49] sm:$0x1]
        %v1441 = vld [vmem:[%s1374 + $0x4a] sm:$0x1]
        %v1442 = vld [vmem:[%s1374 + $0x4b] sm:$0x1]
        %v1443 = vld [vmem:[%s1374 + $0x4c] sm:$0x1]
        %v1444 = vld [vmem:[%s1374 + $0x4d] sm:$0x1]
        %v1445 = vld [vmem:[%s1374 + $0x4e] sm:$0x1]
        %v1446 = vld [vmem:[%s1374 + $0x4f] sm:$0x1]
        %v1447 = vld [vmem:[%s1374 + $0x50] sm:$0x1]
        %v1448 = vld [vmem:[%s1374 + $0x51] sm:$0x1]
        %v1449 = vld [vmem:[%s1374 + $0x52] sm:$0x1]
        %v1450 = vld [vmem:[%s1374 + $0x53] sm:$0x1]
        %v1451 = vld [vmem:[%s1374 + $0x54] sm:$0x1]
        %v1452 = vld [vmem:[%s1374 + $0x55] sm:$0x1]
        %v1453 = vld [vmem:[%s1374 + $0x56] sm:$0x1]
        %v1454 = vld [vmem:[%s1374 + $0x57] sm:$0x1]
        %v1455 = vld [vmem:[%s1374 + $0x5a] sm:$0x1]
        %v1456 = vld [vmem:[%s1374 + $0x5b] sm:$0x1]
        %v1457 = vld [vmem:[%s1374 + $0x5c] sm:$0x1]
        %v1458 = vld [vmem:[%s1374 + $0x5d] sm:$0x1]
        %v1459 = vld [vmem:[%s1374 + $0x5e] sm:$0x1]
        %v1460 = vld [vmem:[%s1374 + $0x5f] sm:$0x1]
        %v1461 = vld [vmem:[%s1374 + $0x60] sm:$0x1]
        %v1462 = vld [vmem:[%s1374 + $0x61] sm:$0x1]
        %v1463 = vld [vmem:[%s1374 + $0x62] sm:$0x1]
        %v1464 = vld [vmem:[%s1374 + $0x63] sm:$0x1]
        %v1465 = vld [vmem:[%s1374 + $0x64] sm:$0x1]
        %v1466 = vld [vmem:[%s1374 + $0x65] sm:$0x1]
        %v1467 = vld [vmem:[%s1374 + $0x66] sm:$0x1]
        %v1468 = vld [vmem:[%s1374 + $0x67] sm:$0x1]
        %v1469 = vld [vmem:[%s1374 + $0x68] sm:$0x1]
        %v1470 = vld [vmem:[%s1374 + $0x69] sm:$0x1]
        %v1471 = vld [vmem:[%s1374 + $0x6c] sm:$0x1]
        %v1472 = vld [vmem:[%s1374 + $0x6d] sm:$0x1]
        %v1473 = vld [vmem:[%s1374 + $0x6e] sm:$0x1]
        %v1474 = vld [vmem:[%s1374 + $0x6f] sm:$0x1]
        %v1475 = vld [vmem:[%s1374 + $0x70] sm:$0x1]
        %v1476 = vld [vmem:[%s1374 + $0x71] sm:$0x1]
        %v1477 = vld [vmem:[%s1374 + $0x72] sm:$0x1]
        %v1478 = vld [vmem:[%s1374 + $0x73] sm:$0x1]
        %v1479 = vld [vmem:[%s1374 + $0x74] sm:$0x1]
        %v1480 = vld [vmem:[%s1374 + $0x75] sm:$0x1]
        %v1481 = vld [vmem:[%s1374 + $0x76] sm:$0x1]
        %v1482 = vld [vmem:[%s1374 + $0x77] sm:$0x1]
        %v1483 = vld [vmem:[%s1374 + $0x78] sm:$0x1]
        %v1484 = vld [vmem:[%s1374 + $0x79] sm:$0x1]
        %v1485 = vld [vmem:[%s1374 + $0x7a] sm:$0x1]
        %v1486 = vld [vmem:[%s1374 + $0x7b] sm:$0x1]
        %v1487 = vld [vmem:[%s1374 + $0x7e] sm:$0x1]
        %v1488 = vld [vmem:[%s1374 + $0x7f] sm:$0x1]
        %v1489 = vld [vmem:[%s1374 + $0x80] sm:$0x1]
        %v1490 = vld [vmem:[%s1374 + $0x81] sm:$0x1]
        %v1491 = vld [vmem:[%s1374 + $0x82] sm:$0x1]
        %v1492 = vld [vmem:[%s1374 + $0x83] sm:$0x1]
        %v1493 = vld [vmem:[%s1374 + $0x84] sm:$0x1]
        %v1494 = vld [vmem:[%s1374 + $0x85] sm:$0x1]
        %v1495 = vld [vmem:[%s1374 + $0x86] sm:$0x1]
        %v1496 = vld [vmem:[%s1374 + $0x87] sm:$0x1]
        %v1497 = vld [vmem:[%s1374 + $0x88] sm:$0x1]
        %v1498 = vld [vmem:[%s1374 + $0x89] sm:$0x1]
        %v1499 = vld [vmem:[%s1374 + $0x8a] sm:$0x1]
        %v1500 = vld [vmem:[%s1374 + $0x8b] sm:$0x1]
        %v1501 = vld [vmem:[%s1374 + $0x8c] sm:$0x1]
        %v1502 = vld [vmem:[%s1374 + $0x8d] sm:$0x1]
        %v1503 = vstv %s203
        %v1504 = vmul.f32 %v1503, %v1375
        %v1505 = vmul.f32 %v1503, %v1376
        %v1506 = vmul.f32 %v1503, %v1377
        %v1507 = vmul.f32 %v1503, %v1378
        %v1508 = vmul.f32 %v1503, %v1379
        %v1509 = vmul.f32 %v1503, %v1380
        %v1510 = vmul.f32 %v1503, %v1381
        %v1511 = vmul.f32 %v1503, %v1382
        %v1512 = vmul.f32 %v1503, %v1383
        %v1513 = vmul.f32 %v1503, %v1384
        %v1514 = vmul.f32 %v1503, %v1385
        %v1515 = vmul.f32 %v1503, %v1386
        %v1516 = vmul.f32 %v1503, %v1387
        %v1517 = vmul.f32 %v1503, %v1388
        %v1518 = vmul.f32 %v1503, %v1389
        %v1519 = vmul.f32 %v1503, %v1390
        %v1520 = vmul.f32 %v1503, %v1391
        %v1521 = vmul.f32 %v1503, %v1392
        %v1522 = vmul.f32 %v1503, %v1393
        %v1523 = vmul.f32 %v1503, %v1394
        %v1524 = vmul.f32 %v1503, %v1395
        %v1525 = vmul.f32 %v1503, %v1396
        %v1526 = vmul.f32 %v1503, %v1397
        %v1527 = vmul.f32 %v1503, %v1398
        %v1528 = vmul.f32 %v1503, %v1399
        %v1529 = vmul.f32 %v1503, %v1400
        %v1530 = vmul.f32 %v1503, %v1401
        %v1531 = vmul.f32 %v1503, %v1402
        %v1532 = vmul.f32 %v1503, %v1403
        %v1533 = vmul.f32 %v1503, %v1404
        %v1534 = vmul.f32 %v1503, %v1405
        %v1535 = vmul.f32 %v1503, %v1406
        %v1536 = vmul.f32 %v1503, %v1407
        %v1537 = vmul.f32 %v1503, %v1408
        %v1538 = vmul.f32 %v1503, %v1409
        %v1539 = vmul.f32 %v1503, %v1410
        %v1540 = vmul.f32 %v1503, %v1411
        %v1541 = vmul.f32 %v1503, %v1412
        %v1542 = vmul.f32 %v1503, %v1413
        %v1543 = vmul.f32 %v1503, %v1414
        %v1544 = vmul.f32 %v1503, %v1415
        %v1545 = vmul.f32 %v1503, %v1416
        %v1546 = vmul.f32 %v1503, %v1417
        %v1547 = vmul.f32 %v1503, %v1418
        %v1548 = vmul.f32 %v1503, %v1419
        %v1549 = vmul.f32 %v1503, %v1420
        %v1550 = vmul.f32 %v1503, %v1421
        %v1551 = vmul.f32 %v1503, %v1422
        %v1552 = vmul.f32 %v1503, %v1423
        %v1553 = vmul.f32 %v1503, %v1424
        %v1554 = vmul.f32 %v1503, %v1425
        %v1555 = vmul.f32 %v1503, %v1426
        %v1556 = vmul.f32 %v1503, %v1427
        %v1557 = vmul.f32 %v1503, %v1428
        %v1558 = vmul.f32 %v1503, %v1429
        %v1559 = vmul.f32 %v1503, %v1430
        %v1560 = vmul.f32 %v1503, %v1431
        %v1561 = vmul.f32 %v1503, %v1432
        %v1562 = vmul.f32 %v1503, %v1433
        %v1563 = vmul.f32 %v1503, %v1434
        %v1564 = vmul.f32 %v1503, %v1435
        %v1565 = vmul.f32 %v1503, %v1436
        %v1566 = vmul.f32 %v1503, %v1437
        %v1567 = vmul.f32 %v1503, %v1438
        %v1568 = vmul.f32 %v1503, %v1439
        %v1569 = vmul.f32 %v1503, %v1440
        %v1570 = vmul.f32 %v1503, %v1441
        %v1571 = vmul.f32 %v1503, %v1442
        %v1572 = vmul.f32 %v1503, %v1443
        %v1573 = vmul.f32 %v1503, %v1444
        %v1574 = vmul.f32 %v1503, %v1445
        %v1575 = vmul.f32 %v1503, %v1446
        %v1576 = vmul.f32 %v1503, %v1447
        %v1577 = vmul.f32 %v1503, %v1448
        %v1578 = vmul.f32 %v1503, %v1449
        %v1579 = vmul.f32 %v1503, %v1450
        %v1580 = vmul.f32 %v1503, %v1451
        %v1581 = vmul.f32 %v1503, %v1452
        %v1582 = vmul.f32 %v1503, %v1453
        %v1583 = vmul.f32 %v1503, %v1454
        %v1584 = vmul.f32 %v1503, %v1455
        %v1585 = vmul.f32 %v1503, %v1456
        %v1586 = vmul.f32 %v1503, %v1457
        %v1587 = vmul.f32 %v1503, %v1458
        %v1588 = vmul.f32 %v1503, %v1459
        %v1589 = vmul.f32 %v1503, %v1460
        %v1590 = vmul.f32 %v1503, %v1461
        %v1591 = vmul.f32 %v1503, %v1462
        %v1592 = vmul.f32 %v1503, %v1463
        %v1593 = vmul.f32 %v1503, %v1464
        %v1594 = vmul.f32 %v1503, %v1465
        %v1595 = vmul.f32 %v1503, %v1466
        %v1596 = vmul.f32 %v1503, %v1467
        %v1597 = vmul.f32 %v1503, %v1468
        %v1598 = vmul.f32 %v1503, %v1469
        %v1599 = vmul.f32 %v1503, %v1470
        %v1600 = vmul.f32 %v1503, %v1471
        %v1601 = vmul.f32 %v1503, %v1472
        %v1602 = vmul.f32 %v1503, %v1473
        %v1603 = vmul.f32 %v1503, %v1474
        %v1604 = vmul.f32 %v1503, %v1475
        %v1605 = vmul.f32 %v1503, %v1476
        %v1606 = vmul.f32 %v1503, %v1477
        %v1607 = vmul.f32 %v1503, %v1478
        %v1608 = vmul.f32 %v1503, %v1479
        %v1609 = vmul.f32 %v1503, %v1480
        %v1610 = vmul.f32 %v1503, %v1481
        %v1611 = vmul.f32 %v1503, %v1482
        %v1612 = vmul.f32 %v1503, %v1483
        %v1613 = vmul.f32 %v1503, %v1484
        %v1614 = vmul.f32 %v1503, %v1485
        %v1615 = vmul.f32 %v1503, %v1486
        %v1616 = vmul.f32 %v1503, %v1487
        %v1617 = vmul.f32 %v1503, %v1488
        %v1618 = vmul.f32 %v1503, %v1489
        %v1619 = vmul.f32 %v1503, %v1490
        %v1620 = vmul.f32 %v1503, %v1491
        %v1621 = vmul.f32 %v1503, %v1492
        %v1622 = vmul.f32 %v1503, %v1493
        %v1623 = vmul.f32 %v1503, %v1494
        %v1624 = vmul.f32 %v1503, %v1495
        %v1625 = vmul.f32 %v1503, %v1496
        %v1626 = vmul.f32 %v1503, %v1497
        %v1627 = vmul.f32 %v1503, %v1498
        %v1628 = vmul.f32 %v1503, %v1499
        %v1629 = vmul.f32 %v1503, %v1500
        %v1630 = vmul.f32 %v1503, %v1501
        %v1631 = vmul.f32 %v1503, %v1502
        %v1632 = vadd.f32 %v1244, %v1504
        %v1633 = vadd.f32 %v1245, %v1505
        %v1634 = vadd.f32 %v1246, %v1506
        %v1635 = vadd.f32 %v1247, %v1507
        %v1636 = vadd.f32 %v1248, %v1508
        %v1637 = vadd.f32 %v1249, %v1509
        %v1638 = vadd.f32 %v1250, %v1510
        %v1639 = vadd.f32 %v1251, %v1511
        %v1640 = vadd.f32 %v1252, %v1512
        %v1641 = vadd.f32 %v1253, %v1513
        %v1642 = vadd.f32 %v1254, %v1514
        %v1643 = vadd.f32 %v1255, %v1515
        %v1644 = vadd.f32 %v1256, %v1516
        %v1645 = vadd.f32 %v1257, %v1517
        %v1646 = vadd.f32 %v1258, %v1518
        %v1647 = vadd.f32 %v1259, %v1519
        %v1648 = vadd.f32 %v1260, %v1520
        %v1649 = vadd.f32 %v1261, %v1521
        %v1650 = vadd.f32 %v1262, %v1522
        %v1651 = vadd.f32 %v1263, %v1523
        %v1652 = vadd.f32 %v1264, %v1524
        %v1653 = vadd.f32 %v1265, %v1525
        %v1654 = vadd.f32 %v1266, %v1526
        %v1655 = vadd.f32 %v1267, %v1527
        %v1656 = vadd.f32 %v1268, %v1528
        %v1657 = vadd.f32 %v1269, %v1529
        %v1658 = vadd.f32 %v1270, %v1530
        %v1659 = vadd.f32 %v1271, %v1531
        %v1660 = vadd.f32 %v1272, %v1532
        %v1661 = vadd.f32 %v1273, %v1533
        %v1662 = vadd.f32 %v1274, %v1534
        %v1663 = vadd.f32 %v1275, %v1535
        %v1664 = vadd.f32 %v1276, %v1536
        %v1665 = vadd.f32 %v1277, %v1537
        %v1666 = vadd.f32 %v1278, %v1538
        %v1667 = vadd.f32 %v1279, %v1539
        %v1668 = vadd.f32 %v1280, %v1540
        %v1669 = vadd.f32 %v1281, %v1541
        %v1670 = vadd.f32 %v1282, %v1542
        %v1671 = vadd.f32 %v1283, %v1543
        %v1672 = vadd.f32 %v1284, %v1544
        %v1673 = vadd.f32 %v1285, %v1545
        %v1674 = vadd.f32 %v1286, %v1546
        %v1675 = vadd.f32 %v1287, %v1547
        %v1676 = vadd.f32 %v1288, %v1548
        %v1677 = vadd.f32 %v1289, %v1549
        %v1678 = vadd.f32 %v1290, %v1550
        %v1679 = vadd.f32 %v1291, %v1551
        %v1680 = vadd.f32 %v1292, %v1552
        %v1681 = vadd.f32 %v1293, %v1553
        %v1682 = vadd.f32 %v1294, %v1554
        %v1683 = vadd.f32 %v1295, %v1555
        %v1684 = vadd.f32 %v1296, %v1556
        %v1685 = vadd.f32 %v1297, %v1557
        %v1686 = vadd.f32 %v1298, %v1558
        %v1687 = vadd.f32 %v1299, %v1559
        %v1688 = vadd.f32 %v1300, %v1560
        %v1689 = vadd.f32 %v1301, %v1561
        %v1690 = vadd.f32 %v1302, %v1562
        %v1691 = vadd.f32 %v1303, %v1563
        %v1692 = vadd.f32 %v1304, %v1564
        %v1693 = vadd.f32 %v1305, %v1565
        %v1694 = vadd.f32 %v1306, %v1566
        %v1695 = vadd.f32 %v1307, %v1567
        %v1696 = vadd.f32 %v1308, %v1568
        %v1697 = vadd.f32 %v1309, %v1569
        %v1698 = vadd.f32 %v1310, %v1570
        %v1699 = vadd.f32 %v1311, %v1571
        %v1700 = vadd.f32 %v1312, %v1572
        %v1701 = vadd.f32 %v1313, %v1573
        %v1702 = vadd.f32 %v1314, %v1574
        %v1703 = vadd.f32 %v1315, %v1575
        %v1704 = vadd.f32 %v1316, %v1576
        %v1705 = vadd.f32 %v1317, %v1577
        %v1706 = vadd.f32 %v1318, %v1578
        %v1707 = vadd.f32 %v1319, %v1579
        %v1708 = vadd.f32 %v1320, %v1580
        %v1709 = vadd.f32 %v1321, %v1581
        %v1710 = vadd.f32 %v1322, %v1582
        %v1711 = vadd.f32 %v1323, %v1583
        %v1712 = vadd.f32 %v1324, %v1584
        %v1713 = vadd.f32 %v1325, %v1585
        %v1714 = vadd.f32 %v1326, %v1586
        %v1715 = vadd.f32 %v1327, %v1587
        %v1716 = vadd.f32 %v1328, %v1588
        %v1717 = vadd.f32 %v1329, %v1589
        %v1718 = vadd.f32 %v1330, %v1590
        %v1719 = vadd.f32 %v1331, %v1591
        %v1720 = vadd.f32 %v1332, %v1592
        %v1721 = vadd.f32 %v1333, %v1593
        %v1722 = vadd.f32 %v1334, %v1594
        %v1723 = vadd.f32 %v1335, %v1595
        %v1724 = vadd.f32 %v1336, %v1596
        %v1725 = vadd.f32 %v1337, %v1597
        %v1726 = vadd.f32 %v1338, %v1598
        %v1727 = vadd.f32 %v1339, %v1599
        %v1728 = vadd.f32 %v1340, %v1600
        %v1729 = vadd.f32 %v1341, %v1601
        %v1730 = vadd.f32 %v1342, %v1602
        %v1731 = vadd.f32 %v1343, %v1603
        %v1732 = vadd.f32 %v1344, %v1604
        %v1733 = vadd.f32 %v1345, %v1605
        %v1734 = vadd.f32 %v1346, %v1606
        %v1735 = vadd.f32 %v1347, %v1607
        %v1736 = vadd.f32 %v1348, %v1608
        %v1737 = vadd.f32 %v1349, %v1609
        %v1738 = vadd.f32 %v1350, %v1610
        %v1739 = vadd.f32 %v1351, %v1611
        %v1740 = vadd.f32 %v1352, %v1612
        %v1741 = vadd.f32 %v1353, %v1613
        %v1742 = vadd.f32 %v1354, %v1614
        %v1743 = vadd.f32 %v1355, %v1615
        %v1744 = vadd.f32 %v1356, %v1616
        %v1745 = vadd.f32 %v1357, %v1617
        %v1746 = vadd.f32 %v1358, %v1618
        %v1747 = vadd.f32 %v1359, %v1619
        %v1748 = vadd.f32 %v1360, %v1620
        %v1749 = vadd.f32 %v1361, %v1621
        %v1750 = vadd.f32 %v1362, %v1622
        %v1751 = vadd.f32 %v1363, %v1623
        %v1752 = vadd.f32 %v1364, %v1624
        %v1753 = vadd.f32 %v1365, %v1625
        %v1754 = vadd.f32 %v1366, %v1626
        %v1755 = vadd.f32 %v1367, %v1627
        %v1756 = vadd.f32 %v1368, %v1628
        %v1757 = vadd.f32 %v1369, %v1629
        %v1758 = vadd.f32 %v1370, %v1630
        %v1759 = vadd.f32 %v1371, %v1631
        %s1760 = sadd.s32 1, %s1373
        %s1761 = scalar_lea.vmem [#allocation7], %s1760
        %v1762 = vld [vmem:[%s1761] sm:$0x1]
        %v1763 = vld [vmem:[%s1761 + $0x1] sm:$0x1]
        %v1764 = vld [vmem:[%s1761 + $0x2] sm:$0x1]
        %v1765 = vld [vmem:[%s1761 + $0x3] sm:$0x1]
        %v1766 = vld [vmem:[%s1761 + $0x4] sm:$0x1]
        %v1767 = vld [vmem:[%s1761 + $0x5] sm:$0x1]
        %v1768 = vld [vmem:[%s1761 + $0x6] sm:$0x1]
        %v1769 = vld [vmem:[%s1761 + $0x7] sm:$0x1]
        %v1770 = vld [vmem:[%s1761 + $0x8] sm:$0x1]
        %v1771 = vld [vmem:[%s1761 + $0x9] sm:$0x1]
        %v1772 = vld [vmem:[%s1761 + $0xa] sm:$0x1]
        %v1773 = vld [vmem:[%s1761 + $0xb] sm:$0x1]
        %v1774 = vld [vmem:[%s1761 + $0xc] sm:$0x1]
        %v1775 = vld [vmem:[%s1761 + $0xd] sm:$0x1]
        %v1776 = vld [vmem:[%s1761 + $0xe] sm:$0x1]
        %v1777 = vld [vmem:[%s1761 + $0xf] sm:$0x1]
        %v1778 = vld [vmem:[%s1761 + $0x12] sm:$0x1]
        %v1779 = vld [vmem:[%s1761 + $0x13] sm:$0x1]
        %v1780 = vld [vmem:[%s1761 + $0x14] sm:$0x1]
        %v1781 = vld [vmem:[%s1761 + $0x15] sm:$0x1]
        %v1782 = vld [vmem:[%s1761 + $0x16] sm:$0x1]
        %v1783 = vld [vmem:[%s1761 + $0x17] sm:$0x1]
        %v1784 = vld [vmem:[%s1761 + $0x18] sm:$0x1]
        %v1785 = vld [vmem:[%s1761 + $0x19] sm:$0x1]
        %v1786 = vld [vmem:[%s1761 + $0x1a] sm:$0x1]
        %v1787 = vld [vmem:[%s1761 + $0x1b] sm:$0x1]
        %v1788 = vld [vmem:[%s1761 + $0x1c] sm:$0x1]
        %v1789 = vld [vmem:[%s1761 + $0x1d] sm:$0x1]
        %v1790 = vld [vmem:[%s1761 + $0x1e] sm:$0x1]
        %v1791 = vld [vmem:[%s1761 + $0x1f] sm:$0x1]
        %v1792 = vld [vmem:[%s1761 + $0x20] sm:$0x1]
        %v1793 = vld [vmem:[%s1761 + $0x21] sm:$0x1]
        %v1794 = vld [vmem:[%s1761 + $0x24] sm:$0x1]
        %v1795 = vld [vmem:[%s1761 + $0x25] sm:$0x1]
        %v1796 = vld [vmem:[%s1761 + $0x26] sm:$0x1]
        %v1797 = vld [vmem:[%s1761 + $0x27] sm:$0x1]
        %v1798 = vld [vmem:[%s1761 + $0x28] sm:$0x1]
        %v1799 = vld [vmem:[%s1761 + $0x29] sm:$0x1]
        %v1800 = vld [vmem:[%s1761 + $0x2a] sm:$0x1]
        %v1801 = vld [vmem:[%s1761 + $0x2b] sm:$0x1]
        %v1802 = vld [vmem:[%s1761 + $0x2c] sm:$0x1]
        %v1803 = vld [vmem:[%s1761 + $0x2d] sm:$0x1]
        %v1804 = vld [vmem:[%s1761 + $0x2e] sm:$0x1]
        %v1805 = vld [vmem:[%s1761 + $0x2f] sm:$0x1]
        %v1806 = vld [vmem:[%s1761 + $0x30] sm:$0x1]
        %v1807 = vld [vmem:[%s1761 + $0x31] sm:$0x1]
        %v1808 = vld [vmem:[%s1761 + $0x32] sm:$0x1]
        %v1809 = vld [vmem:[%s1761 + $0x33] sm:$0x1]
        %v1810 = vld [vmem:[%s1761 + $0x36] sm:$0x1]
        %v1811 = vld [vmem:[%s1761 + $0x37] sm:$0x1]
        %v1812 = vld [vmem:[%s1761 + $0x38] sm:$0x1]
        %v1813 = vld [vmem:[%s1761 + $0x39] sm:$0x1]
        %v1814 = vld [vmem:[%s1761 + $0x3a] sm:$0x1]
        %v1815 = vld [vmem:[%s1761 + $0x3b] sm:$0x1]
        %v1816 = vld [vmem:[%s1761 + $0x3c] sm:$0x1]
        %v1817 = vld [vmem:[%s1761 + $0x3d] sm:$0x1]
        %v1818 = vld [vmem:[%s1761 + $0x3e] sm:$0x1]
        %v1819 = vld [vmem:[%s1761 + $0x3f] sm:$0x1]
        %v1820 = vld [vmem:[%s1761 + $0x40] sm:$0x1]
        %v1821 = vld [vmem:[%s1761 + $0x41] sm:$0x1]
        %v1822 = vld [vmem:[%s1761 + $0x42] sm:$0x1]
        %v1823 = vld [vmem:[%s1761 + $0x43] sm:$0x1]
        %v1824 = vld [vmem:[%s1761 + $0x44] sm:$0x1]
        %v1825 = vld [vmem:[%s1761 + $0x45] sm:$0x1]
        %v1826 = vld [vmem:[%s1761 + $0x48] sm:$0x1]
        %v1827 = vld [vmem:[%s1761 + $0x49] sm:$0x1]
        %v1828 = vld [vmem:[%s1761 + $0x4a] sm:$0x1]
        %v1829 = vld [vmem:[%s1761 + $0x4b] sm:$0x1]
        %v1830 = vld [vmem:[%s1761 + $0x4c] sm:$0x1]
        %v1831 = vld [vmem:[%s1761 + $0x4d] sm:$0x1]
        %v1832 = vld [vmem:[%s1761 + $0x4e] sm:$0x1]
        %v1833 = vld [vmem:[%s1761 + $0x4f] sm:$0x1]
        %v1834 = vld [vmem:[%s1761 + $0x50] sm:$0x1]
        %v1835 = vld [vmem:[%s1761 + $0x51] sm:$0x1]
        %v1836 = vld [vmem:[%s1761 + $0x52] sm:$0x1]
        %v1837 = vld [vmem:[%s1761 + $0x53] sm:$0x1]
        %v1838 = vld [vmem:[%s1761 + $0x54] sm:$0x1]
        %v1839 = vld [vmem:[%s1761 + $0x55] sm:$0x1]
        %v1840 = vld [vmem:[%s1761 + $0x56] sm:$0x1]
        %v1841 = vld [vmem:[%s1761 + $0x57] sm:$0x1]
        %v1842 = vld [vmem:[%s1761 + $0x5a] sm:$0x1]
        %v1843 = vld [vmem:[%s1761 + $0x5b] sm:$0x1]
        %v1844 = vld [vmem:[%s1761 + $0x5c] sm:$0x1]
        %v1845 = vld [vmem:[%s1761 + $0x5d] sm:$0x1]
        %v1846 = vld [vmem:[%s1761 + $0x5e] sm:$0x1]
        %v1847 = vld [vmem:[%s1761 + $0x5f] sm:$0x1]
        %v1848 = vld [vmem:[%s1761 + $0x60] sm:$0x1]
        %v1849 = vld [vmem:[%s1761 + $0x61] sm:$0x1]
        %v1850 = vld [vmem:[%s1761 + $0x62] sm:$0x1]
        %v1851 = vld [vmem:[%s1761 + $0x63] sm:$0x1]
        %v1852 = vld [vmem:[%s1761 + $0x64] sm:$0x1]
        %v1853 = vld [vmem:[%s1761 + $0x65] sm:$0x1]
        %v1854 = vld [vmem:[%s1761 + $0x66] sm:$0x1]
        %v1855 = vld [vmem:[%s1761 + $0x67] sm:$0x1]
        %v1856 = vld [vmem:[%s1761 + $0x68] sm:$0x1]
        %v1857 = vld [vmem:[%s1761 + $0x69] sm:$0x1]
        %v1858 = vld [vmem:[%s1761 + $0x6c] sm:$0x1]
        %v1859 = vld [vmem:[%s1761 + $0x6d] sm:$0x1]
        %v1860 = vld [vmem:[%s1761 + $0x6e] sm:$0x1]
        %v1861 = vld [vmem:[%s1761 + $0x6f] sm:$0x1]
        %v1862 = vld [vmem:[%s1761 + $0x70] sm:$0x1]
        %v1863 = vld [vmem:[%s1761 + $0x71] sm:$0x1]
        %v1864 = vld [vmem:[%s1761 + $0x72] sm:$0x1]
        %v1865 = vld [vmem:[%s1761 + $0x73] sm:$0x1]
        %v1866 = vld [vmem:[%s1761 + $0x74] sm:$0x1]
        %v1867 = vld [vmem:[%s1761 + $0x75] sm:$0x1]
        %v1868 = vld [vmem:[%s1761 + $0x76] sm:$0x1]
        %v1869 = vld [vmem:[%s1761 + $0x77] sm:$0x1]
        %v1870 = vld [vmem:[%s1761 + $0x78] sm:$0x1]
        %v1871 = vld [vmem:[%s1761 + $0x79] sm:$0x1]
        %v1872 = vld [vmem:[%s1761 + $0x7a] sm:$0x1]
        %v1873 = vld [vmem:[%s1761 + $0x7b] sm:$0x1]
        %v1874 = vld [vmem:[%s1761 + $0x7e] sm:$0x1]
        %v1875 = vld [vmem:[%s1761 + $0x7f] sm:$0x1]
        %v1876 = vld [vmem:[%s1761 + $0x80] sm:$0x1]
        %v1877 = vld [vmem:[%s1761 + $0x81] sm:$0x1]
        %v1878 = vld [vmem:[%s1761 + $0x82] sm:$0x1]
        %v1879 = vld [vmem:[%s1761 + $0x83] sm:$0x1]
        %v1880 = vld [vmem:[%s1761 + $0x84] sm:$0x1]
        %v1881 = vld [vmem:[%s1761 + $0x85] sm:$0x1]
        %v1882 = vld [vmem:[%s1761 + $0x86] sm:$0x1]
        %v1883 = vld [vmem:[%s1761 + $0x87] sm:$0x1]
        %v1884 = vld [vmem:[%s1761 + $0x88] sm:$0x1]
        %v1885 = vld [vmem:[%s1761 + $0x89] sm:$0x1]
        %v1886 = vld [vmem:[%s1761 + $0x8a] sm:$0x1]
        %v1887 = vld [vmem:[%s1761 + $0x8b] sm:$0x1]
        %v1888 = vld [vmem:[%s1761 + $0x8c] sm:$0x1]
        %v1889 = vld [vmem:[%s1761 + $0x8d] sm:$0x1]
        %v1890 = vstv %s204
        %v1891 = vmul.f32 %v1890, %v1762
        %v1892 = vmul.f32 %v1890, %v1763
        %v1893 = vmul.f32 %v1890, %v1764
        %v1894 = vmul.f32 %v1890, %v1765
        %v1895 = vmul.f32 %v1890, %v1766
        %v1896 = vmul.f32 %v1890, %v1767
        %v1897 = vmul.f32 %v1890, %v1768
        %v1898 = vmul.f32 %v1890, %v1769
        %v1899 = vmul.f32 %v1890, %v1770
        %v1900 = vmul.f32 %v1890, %v1771
        %v1901 = vmul.f32 %v1890, %v1772
        %v1902 = vmul.f32 %v1890, %v1773
        %v1903 = vmul.f32 %v1890, %v1774
        %v1904 = vmul.f32 %v1890, %v1775
        %v1905 = vmul.f32 %v1890, %v1776
        %v1906 = vmul.f32 %v1890, %v1777
        %v1907 = vmul.f32 %v1890, %v1778
        %v1908 = vmul.f32 %v1890, %v1779
        %v1909 = vmul.f32 %v1890, %v1780
        %v1910 = vmul.f32 %v1890, %v1781
        %v1911 = vmul.f32 %v1890, %v1782
        %v1912 = vmul.f32 %v1890, %v1783
        %v1913 = vmul.f32 %v1890, %v1784
        %v1914 = vmul.f32 %v1890, %v1785
        %v1915 = vmul.f32 %v1890, %v1786
        %v1916 = vmul.f32 %v1890, %v1787
        %v1917 = vmul.f32 %v1890, %v1788
        %v1918 = vmul.f32 %v1890, %v1789
        %v1919 = vmul.f32 %v1890, %v1790
        %v1920 = vmul.f32 %v1890, %v1791
        %v1921 = vmul.f32 %v1890, %v1792
        %v1922 = vmul.f32 %v1890, %v1793
        %v1923 = vmul.f32 %v1890, %v1794
        %v1924 = vmul.f32 %v1890, %v1795
        %v1925 = vmul.f32 %v1890, %v1796
        %v1926 = vmul.f32 %v1890, %v1797
        %v1927 = vmul.f32 %v1890, %v1798
        %v1928 = vmul.f32 %v1890, %v1799
        %v1929 = vmul.f32 %v1890, %v1800
        %v1930 = vmul.f32 %v1890, %v1801
        %v1931 = vmul.f32 %v1890, %v1802
        %v1932 = vmul.f32 %v1890, %v1803
        %v1933 = vmul.f32 %v1890, %v1804
        %v1934 = vmul.f32 %v1890, %v1805
        %v1935 = vmul.f32 %v1890, %v1806
        %v1936 = vmul.f32 %v1890, %v1807
        %v1937 = vmul.f32 %v1890, %v1808
        %v1938 = vmul.f32 %v1890, %v1809
        %v1939 = vmul.f32 %v1890, %v1810
        %v1940 = vmul.f32 %v1890, %v1811
        %v1941 = vmul.f32 %v1890, %v1812
        %v1942 = vmul.f32 %v1890, %v1813
        %v1943 = vmul.f32 %v1890, %v1814
        %v1944 = vmul.f32 %v1890, %v1815
        %v1945 = vmul.f32 %v1890, %v1816
        %v1946 = vmul.f32 %v1890, %v1817
        %v1947 = vmul.f32 %v1890, %v1818
        %v1948 = vmul.f32 %v1890, %v1819
        %v1949 = vmul.f32 %v1890, %v1820
        %v1950 = vmul.f32 %v1890, %v1821
        %v1951 = vmul.f32 %v1890, %v1822
        %v1952 = vmul.f32 %v1890, %v1823
        %v1953 = vmul.f32 %v1890, %v1824
        %v1954 = vmul.f32 %v1890, %v1825
        %v1955 = vmul.f32 %v1890, %v1826
        %v1956 = vmul.f32 %v1890, %v1827
        %v1957 = vmul.f32 %v1890, %v1828
        %v1958 = vmul.f32 %v1890, %v1829
        %v1959 = vmul.f32 %v1890, %v1830
        %v1960 = vmul.f32 %v1890, %v1831
        %v1961 = vmul.f32 %v1890, %v1832
        %v1962 = vmul.f32 %v1890, %v1833
        %v1963 = vmul.f32 %v1890, %v1834
        %v1964 = vmul.f32 %v1890, %v1835
        %v1965 = vmul.f32 %v1890, %v1836
        %v1966 = vmul.f32 %v1890, %v1837
        %v1967 = vmul.f32 %v1890, %v1838
        %v1968 = vmul.f32 %v1890, %v1839
        %v1969 = vmul.f32 %v1890, %v1840
        %v1970 = vmul.f32 %v1890, %v1841
        %v1971 = vmul.f32 %v1890, %v1842
        %v1972 = vmul.f32 %v1890, %v1843
        %v1973 = vmul.f32 %v1890, %v1844
        %v1974 = vmul.f32 %v1890, %v1845
        %v1975 = vmul.f32 %v1890, %v1846
        %v1976 = vmul.f32 %v1890, %v1847
        %v1977 = vmul.f32 %v1890, %v1848
        %v1978 = vmul.f32 %v1890, %v1849
        %v1979 = vmul.f32 %v1890, %v1850
        %v1980 = vmul.f32 %v1890, %v1851
        %v1981 = vmul.f32 %v1890, %v1852
        %v1982 = vmul.f32 %v1890, %v1853
        %v1983 = vmul.f32 %v1890, %v1854
        %v1984 = vmul.f32 %v1890, %v1855
        %v1985 = vmul.f32 %v1890, %v1856
        %v1986 = vmul.f32 %v1890, %v1857
        %v1987 = vmul.f32 %v1890, %v1858
        %v1988 = vmul.f32 %v1890, %v1859
        %v1989 = vmul.f32 %v1890, %v1860
        %v1990 = vmul.f32 %v1890, %v1861
        %v1991 = vmul.f32 %v1890, %v1862
        %v1992 = vmul.f32 %v1890, %v1863
        %v1993 = vmul.f32 %v1890, %v1864
        %v1994 = vmul.f32 %v1890, %v1865
        %v1995 = vmul.f32 %v1890, %v1866
        %v1996 = vmul.f32 %v1890, %v1867
        %v1997 = vmul.f32 %v1890, %v1868
        %v1998 = vmul.f32 %v1890, %v1869
        %v1999 = vmul.f32 %v1890, %v1870
        %v2000 = vmul.f32 %v1890, %v1871
        %v2001 = vmul.f32 %v1890, %v1872
        %v2002 = vmul.f32 %v1890, %v1873
        %v2003 = vmul.f32 %v1890, %v1874
        %v2004 = vmul.f32 %v1890, %v1875
        %v2005 = vmul.f32 %v1890, %v1876
        %v2006 = vmul.f32 %v1890, %v1877
        %v2007 = vmul.f32 %v1890, %v1878
        %v2008 = vmul.f32 %v1890, %v1879
        %v2009 = vmul.f32 %v1890, %v1880
        %v2010 = vmul.f32 %v1890, %v1881
        %v2011 = vmul.f32 %v1890, %v1882
        %v2012 = vmul.f32 %v1890, %v1883
        %v2013 = vmul.f32 %v1890, %v1884
        %v2014 = vmul.f32 %v1890, %v1885
        %v2015 = vmul.f32 %v1890, %v1886
        %v2016 = vmul.f32 %v1890, %v1887
        %v2017 = vmul.f32 %v1890, %v1888
        %v2018 = vmul.f32 %v1890, %v1889
        %v2019 = vadd.f32 %v1632, %v1891
        %v2020 = vadd.f32 %v1633, %v1892
        %v2021 = vadd.f32 %v1634, %v1893
        %v2022 = vadd.f32 %v1635, %v1894
        %v2023 = vadd.f32 %v1636, %v1895
        %v2024 = vadd.f32 %v1637, %v1896
        %v2025 = vadd.f32 %v1638, %v1897
        %v2026 = vadd.f32 %v1639, %v1898
        %v2027 = vadd.f32 %v1640, %v1899
        %v2028 = vadd.f32 %v1641, %v1900
        %v2029 = vadd.f32 %v1642, %v1901
        %v2030 = vadd.f32 %v1643, %v1902
        %v2031 = vadd.f32 %v1644, %v1903
        %v2032 = vadd.f32 %v1645, %v1904
        %v2033 = vadd.f32 %v1646, %v1905
        %v2034 = vadd.f32 %v1647, %v1906
        %v2035 = vadd.f32 %v1648, %v1907
        %v2036 = vadd.f32 %v1649, %v1908
        %v2037 = vadd.f32 %v1650, %v1909
        %v2038 = vadd.f32 %v1651, %v1910
        %v2039 = vadd.f32 %v1652, %v1911
        %v2040 = vadd.f32 %v1653, %v1912
        %v2041 = vadd.f32 %v1654, %v1913
        %v2042 = vadd.f32 %v1655, %v1914
        %v2043 = vadd.f32 %v1656, %v1915
        %v2044 = vadd.f32 %v1657, %v1916
        %v2045 = vadd.f32 %v1658, %v1917
        %v2046 = vadd.f32 %v1659, %v1918
        %v2047 = vadd.f32 %v1660, %v1919
        %v2048 = vadd.f32 %v1661, %v1920
        %v2049 = vadd.f32 %v1662, %v1921
        %v2050 = vadd.f32 %v1663, %v1922
        %v2051 = vadd.f32 %v1664, %v1923
        %v2052 = vadd.f32 %v1665, %v1924
        %v2053 = vadd.f32 %v1666, %v1925
        %v2054 = vadd.f32 %v1667, %v1926
        %v2055 = vadd.f32 %v1668, %v1927
        %v2056 = vadd.f32 %v1669, %v1928
        %v2057 = vadd.f32 %v1670, %v1929
        %v2058 = vadd.f32 %v1671, %v1930
        %v2059 = vadd.f32 %v1672, %v1931
        %v2060 = vadd.f32 %v1673, %v1932
        %v2061 = vadd.f32 %v1674, %v1933
        %v2062 = vadd.f32 %v1675, %v1934
        %v2063 = vadd.f32 %v1676, %v1935
        %v2064 = vadd.f32 %v1677, %v1936
        %v2065 = vadd.f32 %v1678, %v1937
        %v2066 = vadd.f32 %v1679, %v1938
        %v2067 = vadd.f32 %v1680, %v1939
        %v2068 = vadd.f32 %v1681, %v1940
        %v2069 = vadd.f32 %v1682, %v1941
        %v2070 = vadd.f32 %v1683, %v1942
        %v2071 = vadd.f32 %v1684, %v1943
        %v2072 = vadd.f32 %v1685, %v1944
        %v2073 = vadd.f32 %v1686, %v1945
        %v2074 = vadd.f32 %v1687, %v1946
        %v2075 = vadd.f32 %v1688, %v1947
        %v2076 = vadd.f32 %v1689, %v1948
        %v2077 = vadd.f32 %v1690, %v1949
        %v2078 = vadd.f32 %v1691, %v1950
        %v2079 = vadd.f32 %v1692, %v1951
        %v2080 = vadd.f32 %v1693, %v1952
        %v2081 = vadd.f32 %v1694, %v1953
        %v2082 = vadd.f32 %v1695, %v1954
        %v2083 = vadd.f32 %v1696, %v1955
        %v2084 = vadd.f32 %v1697, %v1956
        %v2085 = vadd.f32 %v1698, %v1957
        %v2086 = vadd.f32 %v1699, %v1958
        %v2087 = vadd.f32 %v1700, %v1959
        %v2088 = vadd.f32 %v1701, %v1960
        %v2089 = vadd.f32 %v1702, %v1961
        %v2090 = vadd.f32 %v1703, %v1962
        %v2091 = vadd.f32 %v1704, %v1963
        %v2092 = vadd.f32 %v1705, %v1964
        %v2093 = vadd.f32 %v1706, %v1965
        %v2094 = vadd.f32 %v1707, %v1966
        %v2095 = vadd.f32 %v1708, %v1967
        %v2096 = vadd.f32 %v1709, %v1968
        %v2097 = vadd.f32 %v1710, %v1969
        %v2098 = vadd.f32 %v1711, %v1970
        %v2099 = vadd.f32 %v1712, %v1971
        %v2100 = vadd.f32 %v1713, %v1972
        %v2101 = vadd.f32 %v1714, %v1973
        %v2102 = vadd.f32 %v1715, %v1974
        %v2103 = vadd.f32 %v1716, %v1975
        %v2104 = vadd.f32 %v1717, %v1976
        %v2105 = vadd.f32 %v1718, %v1977
        %v2106 = vadd.f32 %v1719, %v1978
        %v2107 = vadd.f32 %v1720, %v1979
        %v2108 = vadd.f32 %v1721, %v1980
        %v2109 = vadd.f32 %v1722, %v1981
        %v2110 = vadd.f32 %v1723, %v1982
        %v2111 = vadd.f32 %v1724, %v1983
        %v2112 = vadd.f32 %v1725, %v1984
        %v2113 = vadd.f32 %v1726, %v1985
        %v2114 = vadd.f32 %v1727, %v1986
        %v2115 = vadd.f32 %v1728, %v1987
        %v2116 = vadd.f32 %v1729, %v1988
        %v2117 = vadd.f32 %v1730, %v1989
        %v2118 = vadd.f32 %v1731, %v1990
        %v2119 = vadd.f32 %v1732, %v1991
        %v2120 = vadd.f32 %v1733, %v1992
        %v2121 = vadd.f32 %v1734, %v1993
        %v2122 = vadd.f32 %v1735, %v1994
        %v2123 = vadd.f32 %v1736, %v1995
        %v2124 = vadd.f32 %v1737, %v1996
        %v2125 = vadd.f32 %v1738, %v1997
        %v2126 = vadd.f32 %v1739, %v1998
        %v2127 = vadd.f32 %v1740, %v1999
        %v2128 = vadd.f32 %v1741, %v2000
        %v2129 = vadd.f32 %v1742, %v2001
        %v2130 = vadd.f32 %v1743, %v2002
        %v2131 = vadd.f32 %v1744, %v2003
        %v2132 = vadd.f32 %v1745, %v2004
        %v2133 = vadd.f32 %v1746, %v2005
        %v2134 = vadd.f32 %v1747, %v2006
        %v2135 = vadd.f32 %v1748, %v2007
        %v2136 = vadd.f32 %v1749, %v2008
        %v2137 = vadd.f32 %v1750, %v2009
        %v2138 = vadd.f32 %v1751, %v2010
        %v2139 = vadd.f32 %v1752, %v2011
        %v2140 = vadd.f32 %v1753, %v2012
        %v2141 = vadd.f32 %v1754, %v2013
        %v2142 = vadd.f32 %v1755, %v2014
        %v2143 = vadd.f32 %v1756, %v2015
        %v2144 = vadd.f32 %v1757, %v2016
        %v2145 = vadd.f32 %v1758, %v2017
        %v2146 = vadd.f32 %v1759, %v2018
        %s2147 = sadd.s32 2, %s1373
        %s2148 = scalar_lea.vmem [#allocation7], %s2147
        %v2149 = vld [vmem:[%s2148] sm:$0x1]
        %v2150 = vld [vmem:[%s2148 + $0x1] sm:$0x1]
        %v2151 = vld [vmem:[%s2148 + $0x2] sm:$0x1]
        %v2152 = vld [vmem:[%s2148 + $0x3] sm:$0x1]
        %v2153 = vld [vmem:[%s2148 + $0x4] sm:$0x1]
        %v2154 = vld [vmem:[%s2148 + $0x5] sm:$0x1]
        %v2155 = vld [vmem:[%s2148 + $0x6] sm:$0x1]
        %v2156 = vld [vmem:[%s2148 + $0x7] sm:$0x1]
        %v2157 = vld [vmem:[%s2148 + $0x8] sm:$0x1]
        %v2158 = vld [vmem:[%s2148 + $0x9] sm:$0x1]
        %v2159 = vld [vmem:[%s2148 + $0xa] sm:$0x1]
        %v2160 = vld [vmem:[%s2148 + $0xb] sm:$0x1]
        %v2161 = vld [vmem:[%s2148 + $0xc] sm:$0x1]
        %v2162 = vld [vmem:[%s2148 + $0xd] sm:$0x1]
        %v2163 = vld [vmem:[%s2148 + $0xe] sm:$0x1]
        %v2164 = vld [vmem:[%s2148 + $0xf] sm:$0x1]
        %v2165 = vld [vmem:[%s2148 + $0x12] sm:$0x1]
        %v2166 = vld [vmem:[%s2148 + $0x13] sm:$0x1]
        %v2167 = vld [vmem:[%s2148 + $0x14] sm:$0x1]
        %v2168 = vld [vmem:[%s2148 + $0x15] sm:$0x1]
        %v2169 = vld [vmem:[%s2148 + $0x16] sm:$0x1]
        %v2170 = vld [vmem:[%s2148 + $0x17] sm:$0x1]
        %v2171 = vld [vmem:[%s2148 + $0x18] sm:$0x1]
        %v2172 = vld [vmem:[%s2148 + $0x19] sm:$0x1]
        %v2173 = vld [vmem:[%s2148 + $0x1a] sm:$0x1]
        %v2174 = vld [vmem:[%s2148 + $0x1b] sm:$0x1]
        %v2175 = vld [vmem:[%s2148 + $0x1c] sm:$0x1]
        %v2176 = vld [vmem:[%s2148 + $0x1d] sm:$0x1]
        %v2177 = vld [vmem:[%s2148 + $0x1e] sm:$0x1]
        %v2178 = vld [vmem:[%s2148 + $0x1f] sm:$0x1]
        %v2179 = vld [vmem:[%s2148 + $0x20] sm:$0x1]
        %v2180 = vld [vmem:[%s2148 + $0x21] sm:$0x1]
        %v2181 = vld [vmem:[%s2148 + $0x24] sm:$0x1]
        %v2182 = vld [vmem:[%s2148 + $0x25] sm:$0x1]
        %v2183 = vld [vmem:[%s2148 + $0x26] sm:$0x1]
        %v2184 = vld [vmem:[%s2148 + $0x27] sm:$0x1]
        %v2185 = vld [vmem:[%s2148 + $0x28] sm:$0x1]
        %v2186 = vld [vmem:[%s2148 + $0x29] sm:$0x1]
        %v2187 = vld [vmem:[%s2148 + $0x2a] sm:$0x1]
        %v2188 = vld [vmem:[%s2148 + $0x2b] sm:$0x1]
        %v2189 = vld [vmem:[%s2148 + $0x2c] sm:$0x1]
        %v2190 = vld [vmem:[%s2148 + $0x2d] sm:$0x1]
        %v2191 = vld [vmem:[%s2148 + $0x2e] sm:$0x1]
        %v2192 = vld [vmem:[%s2148 + $0x2f] sm:$0x1]
        %v2193 = vld [vmem:[%s2148 + $0x30] sm:$0x1]
        %v2194 = vld [vmem:[%s2148 + $0x31] sm:$0x1]
        %v2195 = vld [vmem:[%s2148 + $0x32] sm:$0x1]
        %v2196 = vld [vmem:[%s2148 + $0x33] sm:$0x1]
        %v2197 = vld [vmem:[%s2148 + $0x36] sm:$0x1]
        %v2198 = vld [vmem:[%s2148 + $0x37] sm:$0x1]
        %v2199 = vld [vmem:[%s2148 + $0x38] sm:$0x1]
        %v2200 = vld [vmem:[%s2148 + $0x39] sm:$0x1]
        %v2201 = vld [vmem:[%s2148 + $0x3a] sm:$0x1]
        %v2202 = vld [vmem:[%s2148 + $0x3b] sm:$0x1]
        %v2203 = vld [vmem:[%s2148 + $0x3c] sm:$0x1]
        %v2204 = vld [vmem:[%s2148 + $0x3d] sm:$0x1]
        %v2205 = vld [vmem:[%s2148 + $0x3e] sm:$0x1]
        %v2206 = vld [vmem:[%s2148 + $0x3f] sm:$0x1]
        %v2207 = vld [vmem:[%s2148 + $0x40] sm:$0x1]
        %v2208 = vld [vmem:[%s2148 + $0x41] sm:$0x1]
        %v2209 = vld [vmem:[%s2148 + $0x42] sm:$0x1]
        %v2210 = vld [vmem:[%s2148 + $0x43] sm:$0x1]
        %v2211 = vld [vmem:[%s2148 + $0x44] sm:$0x1]
        %v2212 = vld [vmem:[%s2148 + $0x45] sm:$0x1]
        %v2213 = vld [vmem:[%s2148 + $0x48] sm:$0x1]
        %v2214 = vld [vmem:[%s2148 + $0x49] sm:$0x1]
        %v2215 = vld [vmem:[%s2148 + $0x4a] sm:$0x1]
        %v2216 = vld [vmem:[%s2148 + $0x4b] sm:$0x1]
        %v2217 = vld [vmem:[%s2148 + $0x4c] sm:$0x1]
        %v2218 = vld [vmem:[%s2148 + $0x4d] sm:$0x1]
        %v2219 = vld [vmem:[%s2148 + $0x4e] sm:$0x1]
        %v2220 = vld [vmem:[%s2148 + $0x4f] sm:$0x1]
        %v2221 = vld [vmem:[%s2148 + $0x50] sm:$0x1]
        %v2222 = vld [vmem:[%s2148 + $0x51] sm:$0x1]
        %v2223 = vld [vmem:[%s2148 + $0x52] sm:$0x1]
        %v2224 = vld [vmem:[%s2148 + $0x53] sm:$0x1]
        %v2225 = vld [vmem:[%s2148 + $0x54] sm:$0x1]
        %v2226 = vld [vmem:[%s2148 + $0x55] sm:$0x1]
        %v2227 = vld [vmem:[%s2148 + $0x56] sm:$0x1]
        %v2228 = vld [vmem:[%s2148 + $0x57] sm:$0x1]
        %v2229 = vld [vmem:[%s2148 + $0x5a] sm:$0x1]
        %v2230 = vld [vmem:[%s2148 + $0x5b] sm:$0x1]
        %v2231 = vld [vmem:[%s2148 + $0x5c] sm:$0x1]
        %v2232 = vld [vmem:[%s2148 + $0x5d] sm:$0x1]
        %v2233 = vld [vmem:[%s2148 + $0x5e] sm:$0x1]
        %v2234 = vld [vmem:[%s2148 + $0x5f] sm:$0x1]
        %v2235 = vld [vmem:[%s2148 + $0x60] sm:$0x1]
        %v2236 = vld [vmem:[%s2148 + $0x61] sm:$0x1]
        %v2237 = vld [vmem:[%s2148 + $0x62] sm:$0x1]
        %v2238 = vld [vmem:[%s2148 + $0x63] sm:$0x1]
        %v2239 = vld [vmem:[%s2148 + $0x64] sm:$0x1]
        %v2240 = vld [vmem:[%s2148 + $0x65] sm:$0x1]
        %v2241 = vld [vmem:[%s2148 + $0x66] sm:$0x1]
        %v2242 = vld [vmem:[%s2148 + $0x67] sm:$0x1]
        %v2243 = vld [vmem:[%s2148 + $0x68] sm:$0x1]
        %v2244 = vld [vmem:[%s2148 + $0x69] sm:$0x1]
        %v2245 = vld [vmem:[%s2148 + $0x6c] sm:$0x1]
        %v2246 = vld [vmem:[%s2148 + $0x6d] sm:$0x1]
        %v2247 = vld [vmem:[%s2148 + $0x6e] sm:$0x1]
        %v2248 = vld [vmem:[%s2148 + $0x6f] sm:$0x1]
        %v2249 = vld [vmem:[%s2148 + $0x70] sm:$0x1]
        %v2250 = vld [vmem:[%s2148 + $0x71] sm:$0x1]
        %v2251 = vld [vmem:[%s2148 + $0x72] sm:$0x1]
        %v2252 = vld [vmem:[%s2148 + $0x73] sm:$0x1]
        %v2253 = vld [vmem:[%s2148 + $0x74] sm:$0x1]
        %v2254 = vld [vmem:[%s2148 + $0x75] sm:$0x1]
        %v2255 = vld [vmem:[%s2148 + $0x76] sm:$0x1]
        %v2256 = vld [vmem:[%s2148 + $0x77] sm:$0x1]
        %v2257 = vld [vmem:[%s2148 + $0x78] sm:$0x1]
        %v2258 = vld [vmem:[%s2148 + $0x79] sm:$0x1]
        %v2259 = vld [vmem:[%s2148 + $0x7a] sm:$0x1]
        %v2260 = vld [vmem:[%s2148 + $0x7b] sm:$0x1]
        %v2261 = vld [vmem:[%s2148 + $0x7e] sm:$0x1]
        %v2262 = vld [vmem:[%s2148 + $0x7f] sm:$0x1]
        %v2263 = vld [vmem:[%s2148 + $0x80] sm:$0x1]
        %v2264 = vld [vmem:[%s2148 + $0x81] sm:$0x1]
        %v2265 = vld [vmem:[%s2148 + $0x82] sm:$0x1]
        %v2266 = vld [vmem:[%s2148 + $0x83] sm:$0x1]
        %v2267 = vld [vmem:[%s2148 + $0x84] sm:$0x1]
        %v2268 = vld [vmem:[%s2148 + $0x85] sm:$0x1]
        %v2269 = vld [vmem:[%s2148 + $0x86] sm:$0x1]
        %v2270 = vld [vmem:[%s2148 + $0x87] sm:$0x1]
        %v2271 = vld [vmem:[%s2148 + $0x88] sm:$0x1]
        %v2272 = vld [vmem:[%s2148 + $0x89] sm:$0x1]
        %v2273 = vld [vmem:[%s2148 + $0x8a] sm:$0x1]
        %v2274 = vld [vmem:[%s2148 + $0x8b] sm:$0x1]
        %v2275 = vld [vmem:[%s2148 + $0x8c] sm:$0x1]
        %v2276 = vld [vmem:[%s2148 + $0x8d] sm:$0x1]
        %v2277 = vstv %s205
        %v2278 = vmul.f32 %v2277, %v2149
        %v2279 = vmul.f32 %v2277, %v2150
        %v2280 = vmul.f32 %v2277, %v2151
        %v2281 = vmul.f32 %v2277, %v2152
        %v2282 = vmul.f32 %v2277, %v2153
        %v2283 = vmul.f32 %v2277, %v2154
        %v2284 = vmul.f32 %v2277, %v2155
        %v2285 = vmul.f32 %v2277, %v2156
        %v2286 = vmul.f32 %v2277, %v2157
        %v2287 = vmul.f32 %v2277, %v2158
        %v2288 = vmul.f32 %v2277, %v2159
        %v2289 = vmul.f32 %v2277, %v2160
        %v2290 = vmul.f32 %v2277, %v2161
        %v2291 = vmul.f32 %v2277, %v2162
        %v2292 = vmul.f32 %v2277, %v2163
        %v2293 = vmul.f32 %v2277, %v2164
        %v2294 = vmul.f32 %v2277, %v2165
        %v2295 = vmul.f32 %v2277, %v2166
        %v2296 = vmul.f32 %v2277, %v2167
        %v2297 = vmul.f32 %v2277, %v2168
        %v2298 = vmul.f32 %v2277, %v2169
        %v2299 = vmul.f32 %v2277, %v2170
        %v2300 = vmul.f32 %v2277, %v2171
        %v2301 = vmul.f32 %v2277, %v2172
        %v2302 = vmul.f32 %v2277, %v2173
        %v2303 = vmul.f32 %v2277, %v2174
        %v2304 = vmul.f32 %v2277, %v2175
        %v2305 = vmul.f32 %v2277, %v2176
        %v2306 = vmul.f32 %v2277, %v2177
        %v2307 = vmul.f32 %v2277, %v2178
        %v2308 = vmul.f32 %v2277, %v2179
        %v2309 = vmul.f32 %v2277, %v2180
        %v2310 = vmul.f32 %v2277, %v2181
        %v2311 = vmul.f32 %v2277, %v2182
        %v2312 = vmul.f32 %v2277, %v2183
        %v2313 = vmul.f32 %v2277, %v2184
        %v2314 = vmul.f32 %v2277, %v2185
        %v2315 = vmul.f32 %v2277, %v2186
        %v2316 = vmul.f32 %v2277, %v2187
        %v2317 = vmul.f32 %v2277, %v2188
        %v2318 = vmul.f32 %v2277, %v2189
        %v2319 = vmul.f32 %v2277, %v2190
        %v2320 = vmul.f32 %v2277, %v2191
        %v2321 = vmul.f32 %v2277, %v2192
        %v2322 = vmul.f32 %v2277, %v2193
        %v2323 = vmul.f32 %v2277, %v2194
        %v2324 = vmul.f32 %v2277, %v2195
        %v2325 = vmul.f32 %v2277, %v2196
        %v2326 = vmul.f32 %v2277, %v2197
        %v2327 = vmul.f32 %v2277, %v2198
        %v2328 = vmul.f32 %v2277, %v2199
        %v2329 = vmul.f32 %v2277, %v2200
        %v2330 = vmul.f32 %v2277, %v2201
        %v2331 = vmul.f32 %v2277, %v2202
        %v2332 = vmul.f32 %v2277, %v2203
        %v2333 = vmul.f32 %v2277, %v2204
        %v2334 = vmul.f32 %v2277, %v2205
        %v2335 = vmul.f32 %v2277, %v2206
        %v2336 = vmul.f32 %v2277, %v2207
        %v2337 = vmul.f32 %v2277, %v2208
        %v2338 = vmul.f32 %v2277, %v2209
        %v2339 = vmul.f32 %v2277, %v2210
        %v2340 = vmul.f32 %v2277, %v2211
        %v2341 = vmul.f32 %v2277, %v2212
        %v2342 = vmul.f32 %v2277, %v2213
        %v2343 = vmul.f32 %v2277, %v2214
        %v2344 = vmul.f32 %v2277, %v2215
        %v2345 = vmul.f32 %v2277, %v2216
        %v2346 = vmul.f32 %v2277, %v2217
        %v2347 = vmul.f32 %v2277, %v2218
        %v2348 = vmul.f32 %v2277, %v2219
        %v2349 = vmul.f32 %v2277, %v2220
        %v2350 = vmul.f32 %v2277, %v2221
        %v2351 = vmul.f32 %v2277, %v2222
        %v2352 = vmul.f32 %v2277, %v2223
        %v2353 = vmul.f32 %v2277, %v2224
        %v2354 = vmul.f32 %v2277, %v2225
        %v2355 = vmul.f32 %v2277, %v2226
        %v2356 = vmul.f32 %v2277, %v2227
        %v2357 = vmul.f32 %v2277, %v2228
        %v2358 = vmul.f32 %v2277, %v2229
        %v2359 = vmul.f32 %v2277, %v2230
        %v2360 = vmul.f32 %v2277, %v2231
        %v2361 = vmul.f32 %v2277, %v2232
        %v2362 = vmul.f32 %v2277, %v2233
        %v2363 = vmul.f32 %v2277, %v2234
        %v2364 = vmul.f32 %v2277, %v2235
        %v2365 = vmul.f32 %v2277, %v2236
        %v2366 = vmul.f32 %v2277, %v2237
        %v2367 = vmul.f32 %v2277, %v2238
        %v2368 = vmul.f32 %v2277, %v2239
        %v2369 = vmul.f32 %v2277, %v2240
        %v2370 = vmul.f32 %v2277, %v2241
        %v2371 = vmul.f32 %v2277, %v2242
        %v2372 = vmul.f32 %v2277, %v2243
        %v2373 = vmul.f32 %v2277, %v2244
        %v2374 = vmul.f32 %v2277, %v2245
        %v2375 = vmul.f32 %v2277, %v2246
        %v2376 = vmul.f32 %v2277, %v2247
        %v2377 = vmul.f32 %v2277, %v2248
        %v2378 = vmul.f32 %v2277, %v2249
        %v2379 = vmul.f32 %v2277, %v2250
        %v2380 = vmul.f32 %v2277, %v2251
        %v2381 = vmul.f32 %v2277, %v2252
        %v2382 = vmul.f32 %v2277, %v2253
        %v2383 = vmul.f32 %v2277, %v2254
        %v2384 = vmul.f32 %v2277, %v2255
        %v2385 = vmul.f32 %v2277, %v2256
        %v2386 = vmul.f32 %v2277, %v2257
        %v2387 = vmul.f32 %v2277, %v2258
        %v2388 = vmul.f32 %v2277, %v2259
        %v2389 = vmul.f32 %v2277, %v2260
        %v2390 = vmul.f32 %v2277, %v2261
        %v2391 = vmul.f32 %v2277, %v2262
        %v2392 = vmul.f32 %v2277, %v2263
        %v2393 = vmul.f32 %v2277, %v2264
        %v2394 = vmul.f32 %v2277, %v2265
        %v2395 = vmul.f32 %v2277, %v2266
        %v2396 = vmul.f32 %v2277, %v2267
        %v2397 = vmul.f32 %v2277, %v2268
        %v2398 = vmul.f32 %v2277, %v2269
        %v2399 = vmul.f32 %v2277, %v2270
        %v2400 = vmul.f32 %v2277, %v2271
        %v2401 = vmul.f32 %v2277, %v2272
        %v2402 = vmul.f32 %v2277, %v2273
        %v2403 = vmul.f32 %v2277, %v2274
        %v2404 = vmul.f32 %v2277, %v2275
        %v2405 = vmul.f32 %v2277, %v2276
        %v2406 = vadd.f32 %v2019, %v2278
        %v2407 = vadd.f32 %v2020, %v2279
        %v2408 = vadd.f32 %v2021, %v2280
        %v2409 = vadd.f32 %v2022, %v2281
        %v2410 = vadd.f32 %v2023, %v2282
        %v2411 = vadd.f32 %v2024, %v2283
        %v2412 = vadd.f32 %v2025, %v2284
        %v2413 = vadd.f32 %v2026, %v2285
        %v2414 = vadd.f32 %v2027, %v2286
        %v2415 = vadd.f32 %v2028, %v2287
        %v2416 = vadd.f32 %v2029, %v2288
        %v2417 = vadd.f32 %v2030, %v2289
        %v2418 = vadd.f32 %v2031, %v2290
        %v2419 = vadd.f32 %v2032, %v2291
        %v2420 = vadd.f32 %v2033, %v2292
        %v2421 = vadd.f32 %v2034, %v2293
        %v2422 = vadd.f32 %v2035, %v2294
        %v2423 = vadd.f32 %v2036, %v2295
        %v2424 = vadd.f32 %v2037, %v2296
        %v2425 = vadd.f32 %v2038, %v2297
        %v2426 = vadd.f32 %v2039, %v2298
        %v2427 = vadd.f32 %v2040, %v2299
        %v2428 = vadd.f32 %v2041, %v2300
        %v2429 = vadd.f32 %v2042, %v2301
        %v2430 = vadd.f32 %v2043, %v2302
        %v2431 = vadd.f32 %v2044, %v2303
        %v2432 = vadd.f32 %v2045, %v2304
        %v2433 = vadd.f32 %v2046, %v2305
        %v2434 = vadd.f32 %v2047, %v2306
        %v2435 = vadd.f32 %v2048, %v2307
        %v2436 = vadd.f32 %v2049, %v2308
        %v2437 = vadd.f32 %v2050, %v2309
        %v2438 = vadd.f32 %v2051, %v2310
        %v2439 = vadd.f32 %v2052, %v2311
        %v2440 = vadd.f32 %v2053, %v2312
        %v2441 = vadd.f32 %v2054, %v2313
        %v2442 = vadd.f32 %v2055, %v2314
        %v2443 = vadd.f32 %v2056, %v2315
        %v2444 = vadd.f32 %v2057, %v2316
        %v2445 = vadd.f32 %v2058, %v2317
        %v2446 = vadd.f32 %v2059, %v2318
        %v2447 = vadd.f32 %v2060, %v2319
        %v2448 = vadd.f32 %v2061, %v2320
        %v2449 = vadd.f32 %v2062, %v2321
        %v2450 = vadd.f32 %v2063, %v2322
        %v2451 = vadd.f32 %v2064, %v2323
        %v2452 = vadd.f32 %v2065, %v2324
        %v2453 = vadd.f32 %v2066, %v2325
        %v2454 = vadd.f32 %v2067, %v2326
        %v2455 = vadd.f32 %v2068, %v2327
        %v2456 = vadd.f32 %v2069, %v2328
        %v2457 = vadd.f32 %v2070, %v2329
        %v2458 = vadd.f32 %v2071, %v2330
        %v2459 = vadd.f32 %v2072, %v2331
        %v2460 = vadd.f32 %v2073, %v2332
        %v2461 = vadd.f32 %v2074, %v2333
        %v2462 = vadd.f32 %v2075, %v2334
        %v2463 = vadd.f32 %v2076, %v2335
        %v2464 = vadd.f32 %v2077, %v2336
        %v2465 = vadd.f32 %v2078, %v2337
        %v2466 = vadd.f32 %v2079, %v2338
        %v2467 = vadd.f32 %v2080, %v2339
        %v2468 = vadd.f32 %v2081, %v2340
        %v2469 = vadd.f32 %v2082, %v2341
        %v2470 = vadd.f32 %v2083, %v2342
        %v2471 = vadd.f32 %v2084, %v2343
        %v2472 = vadd.f32 %v2085, %v2344
        %v2473 = vadd.f32 %v2086, %v2345
        %v2474 = vadd.f32 %v2087, %v2346
        %v2475 = vadd.f32 %v2088, %v2347
        %v2476 = vadd.f32 %v2089, %v2348
        %v2477 = vadd.f32 %v2090, %v2349
        %v2478 = vadd.f32 %v2091, %v2350
        %v2479 = vadd.f32 %v2092, %v2351
        %v2480 = vadd.f32 %v2093, %v2352
        %v2481 = vadd.f32 %v2094, %v2353
        %v2482 = vadd.f32 %v2095, %v2354
        %v2483 = vadd.f32 %v2096, %v2355
        %v2484 = vadd.f32 %v2097, %v2356
        %v2485 = vadd.f32 %v2098, %v2357
        %v2486 = vadd.f32 %v2099, %v2358
        %v2487 = vadd.f32 %v2100, %v2359
        %v2488 = vadd.f32 %v2101, %v2360
        %v2489 = vadd.f32 %v2102, %v2361
        %v2490 = vadd.f32 %v2103, %v2362
        %v2491 = vadd.f32 %v2104, %v2363
        %v2492 = vadd.f32 %v2105, %v2364
        %v2493 = vadd.f32 %v2106, %v2365
        %v2494 = vadd.f32 %v2107, %v2366
        %v2495 = vadd.f32 %v2108, %v2367
        %v2496 = vadd.f32 %v2109, %v2368
        %v2497 = vadd.f32 %v2110, %v2369
        %v2498 = vadd.f32 %v2111, %v2370
        %v2499 = vadd.f32 %v2112, %v2371
        %v2500 = vadd.f32 %v2113, %v2372
        %v2501 = vadd.f32 %v2114, %v2373
        %v2502 = vadd.f32 %v2115, %v2374
        %v2503 = vadd.f32 %v2116, %v2375
        %v2504 = vadd.f32 %v2117, %v2376
        %v2505 = vadd.f32 %v2118, %v2377
        %v2506 = vadd.f32 %v2119, %v2378
        %v2507 = vadd.f32 %v2120, %v2379
        %v2508 = vadd.f32 %v2121, %v2380
        %v2509 = vadd.f32 %v2122, %v2381
        %v2510 = vadd.f32 %v2123, %v2382
        %v2511 = vadd.f32 %v2124, %v2383
        %v2512 = vadd.f32 %v2125, %v2384
        %v2513 = vadd.f32 %v2126, %v2385
        %v2514 = vadd.f32 %v2127, %v2386
        %v2515 = vadd.f32 %v2128, %v2387
        %v2516 = vadd.f32 %v2129, %v2388
        %v2517 = vadd.f32 %v2130, %v2389
        %v2518 = vadd.f32 %v2131, %v2390
        %v2519 = vadd.f32 %v2132, %v2391
        %v2520 = vadd.f32 %v2133, %v2392
        %v2521 = vadd.f32 %v2134, %v2393
        %v2522 = vadd.f32 %v2135, %v2394
        %v2523 = vadd.f32 %v2136, %v2395
        %v2524 = vadd.f32 %v2137, %v2396
        %v2525 = vadd.f32 %v2138, %v2397
        %v2526 = vadd.f32 %v2139, %v2398
        %v2527 = vadd.f32 %v2140, %v2399
        %v2528 = vadd.f32 %v2141, %v2400
        %v2529 = vadd.f32 %v2142, %v2401
        %v2530 = vadd.f32 %v2143, %v2402
        %v2531 = vadd.f32 %v2144, %v2403
        %v2532 = vadd.f32 %v2145, %v2404
        %v2533 = vadd.f32 %v2146, %v2405
        %s2534 = sadd.s32 %s199, 2
        %s2535 = smul.u32 %s2534, 18
        %s2536 = scalar_lea.vmem [#allocation7], %s2535
        %v2537 = vld [vmem:[%s2536] sm:$0x1]
        %v2538 = vld [vmem:[%s2536 + $0x1] sm:$0x1]
        %v2539 = vld [vmem:[%s2536 + $0x2] sm:$0x1]
        %v2540 = vld [vmem:[%s2536 + $0x3] sm:$0x1]
        %v2541 = vld [vmem:[%s2536 + $0x4] sm:$0x1]
        %v2542 = vld [vmem:[%s2536 + $0x5] sm:$0x1]
        %v2543 = vld [vmem:[%s2536 + $0x6] sm:$0x1]
        %v2544 = vld [vmem:[%s2536 + $0x7] sm:$0x1]
        %v2545 = vld [vmem:[%s2536 + $0x8] sm:$0x1]
        %v2546 = vld [vmem:[%s2536 + $0x9] sm:$0x1]
        %v2547 = vld [vmem:[%s2536 + $0xa] sm:$0x1]
        %v2548 = vld [vmem:[%s2536 + $0xb] sm:$0x1]
        %v2549 = vld [vmem:[%s2536 + $0xc] sm:$0x1]
        %v2550 = vld [vmem:[%s2536 + $0xd] sm:$0x1]
        %v2551 = vld [vmem:[%s2536 + $0xe] sm:$0x1]
        %v2552 = vld [vmem:[%s2536 + $0xf] sm:$0x1]
        %v2553 = vld [vmem:[%s2536 + $0x12] sm:$0x1]
        %v2554 = vld [vmem:[%s2536 + $0x13] sm:$0x1]
        %v2555 = vld [vmem:[%s2536 + $0x14] sm:$0x1]
        %v2556 = vld [vmem:[%s2536 + $0x15] sm:$0x1]
        %v2557 = vld [vmem:[%s2536 + $0x16] sm:$0x1]
        %v2558 = vld [vmem:[%s2536 + $0x17] sm:$0x1]
        %v2559 = vld [vmem:[%s2536 + $0x18] sm:$0x1]
        %v2560 = vld [vmem:[%s2536 + $0x19] sm:$0x1]
        %v2561 = vld [vmem:[%s2536 + $0x1a] sm:$0x1]
        %v2562 = vld [vmem:[%s2536 + $0x1b] sm:$0x1]
        %v2563 = vld [vmem:[%s2536 + $0x1c] sm:$0x1]
        %v2564 = vld [vmem:[%s2536 + $0x1d] sm:$0x1]
        %v2565 = vld [vmem:[%s2536 + $0x1e] sm:$0x1]
        %v2566 = vld [vmem:[%s2536 + $0x1f] sm:$0x1]
        %v2567 = vld [vmem:[%s2536 + $0x20] sm:$0x1]
        %v2568 = vld [vmem:[%s2536 + $0x21] sm:$0x1]
        %v2569 = vld [vmem:[%s2536 + $0x24] sm:$0x1]
        %v2570 = vld [vmem:[%s2536 + $0x25] sm:$0x1]
        %v2571 = vld [vmem:[%s2536 + $0x26] sm:$0x1]
        %v2572 = vld [vmem:[%s2536 + $0x27] sm:$0x1]
        %v2573 = vld [vmem:[%s2536 + $0x28] sm:$0x1]
        %v2574 = vld [vmem:[%s2536 + $0x29] sm:$0x1]
        %v2575 = vld [vmem:[%s2536 + $0x2a] sm:$0x1]
        %v2576 = vld [vmem:[%s2536 + $0x2b] sm:$0x1]
        %v2577 = vld [vmem:[%s2536 + $0x2c] sm:$0x1]
        %v2578 = vld [vmem:[%s2536 + $0x2d] sm:$0x1]
        %v2579 = vld [vmem:[%s2536 + $0x2e] sm:$0x1]
        %v2580 = vld [vmem:[%s2536 + $0x2f] sm:$0x1]
        %v2581 = vld [vmem:[%s2536 + $0x30] sm:$0x1]
        %v2582 = vld [vmem:[%s2536 + $0x31] sm:$0x1]
        %v2583 = vld [vmem:[%s2536 + $0x32] sm:$0x1]
        %v2584 = vld [vmem:[%s2536 + $0x33] sm:$0x1]
        %v2585 = vld [vmem:[%s2536 + $0x36] sm:$0x1]
        %v2586 = vld [vmem:[%s2536 + $0x37] sm:$0x1]
        %v2587 = vld [vmem:[%s2536 + $0x38] sm:$0x1]
        %v2588 = vld [vmem:[%s2536 + $0x39] sm:$0x1]
        %v2589 = vld [vmem:[%s2536 + $0x3a] sm:$0x1]
        %v2590 = vld [vmem:[%s2536 + $0x3b] sm:$0x1]
        %v2591 = vld [vmem:[%s2536 + $0x3c] sm:$0x1]
        %v2592 = vld [vmem:[%s2536 + $0x3d] sm:$0x1]
        %v2593 = vld [vmem:[%s2536 + $0x3e] sm:$0x1]
        %v2594 = vld [vmem:[%s2536 + $0x3f] sm:$0x1]
        %v2595 = vld [vmem:[%s2536 + $0x40] sm:$0x1]
        %v2596 = vld [vmem:[%s2536 + $0x41] sm:$0x1]
        %v2597 = vld [vmem:[%s2536 + $0x42] sm:$0x1]
        %v2598 = vld [vmem:[%s2536 + $0x43] sm:$0x1]
        %v2599 = vld [vmem:[%s2536 + $0x44] sm:$0x1]
        %v2600 = vld [vmem:[%s2536 + $0x45] sm:$0x1]
        %v2601 = vld [vmem:[%s2536 + $0x48] sm:$0x1]
        %v2602 = vld [vmem:[%s2536 + $0x49] sm:$0x1]
        %v2603 = vld [vmem:[%s2536 + $0x4a] sm:$0x1]
        %v2604 = vld [vmem:[%s2536 + $0x4b] sm:$0x1]
        %v2605 = vld [vmem:[%s2536 + $0x4c] sm:$0x1]
        %v2606 = vld [vmem:[%s2536 + $0x4d] sm:$0x1]
        %v2607 = vld [vmem:[%s2536 + $0x4e] sm:$0x1]
        %v2608 = vld [vmem:[%s2536 + $0x4f] sm:$0x1]
        %v2609 = vld [vmem:[%s2536 + $0x50] sm:$0x1]
        %v2610 = vld [vmem:[%s2536 + $0x51] sm:$0x1]
        %v2611 = vld [vmem:[%s2536 + $0x52] sm:$0x1]
        %v2612 = vld [vmem:[%s2536 + $0x53] sm:$0x1]
        %v2613 = vld [vmem:[%s2536 + $0x54] sm:$0x1]
        %v2614 = vld [vmem:[%s2536 + $0x55] sm:$0x1]
        %v2615 = vld [vmem:[%s2536 + $0x56] sm:$0x1]
        %v2616 = vld [vmem:[%s2536 + $0x57] sm:$0x1]
        %v2617 = vld [vmem:[%s2536 + $0x5a] sm:$0x1]
        %v2618 = vld [vmem:[%s2536 + $0x5b] sm:$0x1]
        %v2619 = vld [vmem:[%s2536 + $0x5c] sm:$0x1]
        %v2620 = vld [vmem:[%s2536 + $0x5d] sm:$0x1]
        %v2621 = vld [vmem:[%s2536 + $0x5e] sm:$0x1]
        %v2622 = vld [vmem:[%s2536 + $0x5f] sm:$0x1]
        %v2623 = vld [vmem:[%s2536 + $0x60] sm:$0x1]
        %v2624 = vld [vmem:[%s2536 + $0x61] sm:$0x1]
        %v2625 = vld [vmem:[%s2536 + $0x62] sm:$0x1]
        %v2626 = vld [vmem:[%s2536 + $0x63] sm:$0x1]
        %v2627 = vld [vmem:[%s2536 + $0x64] sm:$0x1]
        %v2628 = vld [vmem:[%s2536 + $0x65] sm:$0x1]
        %v2629 = vld [vmem:[%s2536 + $0x66] sm:$0x1]
        %v2630 = vld [vmem:[%s2536 + $0x67] sm:$0x1]
        %v2631 = vld [vmem:[%s2536 + $0x68] sm:$0x1]
        %v2632 = vld [vmem:[%s2536 + $0x69] sm:$0x1]
        %v2633 = vld [vmem:[%s2536 + $0x6c] sm:$0x1]
        %v2634 = vld [vmem:[%s2536 + $0x6d] sm:$0x1]
        %v2635 = vld [vmem:[%s2536 + $0x6e] sm:$0x1]
        %v2636 = vld [vmem:[%s2536 + $0x6f] sm:$0x1]
        %v2637 = vld [vmem:[%s2536 + $0x70] sm:$0x1]
        %v2638 = vld [vmem:[%s2536 + $0x71] sm:$0x1]
        %v2639 = vld [vmem:[%s2536 + $0x72] sm:$0x1]
        %v2640 = vld [vmem:[%s2536 + $0x73] sm:$0x1]
        %v2641 = vld [vmem:[%s2536 + $0x74] sm:$0x1]
        %v2642 = vld [vmem:[%s2536 + $0x75] sm:$0x1]
        %v2643 = vld [vmem:[%s2536 + $0x76] sm:$0x1]
        %v2644 = vld [vmem:[%s2536 + $0x77] sm:$0x1]
        %v2645 = vld [vmem:[%s2536 + $0x78] sm:$0x1]
        %v2646 = vld [vmem:[%s2536 + $0x79] sm:$0x1]
        %v2647 = vld [vmem:[%s2536 + $0x7a] sm:$0x1]
        %v2648 = vld [vmem:[%s2536 + $0x7b] sm:$0x1]
        %v2649 = vld [vmem:[%s2536 + $0x7e] sm:$0x1]
        %v2650 = vld [vmem:[%s2536 + $0x7f] sm:$0x1]
        %v2651 = vld [vmem:[%s2536 + $0x80] sm:$0x1]
        %v2652 = vld [vmem:[%s2536 + $0x81] sm:$0x1]
        %v2653 = vld [vmem:[%s2536 + $0x82] sm:$0x1]
        %v2654 = vld [vmem:[%s2536 + $0x83] sm:$0x1]
        %v2655 = vld [vmem:[%s2536 + $0x84] sm:$0x1]
        %v2656 = vld [vmem:[%s2536 + $0x85] sm:$0x1]
        %v2657 = vld [vmem:[%s2536 + $0x86] sm:$0x1]
        %v2658 = vld [vmem:[%s2536 + $0x87] sm:$0x1]
        %v2659 = vld [vmem:[%s2536 + $0x88] sm:$0x1]
        %v2660 = vld [vmem:[%s2536 + $0x89] sm:$0x1]
        %v2661 = vld [vmem:[%s2536 + $0x8a] sm:$0x1]
        %v2662 = vld [vmem:[%s2536 + $0x8b] sm:$0x1]
        %v2663 = vld [vmem:[%s2536 + $0x8c] sm:$0x1]
        %v2664 = vld [vmem:[%s2536 + $0x8d] sm:$0x1]
        %v2665 = vstv %s206
        %v2666 = vmul.f32 %v2665, %v2537
        %v2667 = vmul.f32 %v2665, %v2538
        %v2668 = vmul.f32 %v2665, %v2539
        %v2669 = vmul.f32 %v2665, %v2540
        %v2670 = vmul.f32 %v2665, %v2541
        %v2671 = vmul.f32 %v2665, %v2542
        %v2672 = vmul.f32 %v2665, %v2543
        %v2673 = vmul.f32 %v2665, %v2544
        %v2674 = vmul.f32 %v2665, %v2545
        %v2675 = vmul.f32 %v2665, %v2546
        %v2676 = vmul.f32 %v2665, %v2547
        %v2677 = vmul.f32 %v2665, %v2548
        %v2678 = vmul.f32 %v2665, %v2549
        %v2679 = vmul.f32 %v2665, %v2550
        %v2680 = vmul.f32 %v2665, %v2551
        %v2681 = vmul.f32 %v2665, %v2552
        %v2682 = vmul.f32 %v2665, %v2553
        %v2683 = vmul.f32 %v2665, %v2554
        %v2684 = vmul.f32 %v2665, %v2555
        %v2685 = vmul.f32 %v2665, %v2556
        %v2686 = vmul.f32 %v2665, %v2557
        %v2687 = vmul.f32 %v2665, %v2558
        %v2688 = vmul.f32 %v2665, %v2559
        %v2689 = vmul.f32 %v2665, %v2560
        %v2690 = vmul.f32 %v2665, %v2561
        %v2691 = vmul.f32 %v2665, %v2562
        %v2692 = vmul.f32 %v2665, %v2563
        %v2693 = vmul.f32 %v2665, %v2564
        %v2694 = vmul.f32 %v2665, %v2565
        %v2695 = vmul.f32 %v2665, %v2566
        %v2696 = vmul.f32 %v2665, %v2567
        %v2697 = vmul.f32 %v2665, %v2568
        %v2698 = vmul.f32 %v2665, %v2569
        %v2699 = vmul.f32 %v2665, %v2570
        %v2700 = vmul.f32 %v2665, %v2571
        %v2701 = vmul.f32 %v2665, %v2572
        %v2702 = vmul.f32 %v2665, %v2573
        %v2703 = vmul.f32 %v2665, %v2574
        %v2704 = vmul.f32 %v2665, %v2575
        %v2705 = vmul.f32 %v2665, %v2576
        %v2706 = vmul.f32 %v2665, %v2577
        %v2707 = vmul.f32 %v2665, %v2578
        %v2708 = vmul.f32 %v2665, %v2579
        %v2709 = vmul.f32 %v2665, %v2580
        %v2710 = vmul.f32 %v2665, %v2581
        %v2711 = vmul.f32 %v2665, %v2582
        %v2712 = vmul.f32 %v2665, %v2583
        %v2713 = vmul.f32 %v2665, %v2584
        %v2714 = vmul.f32 %v2665, %v2585
        %v2715 = vmul.f32 %v2665, %v2586
        %v2716 = vmul.f32 %v2665, %v2587
        %v2717 = vmul.f32 %v2665, %v2588
        %v2718 = vmul.f32 %v2665, %v2589
        %v2719 = vmul.f32 %v2665, %v2590
        %v2720 = vmul.f32 %v2665, %v2591
        %v2721 = vmul.f32 %v2665, %v2592
        %v2722 = vmul.f32 %v2665, %v2593
        %v2723 = vmul.f32 %v2665, %v2594
        %v2724 = vmul.f32 %v2665, %v2595
        %v2725 = vmul.f32 %v2665, %v2596
        %v2726 = vmul.f32 %v2665, %v2597
        %v2727 = vmul.f32 %v2665, %v2598
        %v2728 = vmul.f32 %v2665, %v2599
        %v2729 = vmul.f32 %v2665, %v2600
        %v2730 = vmul.f32 %v2665, %v2601
        %v2731 = vmul.f32 %v2665, %v2602
        %v2732 = vmul.f32 %v2665, %v2603
        %v2733 = vmul.f32 %v2665, %v2604
        %v2734 = vmul.f32 %v2665, %v2605
        %v2735 = vmul.f32 %v2665, %v2606
        %v2736 = vmul.f32 %v2665, %v2607
        %v2737 = vmul.f32 %v2665, %v2608
        %v2738 = vmul.f32 %v2665, %v2609
        %v2739 = vmul.f32 %v2665, %v2610
        %v2740 = vmul.f32 %v2665, %v2611
        %v2741 = vmul.f32 %v2665, %v2612
        %v2742 = vmul.f32 %v2665, %v2613
        %v2743 = vmul.f32 %v2665, %v2614
        %v2744 = vmul.f32 %v2665, %v2615
        %v2745 = vmul.f32 %v2665, %v2616
        %v2746 = vmul.f32 %v2665, %v2617
        %v2747 = vmul.f32 %v2665, %v2618
        %v2748 = vmul.f32 %v2665, %v2619
        %v2749 = vmul.f32 %v2665, %v2620
        %v2750 = vmul.f32 %v2665, %v2621
        %v2751 = vmul.f32 %v2665, %v2622
        %v2752 = vmul.f32 %v2665, %v2623
        %v2753 = vmul.f32 %v2665, %v2624
        %v2754 = vmul.f32 %v2665, %v2625
        %v2755 = vmul.f32 %v2665, %v2626
        %v2756 = vmul.f32 %v2665, %v2627
        %v2757 = vmul.f32 %v2665, %v2628
        %v2758 = vmul.f32 %v2665, %v2629
        %v2759 = vmul.f32 %v2665, %v2630
        %v2760 = vmul.f32 %v2665, %v2631
        %v2761 = vmul.f32 %v2665, %v2632
        %v2762 = vmul.f32 %v2665, %v2633
        %v2763 = vmul.f32 %v2665, %v2634
        %v2764 = vmul.f32 %v2665, %v2635
        %v2765 = vmul.f32 %v2665, %v2636
        %v2766 = vmul.f32 %v2665, %v2637
        %v2767 = vmul.f32 %v2665, %v2638
        %v2768 = vmul.f32 %v2665, %v2639
        %v2769 = vmul.f32 %v2665, %v2640
        %v2770 = vmul.f32 %v2665, %v2641
        %v2771 = vmul.f32 %v2665, %v2642
        %v2772 = vmul.f32 %v2665, %v2643
        %v2773 = vmul.f32 %v2665, %v2644
        %v2774 = vmul.f32 %v2665, %v2645
        %v2775 = vmul.f32 %v2665, %v2646
        %v2776 = vmul.f32 %v2665, %v2647
        %v2777 = vmul.f32 %v2665, %v2648
        %v2778 = vmul.f32 %v2665, %v2649
        %v2779 = vmul.f32 %v2665, %v2650
        %v2780 = vmul.f32 %v2665, %v2651
        %v2781 = vmul.f32 %v2665, %v2652
        %v2782 = vmul.f32 %v2665, %v2653
        %v2783 = vmul.f32 %v2665, %v2654
        %v2784 = vmul.f32 %v2665, %v2655
        %v2785 = vmul.f32 %v2665, %v2656
        %v2786 = vmul.f32 %v2665, %v2657
        %v2787 = vmul.f32 %v2665, %v2658
        %v2788 = vmul.f32 %v2665, %v2659
        %v2789 = vmul.f32 %v2665, %v2660
        %v2790 = vmul.f32 %v2665, %v2661
        %v2791 = vmul.f32 %v2665, %v2662
        %v2792 = vmul.f32 %v2665, %v2663
        %v2793 = vmul.f32 %v2665, %v2664
        %v2794 = vadd.f32 %v2406, %v2666
        %v2795 = vadd.f32 %v2407, %v2667
        %v2796 = vadd.f32 %v2408, %v2668
        %v2797 = vadd.f32 %v2409, %v2669
        %v2798 = vadd.f32 %v2410, %v2670
        %v2799 = vadd.f32 %v2411, %v2671
        %v2800 = vadd.f32 %v2412, %v2672
        %v2801 = vadd.f32 %v2413, %v2673
        %v2802 = vadd.f32 %v2414, %v2674
        %v2803 = vadd.f32 %v2415, %v2675
        %v2804 = vadd.f32 %v2416, %v2676
        %v2805 = vadd.f32 %v2417, %v2677
        %v2806 = vadd.f32 %v2418, %v2678
        %v2807 = vadd.f32 %v2419, %v2679
        %v2808 = vadd.f32 %v2420, %v2680
        %v2809 = vadd.f32 %v2421, %v2681
        %v2810 = vadd.f32 %v2422, %v2682
        %v2811 = vadd.f32 %v2423, %v2683
        %v2812 = vadd.f32 %v2424, %v2684
        %v2813 = vadd.f32 %v2425, %v2685
        %v2814 = vadd.f32 %v2426, %v2686
        %v2815 = vadd.f32 %v2427, %v2687
        %v2816 = vadd.f32 %v2428, %v2688
        %v2817 = vadd.f32 %v2429, %v2689
        %v2818 = vadd.f32 %v2430, %v2690
        %v2819 = vadd.f32 %v2431, %v2691
        %v2820 = vadd.f32 %v2432, %v2692
        %v2821 = vadd.f32 %v2433, %v2693
        %v2822 = vadd.f32 %v2434, %v2694
        %v2823 = vadd.f32 %v2435, %v2695
        %v2824 = vadd.f32 %v2436, %v2696
        %v2825 = vadd.f32 %v2437, %v2697
        %v2826 = vadd.f32 %v2438, %v2698
        %v2827 = vadd.f32 %v2439, %v2699
        %v2828 = vadd.f32 %v2440, %v2700
        %v2829 = vadd.f32 %v2441, %v2701
        %v2830 = vadd.f32 %v2442, %v2702
        %v2831 = vadd.f32 %v2443, %v2703
        %v2832 = vadd.f32 %v2444, %v2704
        %v2833 = vadd.f32 %v2445, %v2705
        %v2834 = vadd.f32 %v2446, %v2706
        %v2835 = vadd.f32 %v2447, %v2707
        %v2836 = vadd.f32 %v2448, %v2708
        %v2837 = vadd.f32 %v2449, %v2709
        %v2838 = vadd.f32 %v2450, %v2710
        %v2839 = vadd.f32 %v2451, %v2711
        %v2840 = vadd.f32 %v2452, %v2712
        %v2841 = vadd.f32 %v2453, %v2713
        %v2842 = vadd.f32 %v2454, %v2714
        %v2843 = vadd.f32 %v2455, %v2715
        %v2844 = vadd.f32 %v2456, %v2716
        %v2845 = vadd.f32 %v2457, %v2717
        %v2846 = vadd.f32 %v2458, %v2718
        %v2847 = vadd.f32 %v2459, %v2719
        %v2848 = vadd.f32 %v2460, %v2720
        %v2849 = vadd.f32 %v2461, %v2721
        %v2850 = vadd.f32 %v2462, %v2722
        %v2851 = vadd.f32 %v2463, %v2723
        %v2852 = vadd.f32 %v2464, %v2724
        %v2853 = vadd.f32 %v2465, %v2725
        %v2854 = vadd.f32 %v2466, %v2726
        %v2855 = vadd.f32 %v2467, %v2727
        %v2856 = vadd.f32 %v2468, %v2728
        %v2857 = vadd.f32 %v2469, %v2729
        %v2858 = vadd.f32 %v2470, %v2730
        %v2859 = vadd.f32 %v2471, %v2731
        %v2860 = vadd.f32 %v2472, %v2732
        %v2861 = vadd.f32 %v2473, %v2733
        %v2862 = vadd.f32 %v2474, %v2734
        %v2863 = vadd.f32 %v2475, %v2735
        %v2864 = vadd.f32 %v2476, %v2736
        %v2865 = vadd.f32 %v2477, %v2737
        %v2866 = vadd.f32 %v2478, %v2738
        %v2867 = vadd.f32 %v2479, %v2739
        %v2868 = vadd.f32 %v2480, %v2740
        %v2869 = vadd.f32 %v2481, %v2741
        %v2870 = vadd.f32 %v2482, %v2742
        %v2871 = vadd.f32 %v2483, %v2743
        %v2872 = vadd.f32 %v2484, %v2744
        %v2873 = vadd.f32 %v2485, %v2745
        %v2874 = vadd.f32 %v2486, %v2746
        %v2875 = vadd.f32 %v2487, %v2747
        %v2876 = vadd.f32 %v2488, %v2748
        %v2877 = vadd.f32 %v2489, %v2749
        %v2878 = vadd.f32 %v2490, %v2750
        %v2879 = vadd.f32 %v2491, %v2751
        %v2880 = vadd.f32 %v2492, %v2752
        %v2881 = vadd.f32 %v2493, %v2753
        %v2882 = vadd.f32 %v2494, %v2754
        %v2883 = vadd.f32 %v2495, %v2755
        %v2884 = vadd.f32 %v2496, %v2756
        %v2885 = vadd.f32 %v2497, %v2757
        %v2886 = vadd.f32 %v2498, %v2758
        %v2887 = vadd.f32 %v2499, %v2759
        %v2888 = vadd.f32 %v2500, %v2760
        %v2889 = vadd.f32 %v2501, %v2761
        %v2890 = vadd.f32 %v2502, %v2762
        %v2891 = vadd.f32 %v2503, %v2763
        %v2892 = vadd.f32 %v2504, %v2764
        %v2893 = vadd.f32 %v2505, %v2765
        %v2894 = vadd.f32 %v2506, %v2766
        %v2895 = vadd.f32 %v2507, %v2767
        %v2896 = vadd.f32 %v2508, %v2768
        %v2897 = vadd.f32 %v2509, %v2769
        %v2898 = vadd.f32 %v2510, %v2770
        %v2899 = vadd.f32 %v2511, %v2771
        %v2900 = vadd.f32 %v2512, %v2772
        %v2901 = vadd.f32 %v2513, %v2773
        %v2902 = vadd.f32 %v2514, %v2774
        %v2903 = vadd.f32 %v2515, %v2775
        %v2904 = vadd.f32 %v2516, %v2776
        %v2905 = vadd.f32 %v2517, %v2777
        %v2906 = vadd.f32 %v2518, %v2778
        %v2907 = vadd.f32 %v2519, %v2779
        %v2908 = vadd.f32 %v2520, %v2780
        %v2909 = vadd.f32 %v2521, %v2781
        %v2910 = vadd.f32 %v2522, %v2782
        %v2911 = vadd.f32 %v2523, %v2783
        %v2912 = vadd.f32 %v2524, %v2784
        %v2913 = vadd.f32 %v2525, %v2785
        %v2914 = vadd.f32 %v2526, %v2786
        %v2915 = vadd.f32 %v2527, %v2787
        %v2916 = vadd.f32 %v2528, %v2788
        %v2917 = vadd.f32 %v2529, %v2789
        %v2918 = vadd.f32 %v2530, %v2790
        %v2919 = vadd.f32 %v2531, %v2791
        %v2920 = vadd.f32 %v2532, %v2792
        %v2921 = vadd.f32 %v2533, %v2793
        %s2922 = sadd.s32 1, %s2535
        %s2923 = scalar_lea.vmem [#allocation7], %s2922
        %v2924 = vld [vmem:[%s2923] sm:$0x1]
        %v2925 = vld [vmem:[%s2923 + $0x1] sm:$0x1]
        %v2926 = vld [vmem:[%s2923 + $0x2] sm:$0x1]
        %v2927 = vld [vmem:[%s2923 + $0x3] sm:$0x1]
        %v2928 = vld [vmem:[%s2923 + $0x4] sm:$0x1]
        %v2929 = vld [vmem:[%s2923 + $0x5] sm:$0x1]
        %v2930 = vld [vmem:[%s2923 + $0x6] sm:$0x1]
        %v2931 = vld [vmem:[%s2923 + $0x7] sm:$0x1]
        %v2932 = vld [vmem:[%s2923 + $0x8] sm:$0x1]
        %v2933 = vld [vmem:[%s2923 + $0x9] sm:$0x1]
        %v2934 = vld [vmem:[%s2923 + $0xa] sm:$0x1]
        %v2935 = vld [vmem:[%s2923 + $0xb] sm:$0x1]
        %v2936 = vld [vmem:[%s2923 + $0xc] sm:$0x1]
        %v2937 = vld [vmem:[%s2923 + $0xd] sm:$0x1]
        %v2938 = vld [vmem:[%s2923 + $0xe] sm:$0x1]
        %v2939 = vld [vmem:[%s2923 + $0xf] sm:$0x1]
        %v2940 = vld [vmem:[%s2923 + $0x12] sm:$0x1]
        %v2941 = vld [vmem:[%s2923 + $0x13] sm:$0x1]
        %v2942 = vld [vmem:[%s2923 + $0x14] sm:$0x1]
        %v2943 = vld [vmem:[%s2923 + $0x15] sm:$0x1]
        %v2944 = vld [vmem:[%s2923 + $0x16] sm:$0x1]
        %v2945 = vld [vmem:[%s2923 + $0x17] sm:$0x1]
        %v2946 = vld [vmem:[%s2923 + $0x18] sm:$0x1]
        %v2947 = vld [vmem:[%s2923 + $0x19] sm:$0x1]
        %v2948 = vld [vmem:[%s2923 + $0x1a] sm:$0x1]
        %v2949 = vld [vmem:[%s2923 + $0x1b] sm:$0x1]
        %v2950 = vld [vmem:[%s2923 + $0x1c] sm:$0x1]
        %v2951 = vld [vmem:[%s2923 + $0x1d] sm:$0x1]
        %v2952 = vld [vmem:[%s2923 + $0x1e] sm:$0x1]
        %v2953 = vld [vmem:[%s2923 + $0x1f] sm:$0x1]
        %v2954 = vld [vmem:[%s2923 + $0x20] sm:$0x1]
        %v2955 = vld [vmem:[%s2923 + $0x21] sm:$0x1]
        %v2956 = vld [vmem:[%s2923 + $0x24] sm:$0x1]
        %v2957 = vld [vmem:[%s2923 + $0x25] sm:$0x1]
        %v2958 = vld [vmem:[%s2923 + $0x26] sm:$0x1]
        %v2959 = vld [vmem:[%s2923 + $0x27] sm:$0x1]
        %v2960 = vld [vmem:[%s2923 + $0x28] sm:$0x1]
        %v2961 = vld [vmem:[%s2923 + $0x29] sm:$0x1]
        %v2962 = vld [vmem:[%s2923 + $0x2a] sm:$0x1]
        %v2963 = vld [vmem:[%s2923 + $0x2b] sm:$0x1]
        %v2964 = vld [vmem:[%s2923 + $0x2c] sm:$0x1]
        %v2965 = vld [vmem:[%s2923 + $0x2d] sm:$0x1]
        %v2966 = vld [vmem:[%s2923 + $0x2e] sm:$0x1]
        %v2967 = vld [vmem:[%s2923 + $0x2f] sm:$0x1]
        %v2968 = vld [vmem:[%s2923 + $0x30] sm:$0x1]
        %v2969 = vld [vmem:[%s2923 + $0x31] sm:$0x1]
        %v2970 = vld [vmem:[%s2923 + $0x32] sm:$0x1]
        %v2971 = vld [vmem:[%s2923 + $0x33] sm:$0x1]
        %v2972 = vld [vmem:[%s2923 + $0x36] sm:$0x1]
        %v2973 = vld [vmem:[%s2923 + $0x37] sm:$0x1]
        %v2974 = vld [vmem:[%s2923 + $0x38] sm:$0x1]
        %v2975 = vld [vmem:[%s2923 + $0x39] sm:$0x1]
        %v2976 = vld [vmem:[%s2923 + $0x3a] sm:$0x1]
        %v2977 = vld [vmem:[%s2923 + $0x3b] sm:$0x1]
        %v2978 = vld [vmem:[%s2923 + $0x3c] sm:$0x1]
        %v2979 = vld [vmem:[%s2923 + $0x3d] sm:$0x1]
        %v2980 = vld [vmem:[%s2923 + $0x3e] sm:$0x1]
        %v2981 = vld [vmem:[%s2923 + $0x3f] sm:$0x1]
        %v2982 = vld [vmem:[%s2923 + $0x40] sm:$0x1]
        %v2983 = vld [vmem:[%s2923 + $0x41] sm:$0x1]
        %v2984 = vld [vmem:[%s2923 + $0x42] sm:$0x1]
        %v2985 = vld [vmem:[%s2923 + $0x43] sm:$0x1]
        %v2986 = vld [vmem:[%s2923 + $0x44] sm:$0x1]
        %v2987 = vld [vmem:[%s2923 + $0x45] sm:$0x1]
        %v2988 = vld [vmem:[%s2923 + $0x48] sm:$0x1]
        %v2989 = vld [vmem:[%s2923 + $0x49] sm:$0x1]
        %v2990 = vld [vmem:[%s2923 + $0x4a] sm:$0x1]
        %v2991 = vld [vmem:[%s2923 + $0x4b] sm:$0x1]
        %v2992 = vld [vmem:[%s2923 + $0x4c] sm:$0x1]
        %v2993 = vld [vmem:[%s2923 + $0x4d] sm:$0x1]
        %v2994 = vld [vmem:[%s2923 + $0x4e] sm:$0x1]
        %v2995 = vld [vmem:[%s2923 + $0x4f] sm:$0x1]
        %v2996 = vld [vmem:[%s2923 + $0x50] sm:$0x1]
        %v2997 = vld [vmem:[%s2923 + $0x51] sm:$0x1]
        %v2998 = vld [vmem:[%s2923 + $0x52] sm:$0x1]
        %v2999 = vld [vmem:[%s2923 + $0x53] sm:$0x1]
        %v3000 = vld [vmem:[%s2923 + $0x54] sm:$0x1]
        %v3001 = vld [vmem:[%s2923 + $0x55] sm:$0x1]
        %v3002 = vld [vmem:[%s2923 + $0x56] sm:$0x1]
        %v3003 = vld [vmem:[%s2923 + $0x57] sm:$0x1]
        %v3004 = vld [vmem:[%s2923 + $0x5a] sm:$0x1]
        %v3005 = vld [vmem:[%s2923 + $0x5b] sm:$0x1]
        %v3006 = vld [vmem:[%s2923 + $0x5c] sm:$0x1]
        %v3007 = vld [vmem:[%s2923 + $0x5d] sm:$0x1]
        %v3008 = vld [vmem:[%s2923 + $0x5e] sm:$0x1]
        %v3009 = vld [vmem:[%s2923 + $0x5f] sm:$0x1]
        %v3010 = vld [vmem:[%s2923 + $0x60] sm:$0x1]
        %v3011 = vld [vmem:[%s2923 + $0x61] sm:$0x1]
        %v3012 = vld [vmem:[%s2923 + $0x62] sm:$0x1]
        %v3013 = vld [vmem:[%s2923 + $0x63] sm:$0x1]
        %v3014 = vld [vmem:[%s2923 + $0x64] sm:$0x1]
        %v3015 = vld [vmem:[%s2923 + $0x65] sm:$0x1]
        %v3016 = vld [vmem:[%s2923 + $0x66] sm:$0x1]
        %v3017 = vld [vmem:[%s2923 + $0x67] sm:$0x1]
        %v3018 = vld [vmem:[%s2923 + $0x68] sm:$0x1]
        %v3019 = vld [vmem:[%s2923 + $0x69] sm:$0x1]
        %v3020 = vld [vmem:[%s2923 + $0x6c] sm:$0x1]
        %v3021 = vld [vmem:[%s2923 + $0x6d] sm:$0x1]
        %v3022 = vld [vmem:[%s2923 + $0x6e] sm:$0x1]
        %v3023 = vld [vmem:[%s2923 + $0x6f] sm:$0x1]
        %v3024 = vld [vmem:[%s2923 + $0x70] sm:$0x1]
        %v3025 = vld [vmem:[%s2923 + $0x71] sm:$0x1]
        %v3026 = vld [vmem:[%s2923 + $0x72] sm:$0x1]
        %v3027 = vld [vmem:[%s2923 + $0x73] sm:$0x1]
        %v3028 = vld [vmem:[%s2923 + $0x74] sm:$0x1]
        %v3029 = vld [vmem:[%s2923 + $0x75] sm:$0x1]
        %v3030 = vld [vmem:[%s2923 + $0x76] sm:$0x1]
        %v3031 = vld [vmem:[%s2923 + $0x77] sm:$0x1]
        %v3032 = vld [vmem:[%s2923 + $0x78] sm:$0x1]
        %v3033 = vld [vmem:[%s2923 + $0x79] sm:$0x1]
        %v3034 = vld [vmem:[%s2923 + $0x7a] sm:$0x1]
        %v3035 = vld [vmem:[%s2923 + $0x7b] sm:$0x1]
        %v3036 = vld [vmem:[%s2923 + $0x7e] sm:$0x1]
        %v3037 = vld [vmem:[%s2923 + $0x7f] sm:$0x1]
        %v3038 = vld [vmem:[%s2923 + $0x80] sm:$0x1]
        %v3039 = vld [vmem:[%s2923 + $0x81] sm:$0x1]
        %v3040 = vld [vmem:[%s2923 + $0x82] sm:$0x1]
        %v3041 = vld [vmem:[%s2923 + $0x83] sm:$0x1]
        %v3042 = vld [vmem:[%s2923 + $0x84] sm:$0x1]
        %v3043 = vld [vmem:[%s2923 + $0x85] sm:$0x1]
        %v3044 = vld [vmem:[%s2923 + $0x86] sm:$0x1]
        %v3045 = vld [vmem:[%s2923 + $0x87] sm:$0x1]
        %v3046 = vld [vmem:[%s2923 + $0x88] sm:$0x1]
        %v3047 = vld [vmem:[%s2923 + $0x89] sm:$0x1]
        %v3048 = vld [vmem:[%s2923 + $0x8a] sm:$0x1]
        %v3049 = vld [vmem:[%s2923 + $0x8b] sm:$0x1]
        %v3050 = vld [vmem:[%s2923 + $0x8c] sm:$0x1]
        %v3051 = vld [vmem:[%s2923 + $0x8d] sm:$0x1]
        %v3052 = vstv %s207
        %v3053 = vmul.f32 %v3052, %v2924
        %v3054 = vmul.f32 %v3052, %v2925
        %v3055 = vmul.f32 %v3052, %v2926
        %v3056 = vmul.f32 %v3052, %v2927
        %v3057 = vmul.f32 %v3052, %v2928
        %v3058 = vmul.f32 %v3052, %v2929
        %v3059 = vmul.f32 %v3052, %v2930
        %v3060 = vmul.f32 %v3052, %v2931
        %v3061 = vmul.f32 %v3052, %v2932
        %v3062 = vmul.f32 %v3052, %v2933
        %v3063 = vmul.f32 %v3052, %v2934
        %v3064 = vmul.f32 %v3052, %v2935
        %v3065 = vmul.f32 %v3052, %v2936
        %v3066 = vmul.f32 %v3052, %v2937
        %v3067 = vmul.f32 %v3052, %v2938
        %v3068 = vmul.f32 %v3052, %v2939
        %v3069 = vmul.f32 %v3052, %v2940
        %v3070 = vmul.f32 %v3052, %v2941
        %v3071 = vmul.f32 %v3052, %v2942
        %v3072 = vmul.f32 %v3052, %v2943
        %v3073 = vmul.f32 %v3052, %v2944
        %v3074 = vmul.f32 %v3052, %v2945
        %v3075 = vmul.f32 %v3052, %v2946
        %v3076 = vmul.f32 %v3052, %v2947
        %v3077 = vmul.f32 %v3052, %v2948
        %v3078 = vmul.f32 %v3052, %v2949
        %v3079 = vmul.f32 %v3052, %v2950
        %v3080 = vmul.f32 %v3052, %v2951
        %v3081 = vmul.f32 %v3052, %v2952
        %v3082 = vmul.f32 %v3052, %v2953
        %v3083 = vmul.f32 %v3052, %v2954
        %v3084 = vmul.f32 %v3052, %v2955
        %v3085 = vmul.f32 %v3052, %v2956
        %v3086 = vmul.f32 %v3052, %v2957
        %v3087 = vmul.f32 %v3052, %v2958
        %v3088 = vmul.f32 %v3052, %v2959
        %v3089 = vmul.f32 %v3052, %v2960
        %v3090 = vmul.f32 %v3052, %v2961
        %v3091 = vmul.f32 %v3052, %v2962
        %v3092 = vmul.f32 %v3052, %v2963
        %v3093 = vmul.f32 %v3052, %v2964
        %v3094 = vmul.f32 %v3052, %v2965
        %v3095 = vmul.f32 %v3052, %v2966
        %v3096 = vmul.f32 %v3052, %v2967
        %v3097 = vmul.f32 %v3052, %v2968
        %v3098 = vmul.f32 %v3052, %v2969
        %v3099 = vmul.f32 %v3052, %v2970
        %v3100 = vmul.f32 %v3052, %v2971
        %v3101 = vmul.f32 %v3052, %v2972
        %v3102 = vmul.f32 %v3052, %v2973
        %v3103 = vmul.f32 %v3052, %v2974
        %v3104 = vmul.f32 %v3052, %v2975
        %v3105 = vmul.f32 %v3052, %v2976
        %v3106 = vmul.f32 %v3052, %v2977
        %v3107 = vmul.f32 %v3052, %v2978
        %v3108 = vmul.f32 %v3052, %v2979
        %v3109 = vmul.f32 %v3052, %v2980
        %v3110 = vmul.f32 %v3052, %v2981
        %v3111 = vmul.f32 %v3052, %v2982
        %v3112 = vmul.f32 %v3052, %v2983
        %v3113 = vmul.f32 %v3052, %v2984
        %v3114 = vmul.f32 %v3052, %v2985
        %v3115 = vmul.f32 %v3052, %v2986
        %v3116 = vmul.f32 %v3052, %v2987
        %v3117 = vmul.f32 %v3052, %v2988
        %v3118 = vmul.f32 %v3052, %v2989
        %v3119 = vmul.f32 %v3052, %v2990
        %v3120 = vmul.f32 %v3052, %v2991
        %v3121 = vmul.f32 %v3052, %v2992
        %v3122 = vmul.f32 %v3052, %v2993
        %v3123 = vmul.f32 %v3052, %v2994
        %v3124 = vmul.f32 %v3052, %v2995
        %v3125 = vmul.f32 %v3052, %v2996
        %v3126 = vmul.f32 %v3052, %v2997
        %v3127 = vmul.f32 %v3052, %v2998
        %v3128 = vmul.f32 %v3052, %v2999
        %v3129 = vmul.f32 %v3052, %v3000
        %v3130 = vmul.f32 %v3052, %v3001
        %v3131 = vmul.f32 %v3052, %v3002
        %v3132 = vmul.f32 %v3052, %v3003
        %v3133 = vmul.f32 %v3052, %v3004
        %v3134 = vmul.f32 %v3052, %v3005
        %v3135 = vmul.f32 %v3052, %v3006
        %v3136 = vmul.f32 %v3052, %v3007
        %v3137 = vmul.f32 %v3052, %v3008
        %v3138 = vmul.f32 %v3052, %v3009
        %v3139 = vmul.f32 %v3052, %v3010
        %v3140 = vmul.f32 %v3052, %v3011
        %v3141 = vmul.f32 %v3052, %v3012
        %v3142 = vmul.f32 %v3052, %v3013
        %v3143 = vmul.f32 %v3052, %v3014
        %v3144 = vmul.f32 %v3052, %v3015
        %v3145 = vmul.f32 %v3052, %v3016
        %v3146 = vmul.f32 %v3052, %v3017
        %v3147 = vmul.f32 %v3052, %v3018
        %v3148 = vmul.f32 %v3052, %v3019
        %v3149 = vmul.f32 %v3052, %v3020
        %v3150 = vmul.f32 %v3052, %v3021
        %v3151 = vmul.f32 %v3052, %v3022
        %v3152 = vmul.f32 %v3052, %v3023
        %v3153 = vmul.f32 %v3052, %v3024
        %v3154 = vmul.f32 %v3052, %v3025
        %v3155 = vmul.f32 %v3052, %v3026
        %v3156 = vmul.f32 %v3052, %v3027
        %v3157 = vmul.f32 %v3052, %v3028
        %v3158 = vmul.f32 %v3052, %v3029
        %v3159 = vmul.f32 %v3052, %v3030
        %v3160 = vmul.f32 %v3052, %v3031
        %v3161 = vmul.f32 %v3052, %v3032
        %v3162 = vmul.f32 %v3052, %v3033
        %v3163 = vmul.f32 %v3052, %v3034
        %v3164 = vmul.f32 %v3052, %v3035
        %v3165 = vmul.f32 %v3052, %v3036
        %v3166 = vmul.f32 %v3052, %v3037
        %v3167 = vmul.f32 %v3052, %v3038
        %v3168 = vmul.f32 %v3052, %v3039
        %v3169 = vmul.f32 %v3052, %v3040
        %v3170 = vmul.f32 %v3052, %v3041
        %v3171 = vmul.f32 %v3052, %v3042
        %v3172 = vmul.f32 %v3052, %v3043
        %v3173 = vmul.f32 %v3052, %v3044
        %v3174 = vmul.f32 %v3052, %v3045
        %v3175 = vmul.f32 %v3052, %v3046
        %v3176 = vmul.f32 %v3052, %v3047
        %v3177 = vmul.f32 %v3052, %v3048
        %v3178 = vmul.f32 %v3052, %v3049
        %v3179 = vmul.f32 %v3052, %v3050
        %v3180 = vmul.f32 %v3052, %v3051
        %v3181 = vadd.f32 %v2794, %v3053
        %v3182 = vadd.f32 %v2795, %v3054
        %v3183 = vadd.f32 %v2796, %v3055
        %v3184 = vadd.f32 %v2797, %v3056
        %v3185 = vadd.f32 %v2798, %v3057
        %v3186 = vadd.f32 %v2799, %v3058
        %v3187 = vadd.f32 %v2800, %v3059
        %v3188 = vadd.f32 %v2801, %v3060
        %v3189 = vadd.f32 %v2802, %v3061
        %v3190 = vadd.f32 %v2803, %v3062
        %v3191 = vadd.f32 %v2804, %v3063
        %v3192 = vadd.f32 %v2805, %v3064
        %v3193 = vadd.f32 %v2806, %v3065
        %v3194 = vadd.f32 %v2807, %v3066
        %v3195 = vadd.f32 %v2808, %v3067
        %v3196 = vadd.f32 %v2809, %v3068
        %v3197 = vadd.f32 %v2810, %v3069
        %v3198 = vadd.f32 %v2811, %v3070
        %v3199 = vadd.f32 %v2812, %v3071
        %v3200 = vadd.f32 %v2813, %v3072
        %v3201 = vadd.f32 %v2814, %v3073
        %v3202 = vadd.f32 %v2815, %v3074
        %v3203 = vadd.f32 %v2816, %v3075
        %v3204 = vadd.f32 %v2817, %v3076
        %v3205 = vadd.f32 %v2818, %v3077
        %v3206 = vadd.f32 %v2819, %v3078
        %v3207 = vadd.f32 %v2820, %v3079
        %v3208 = vadd.f32 %v2821, %v3080
        %v3209 = vadd.f32 %v2822, %v3081
        %v3210 = vadd.f32 %v2823, %v3082
        %v3211 = vadd.f32 %v2824, %v3083
        %v3212 = vadd.f32 %v2825, %v3084
        %v3213 = vadd.f32 %v2826, %v3085
        %v3214 = vadd.f32 %v2827, %v3086
        %v3215 = vadd.f32 %v2828, %v3087
        %v3216 = vadd.f32 %v2829, %v3088
        %v3217 = vadd.f32 %v2830, %v3089
        %v3218 = vadd.f32 %v2831, %v3090
        %v3219 = vadd.f32 %v2832, %v3091
        %v3220 = vadd.f32 %v2833, %v3092
        %v3221 = vadd.f32 %v2834, %v3093
        %v3222 = vadd.f32 %v2835, %v3094
        %v3223 = vadd.f32 %v2836, %v3095
        %v3224 = vadd.f32 %v2837, %v3096
        %v3225 = vadd.f32 %v2838, %v3097
        %v3226 = vadd.f32 %v2839, %v3098
        %v3227 = vadd.f32 %v2840, %v3099
        %v3228 = vadd.f32 %v2841, %v3100
        %v3229 = vadd.f32 %v2842, %v3101
        %v3230 = vadd.f32 %v2843, %v3102
        %v3231 = vadd.f32 %v2844, %v3103
        %v3232 = vadd.f32 %v2845, %v3104
        %v3233 = vadd.f32 %v2846, %v3105
        %v3234 = vadd.f32 %v2847, %v3106
        %v3235 = vadd.f32 %v2848, %v3107
        %v3236 = vadd.f32 %v2849, %v3108
        %v3237 = vadd.f32 %v2850, %v3109
        %v3238 = vadd.f32 %v2851, %v3110
        %v3239 = vadd.f32 %v2852, %v3111
        %v3240 = vadd.f32 %v2853, %v3112
        %v3241 = vadd.f32 %v2854, %v3113
        %v3242 = vadd.f32 %v2855, %v3114
        %v3243 = vadd.f32 %v2856, %v3115
        %v3244 = vadd.f32 %v2857, %v3116
        %v3245 = vadd.f32 %v2858, %v3117
        %v3246 = vadd.f32 %v2859, %v3118
        %v3247 = vadd.f32 %v2860, %v3119
        %v3248 = vadd.f32 %v2861, %v3120
        %v3249 = vadd.f32 %v2862, %v3121
        %v3250 = vadd.f32 %v2863, %v3122
        %v3251 = vadd.f32 %v2864, %v3123
        %v3252 = vadd.f32 %v2865, %v3124
        %v3253 = vadd.f32 %v2866, %v3125
        %v3254 = vadd.f32 %v2867, %v3126
        %v3255 = vadd.f32 %v2868, %v3127
        %v3256 = vadd.f32 %v2869, %v3128
        %v3257 = vadd.f32 %v2870, %v3129
        %v3258 = vadd.f32 %v2871, %v3130
        %v3259 = vadd.f32 %v2872, %v3131
        %v3260 = vadd.f32 %v2873, %v3132
        %v3261 = vadd.f32 %v2874, %v3133
        %v3262 = vadd.f32 %v2875, %v3134
        %v3263 = vadd.f32 %v2876, %v3135
        %v3264 = vadd.f32 %v2877, %v3136
        %v3265 = vadd.f32 %v2878, %v3137
        %v3266 = vadd.f32 %v2879, %v3138
        %v3267 = vadd.f32 %v2880, %v3139
        %v3268 = vadd.f32 %v2881, %v3140
        %v3269 = vadd.f32 %v2882, %v3141
        %v3270 = vadd.f32 %v2883, %v3142
        %v3271 = vadd.f32 %v2884, %v3143
        %v3272 = vadd.f32 %v2885, %v3144
        %v3273 = vadd.f32 %v2886, %v3145
        %v3274 = vadd.f32 %v2887, %v3146
        %v3275 = vadd.f32 %v2888, %v3147
        %v3276 = vadd.f32 %v2889, %v3148
        %v3277 = vadd.f32 %v2890, %v3149
        %v3278 = vadd.f32 %v2891, %v3150
        %v3279 = vadd.f32 %v2892, %v3151
        %v3280 = vadd.f32 %v2893, %v3152
        %v3281 = vadd.f32 %v2894, %v3153
        %v3282 = vadd.f32 %v2895, %v3154
        %v3283 = vadd.f32 %v2896, %v3155
        %v3284 = vadd.f32 %v2897, %v3156
        %v3285 = vadd.f32 %v2898, %v3157
        %v3286 = vadd.f32 %v2899, %v3158
        %v3287 = vadd.f32 %v2900, %v3159
        %v3288 = vadd.f32 %v2901, %v3160
        %v3289 = vadd.f32 %v2902, %v3161
        %v3290 = vadd.f32 %v2903, %v3162
        %v3291 = vadd.f32 %v2904, %v3163
        %v3292 = vadd.f32 %v2905, %v3164
        %v3293 = vadd.f32 %v2906, %v3165
        %v3294 = vadd.f32 %v2907, %v3166
        %v3295 = vadd.f32 %v2908, %v3167
        %v3296 = vadd.f32 %v2909, %v3168
        %v3297 = vadd.f32 %v2910, %v3169
        %v3298 = vadd.f32 %v2911, %v3170
        %v3299 = vadd.f32 %v2912, %v3171
        %v3300 = vadd.f32 %v2913, %v3172
        %v3301 = vadd.f32 %v2914, %v3173
        %v3302 = vadd.f32 %v2915, %v3174
        %v3303 = vadd.f32 %v2916, %v3175
        %v3304 = vadd.f32 %v2917, %v3176
        %v3305 = vadd.f32 %v2918, %v3177
        %v3306 = vadd.f32 %v2919, %v3178
        %v3307 = vadd.f32 %v2920, %v3179
        %v3308 = vadd.f32 %v2921, %v3180
        %s3309 = sadd.s32 2, %s2535
        %s3310 = scalar_lea.vmem [#allocation7], %s3309
        %v3311 = vld [vmem:[%s3310] sm:$0x1]
        %v3312 = vld [vmem:[%s3310 + $0x1] sm:$0x1]
        %v3313 = vld [vmem:[%s3310 + $0x2] sm:$0x1]
        %v3314 = vld [vmem:[%s3310 + $0x3] sm:$0x1]
        %v3315 = vld [vmem:[%s3310 + $0x4] sm:$0x1]
        %v3316 = vld [vmem:[%s3310 + $0x5] sm:$0x1]
        %v3317 = vld [vmem:[%s3310 + $0x6] sm:$0x1]
        %v3318 = vld [vmem:[%s3310 + $0x7] sm:$0x1]
        %v3319 = vld [vmem:[%s3310 + $0x8] sm:$0x1]
        %v3320 = vld [vmem:[%s3310 + $0x9] sm:$0x1]
        %v3321 = vld [vmem:[%s3310 + $0xa] sm:$0x1]
        %v3322 = vld [vmem:[%s3310 + $0xb] sm:$0x1]
        %v3323 = vld [vmem:[%s3310 + $0xc] sm:$0x1]
        %v3324 = vld [vmem:[%s3310 + $0xd] sm:$0x1]
        %v3325 = vld [vmem:[%s3310 + $0xe] sm:$0x1]
        %v3326 = vld [vmem:[%s3310 + $0xf] sm:$0x1]
        %v3327 = vld [vmem:[%s3310 + $0x12] sm:$0x1]
        %v3328 = vld [vmem:[%s3310 + $0x13] sm:$0x1]
        %v3329 = vld [vmem:[%s3310 + $0x14] sm:$0x1]
        %v3330 = vld [vmem:[%s3310 + $0x15] sm:$0x1]
        %v3331 = vld [vmem:[%s3310 + $0x16] sm:$0x1]
        %v3332 = vld [vmem:[%s3310 + $0x17] sm:$0x1]
        %v3333 = vld [vmem:[%s3310 + $0x18] sm:$0x1]
        %v3334 = vld [vmem:[%s3310 + $0x19] sm:$0x1]
        %v3335 = vld [vmem:[%s3310 + $0x1a] sm:$0x1]
        %v3336 = vld [vmem:[%s3310 + $0x1b] sm:$0x1]
        %v3337 = vld [vmem:[%s3310 + $0x1c] sm:$0x1]
        %v3338 = vld [vmem:[%s3310 + $0x1d] sm:$0x1]
        %v3339 = vld [vmem:[%s3310 + $0x1e] sm:$0x1]
        %v3340 = vld [vmem:[%s3310 + $0x1f] sm:$0x1]
        %v3341 = vld [vmem:[%s3310 + $0x20] sm:$0x1]
        %v3342 = vld [vmem:[%s3310 + $0x21] sm:$0x1]
        %v3343 = vld [vmem:[%s3310 + $0x24] sm:$0x1]
        %v3344 = vld [vmem:[%s3310 + $0x25] sm:$0x1]
        %v3345 = vld [vmem:[%s3310 + $0x26] sm:$0x1]
        %v3346 = vld [vmem:[%s3310 + $0x27] sm:$0x1]
        %v3347 = vld [vmem:[%s3310 + $0x28] sm:$0x1]
        %v3348 = vld [vmem:[%s3310 + $0x29] sm:$0x1]
        %v3349 = vld [vmem:[%s3310 + $0x2a] sm:$0x1]
        %v3350 = vld [vmem:[%s3310 + $0x2b] sm:$0x1]
        %v3351 = vld [vmem:[%s3310 + $0x2c] sm:$0x1]
        %v3352 = vld [vmem:[%s3310 + $0x2d] sm:$0x1]
        %v3353 = vld [vmem:[%s3310 + $0x2e] sm:$0x1]
        %v3354 = vld [vmem:[%s3310 + $0x2f] sm:$0x1]
        %v3355 = vld [vmem:[%s3310 + $0x30] sm:$0x1]
        %v3356 = vld [vmem:[%s3310 + $0x31] sm:$0x1]
        %v3357 = vld [vmem:[%s3310 + $0x32] sm:$0x1]
        %v3358 = vld [vmem:[%s3310 + $0x33] sm:$0x1]
        %v3359 = vld [vmem:[%s3310 + $0x36] sm:$0x1]
        %v3360 = vld [vmem:[%s3310 + $0x37] sm:$0x1]
        %v3361 = vld [vmem:[%s3310 + $0x38] sm:$0x1]
        %v3362 = vld [vmem:[%s3310 + $0x39] sm:$0x1]
        %v3363 = vld [vmem:[%s3310 + $0x3a] sm:$0x1]
        %v3364 = vld [vmem:[%s3310 + $0x3b] sm:$0x1]
        %v3365 = vld [vmem:[%s3310 + $0x3c] sm:$0x1]
        %v3366 = vld [vmem:[%s3310 + $0x3d] sm:$0x1]
        %v3367 = vld [vmem:[%s3310 + $0x3e] sm:$0x1]
        %v3368 = vld [vmem:[%s3310 + $0x3f] sm:$0x1]
        %v3369 = vld [vmem:[%s3310 + $0x40] sm:$0x1]
        %v3370 = vld [vmem:[%s3310 + $0x41] sm:$0x1]
        %v3371 = vld [vmem:[%s3310 + $0x42] sm:$0x1]
        %v3372 = vld [vmem:[%s3310 + $0x43] sm:$0x1]
        %v3373 = vld [vmem:[%s3310 + $0x44] sm:$0x1]
        %v3374 = vld [vmem:[%s3310 + $0x45] sm:$0x1]
        %v3375 = vld [vmem:[%s3310 + $0x48] sm:$0x1]
        %v3376 = vld [vmem:[%s3310 + $0x49] sm:$0x1]
        %v3377 = vld [vmem:[%s3310 + $0x4a] sm:$0x1]
        %v3378 = vld [vmem:[%s3310 + $0x4b] sm:$0x1]
        %v3379 = vld [vmem:[%s3310 + $0x4c] sm:$0x1]
        %v3380 = vld [vmem:[%s3310 + $0x4d] sm:$0x1]
        %v3381 = vld [vmem:[%s3310 + $0x4e] sm:$0x1]
        %v3382 = vld [vmem:[%s3310 + $0x4f] sm:$0x1]
        %v3383 = vld [vmem:[%s3310 + $0x50] sm:$0x1]
        %v3384 = vld [vmem:[%s3310 + $0x51] sm:$0x1]
        %v3385 = vld [vmem:[%s3310 + $0x52] sm:$0x1]
        %v3386 = vld [vmem:[%s3310 + $0x53] sm:$0x1]
        %v3387 = vld [vmem:[%s3310 + $0x54] sm:$0x1]
        %v3388 = vld [vmem:[%s3310 + $0x55] sm:$0x1]
        %v3389 = vld [vmem:[%s3310 + $0x56] sm:$0x1]
        %v3390 = vld [vmem:[%s3310 + $0x57] sm:$0x1]
        %v3391 = vld [vmem:[%s3310 + $0x5a] sm:$0x1]
        %v3392 = vld [vmem:[%s3310 + $0x5b] sm:$0x1]
        %v3393 = vld [vmem:[%s3310 + $0x5c] sm:$0x1]
        %v3394 = vld [vmem:[%s3310 + $0x5d] sm:$0x1]
        %v3395 = vld [vmem:[%s3310 + $0x5e] sm:$0x1]
        %v3396 = vld [vmem:[%s3310 + $0x5f] sm:$0x1]
        %v3397 = vld [vmem:[%s3310 + $0x60] sm:$0x1]
        %v3398 = vld [vmem:[%s3310 + $0x61] sm:$0x1]
        %v3399 = vld [vmem:[%s3310 + $0x62] sm:$0x1]
        %v3400 = vld [vmem:[%s3310 + $0x63] sm:$0x1]
        %v3401 = vld [vmem:[%s3310 + $0x64] sm:$0x1]
        %v3402 = vld [vmem:[%s3310 + $0x65] sm:$0x1]
        %v3403 = vld [vmem:[%s3310 + $0x66] sm:$0x1]
        %v3404 = vld [vmem:[%s3310 + $0x67] sm:$0x1]
        %v3405 = vld [vmem:[%s3310 + $0x68] sm:$0x1]
        %v3406 = vld [vmem:[%s3310 + $0x69] sm:$0x1]
        %v3407 = vld [vmem:[%s3310 + $0x6c] sm:$0x1]
        %v3408 = vld [vmem:[%s3310 + $0x6d] sm:$0x1]
        %v3409 = vld [vmem:[%s3310 + $0x6e] sm:$0x1]
        %v3410 = vld [vmem:[%s3310 + $0x6f] sm:$0x1]
        %v3411 = vld [vmem:[%s3310 + $0x70] sm:$0x1]
        %v3412 = vld [vmem:[%s3310 + $0x71] sm:$0x1]
        %v3413 = vld [vmem:[%s3310 + $0x72] sm:$0x1]
        %v3414 = vld [vmem:[%s3310 + $0x73] sm:$0x1]
        %v3415 = vld [vmem:[%s3310 + $0x74] sm:$0x1]
        %v3416 = vld [vmem:[%s3310 + $0x75] sm:$0x1]
        %v3417 = vld [vmem:[%s3310 + $0x76] sm:$0x1]
        %v3418 = vld [vmem:[%s3310 + $0x77] sm:$0x1]
        %v3419 = vld [vmem:[%s3310 + $0x78] sm:$0x1]
        %v3420 = vld [vmem:[%s3310 + $0x79] sm:$0x1]
        %v3421 = vld [vmem:[%s3310 + $0x7a] sm:$0x1]
        %v3422 = vld [vmem:[%s3310 + $0x7b] sm:$0x1]
        %v3423 = vld [vmem:[%s3310 + $0x7e] sm:$0x1]
        %v3424 = vld [vmem:[%s3310 + $0x7f] sm:$0x1]
        %v3425 = vld [vmem:[%s3310 + $0x80] sm:$0x1]
        %v3426 = vld [vmem:[%s3310 + $0x81] sm:$0x1]
        %v3427 = vld [vmem:[%s3310 + $0x82] sm:$0x1]
        %v3428 = vld [vmem:[%s3310 + $0x83] sm:$0x1]
        %v3429 = vld [vmem:[%s3310 + $0x84] sm:$0x1]
        %v3430 = vld [vmem:[%s3310 + $0x85] sm:$0x1]
        %v3431 = vld [vmem:[%s3310 + $0x86] sm:$0x1]
        %v3432 = vld [vmem:[%s3310 + $0x87] sm:$0x1]
        %v3433 = vld [vmem:[%s3310 + $0x88] sm:$0x1]
        %v3434 = vld [vmem:[%s3310 + $0x89] sm:$0x1]
        %v3435 = vld [vmem:[%s3310 + $0x8a] sm:$0x1]
        %v3436 = vld [vmem:[%s3310 + $0x8b] sm:$0x1]
        %v3437 = vld [vmem:[%s3310 + $0x8c] sm:$0x1]
        %v3438 = vld [vmem:[%s3310 + $0x8d] sm:$0x1]
        %v3439 = vstv %s208
        %v3440 = vmul.f32 %v3439, %v3311
        %v3441 = vmul.f32 %v3439, %v3312
        %v3442 = vmul.f32 %v3439, %v3313
        %v3443 = vmul.f32 %v3439, %v3314
        %v3444 = vmul.f32 %v3439, %v3315
        %v3445 = vmul.f32 %v3439, %v3316
        %v3446 = vmul.f32 %v3439, %v3317
        %v3447 = vmul.f32 %v3439, %v3318
        %v3448 = vmul.f32 %v3439, %v3319
        %v3449 = vmul.f32 %v3439, %v3320
        %v3450 = vmul.f32 %v3439, %v3321
        %v3451 = vmul.f32 %v3439, %v3322
        %v3452 = vmul.f32 %v3439, %v3323
        %v3453 = vmul.f32 %v3439, %v3324
        %v3454 = vmul.f32 %v3439, %v3325
        %v3455 = vmul.f32 %v3439, %v3326
        %v3456 = vmul.f32 %v3439, %v3327
        %v3457 = vmul.f32 %v3439, %v3328
        %v3458 = vmul.f32 %v3439, %v3329
        %v3459 = vmul.f32 %v3439, %v3330
        %v3460 = vmul.f32 %v3439, %v3331
        %v3461 = vmul.f32 %v3439, %v3332
        %v3462 = vmul.f32 %v3439, %v3333
        %v3463 = vmul.f32 %v3439, %v3334
        %v3464 = vmul.f32 %v3439, %v3335
        %v3465 = vmul.f32 %v3439, %v3336
        %v3466 = vmul.f32 %v3439, %v3337
        %v3467 = vmul.f32 %v3439, %v3338
        %v3468 = vmul.f32 %v3439, %v3339
        %v3469 = vmul.f32 %v3439, %v3340
        %v3470 = vmul.f32 %v3439, %v3341
        %v3471 = vmul.f32 %v3439, %v3342
        %v3472 = vmul.f32 %v3439, %v3343
        %v3473 = vmul.f32 %v3439, %v3344
        %v3474 = vmul.f32 %v3439, %v3345
        %v3475 = vmul.f32 %v3439, %v3346
        %v3476 = vmul.f32 %v3439, %v3347
        %v3477 = vmul.f32 %v3439, %v3348
        %v3478 = vmul.f32 %v3439, %v3349
        %v3479 = vmul.f32 %v3439, %v3350
        %v3480 = vmul.f32 %v3439, %v3351
        %v3481 = vmul.f32 %v3439, %v3352
        %v3482 = vmul.f32 %v3439, %v3353
        %v3483 = vmul.f32 %v3439, %v3354
        %v3484 = vmul.f32 %v3439, %v3355
        %v3485 = vmul.f32 %v3439, %v3356
        %v3486 = vmul.f32 %v3439, %v3357
        %v3487 = vmul.f32 %v3439, %v3358
        %v3488 = vmul.f32 %v3439, %v3359
        %v3489 = vmul.f32 %v3439, %v3360
        %v3490 = vmul.f32 %v3439, %v3361
        %v3491 = vmul.f32 %v3439, %v3362
        %v3492 = vmul.f32 %v3439, %v3363
        %v3493 = vmul.f32 %v3439, %v3364
        %v3494 = vmul.f32 %v3439, %v3365
        %v3495 = vmul.f32 %v3439, %v3366
        %v3496 = vmul.f32 %v3439, %v3367
        %v3497 = vmul.f32 %v3439, %v3368
        %v3498 = vmul.f32 %v3439, %v3369
        %v3499 = vmul.f32 %v3439, %v3370
        %v3500 = vmul.f32 %v3439, %v3371
        %v3501 = vmul.f32 %v3439, %v3372
        %v3502 = vmul.f32 %v3439, %v3373
        %v3503 = vmul.f32 %v3439, %v3374
        %v3504 = vmul.f32 %v3439, %v3375
        %v3505 = vmul.f32 %v3439, %v3376
        %v3506 = vmul.f32 %v3439, %v3377
        %v3507 = vmul.f32 %v3439, %v3378
        %v3508 = vmul.f32 %v3439, %v3379
        %v3509 = vmul.f32 %v3439, %v3380
        %v3510 = vmul.f32 %v3439, %v3381
        %v3511 = vmul.f32 %v3439, %v3382
        %v3512 = vmul.f32 %v3439, %v3383
        %v3513 = vmul.f32 %v3439, %v3384
        %v3514 = vmul.f32 %v3439, %v3385
        %v3515 = vmul.f32 %v3439, %v3386
        %v3516 = vmul.f32 %v3439, %v3387
        %v3517 = vmul.f32 %v3439, %v3388
        %v3518 = vmul.f32 %v3439, %v3389
        %v3519 = vmul.f32 %v3439, %v3390
        %v3520 = vmul.f32 %v3439, %v3391
        %v3521 = vmul.f32 %v3439, %v3392
        %v3522 = vmul.f32 %v3439, %v3393
        %v3523 = vmul.f32 %v3439, %v3394
        %v3524 = vmul.f32 %v3439, %v3395
        %v3525 = vmul.f32 %v3439, %v3396
        %v3526 = vmul.f32 %v3439, %v3397
        %v3527 = vmul.f32 %v3439, %v3398
        %v3528 = vmul.f32 %v3439, %v3399
        %v3529 = vmul.f32 %v3439, %v3400
        %v3530 = vmul.f32 %v3439, %v3401
        %v3531 = vmul.f32 %v3439, %v3402
        %v3532 = vmul.f32 %v3439, %v3403
        %v3533 = vmul.f32 %v3439, %v3404
        %v3534 = vmul.f32 %v3439, %v3405
        %v3535 = vmul.f32 %v3439, %v3406
        %v3536 = vmul.f32 %v3439, %v3407
        %v3537 = vmul.f32 %v3439, %v3408
        %v3538 = vmul.f32 %v3439, %v3409
        %v3539 = vmul.f32 %v3439, %v3410
        %v3540 = vmul.f32 %v3439, %v3411
        %v3541 = vmul.f32 %v3439, %v3412
        %v3542 = vmul.f32 %v3439, %v3413
        %v3543 = vmul.f32 %v3439, %v3414
        %v3544 = vmul.f32 %v3439, %v3415
        %v3545 = vmul.f32 %v3439, %v3416
        %v3546 = vmul.f32 %v3439, %v3417
        %v3547 = vmul.f32 %v3439, %v3418
        %v3548 = vmul.f32 %v3439, %v3419
        %v3549 = vmul.f32 %v3439, %v3420
        %v3550 = vmul.f32 %v3439, %v3421
        %v3551 = vmul.f32 %v3439, %v3422
        %v3552 = vmul.f32 %v3439, %v3423
        %v3553 = vmul.f32 %v3439, %v3424
        %v3554 = vmul.f32 %v3439, %v3425
        %v3555 = vmul.f32 %v3439, %v3426
        %v3556 = vmul.f32 %v3439, %v3427
        %v3557 = vmul.f32 %v3439, %v3428
        %v3558 = vmul.f32 %v3439, %v3429
        %v3559 = vmul.f32 %v3439, %v3430
        %v3560 = vmul.f32 %v3439, %v3431
        %v3561 = vmul.f32 %v3439, %v3432
        %v3562 = vmul.f32 %v3439, %v3433
        %v3563 = vmul.f32 %v3439, %v3434
        %v3564 = vmul.f32 %v3439, %v3435
        %v3565 = vmul.f32 %v3439, %v3436
        %v3566 = vmul.f32 %v3439, %v3437
        %v3567 = vmul.f32 %v3439, %v3438
        %v3568 = vadd.f32 %v3181, %v3440
        %v3569 = vadd.f32 %v3182, %v3441
        %v3570 = vadd.f32 %v3183, %v3442
        %v3571 = vadd.f32 %v3184, %v3443
        %v3572 = vadd.f32 %v3185, %v3444
        %v3573 = vadd.f32 %v3186, %v3445
        %v3574 = vadd.f32 %v3187, %v3446
        %v3575 = vadd.f32 %v3188, %v3447
        %v3576 = vadd.f32 %v3189, %v3448
        %v3577 = vadd.f32 %v3190, %v3449
        %v3578 = vadd.f32 %v3191, %v3450
        %v3579 = vadd.f32 %v3192, %v3451
        %v3580 = vadd.f32 %v3193, %v3452
        %v3581 = vadd.f32 %v3194, %v3453
        %v3582 = vadd.f32 %v3195, %v3454
        %v3583 = vadd.f32 %v3196, %v3455
        %v3584 = vadd.f32 %v3197, %v3456
        %v3585 = vadd.f32 %v3198, %v3457
        %v3586 = vadd.f32 %v3199, %v3458
        %v3587 = vadd.f32 %v3200, %v3459
        %v3588 = vadd.f32 %v3201, %v3460
        %v3589 = vadd.f32 %v3202, %v3461
        %v3590 = vadd.f32 %v3203, %v3462
        %v3591 = vadd.f32 %v3204, %v3463
        %v3592 = vadd.f32 %v3205, %v3464
        %v3593 = vadd.f32 %v3206, %v3465
        %v3594 = vadd.f32 %v3207, %v3466
        %v3595 = vadd.f32 %v3208, %v3467
        %v3596 = vadd.f32 %v3209, %v3468
        %v3597 = vadd.f32 %v3210, %v3469
        %v3598 = vadd.f32 %v3211, %v3470
        %v3599 = vadd.f32 %v3212, %v3471
        %v3600 = vadd.f32 %v3213, %v3472
        %v3601 = vadd.f32 %v3214, %v3473
        %v3602 = vadd.f32 %v3215, %v3474
        %v3603 = vadd.f32 %v3216, %v3475
        %v3604 = vadd.f32 %v3217, %v3476
        %v3605 = vadd.f32 %v3218, %v3477
        %v3606 = vadd.f32 %v3219, %v3478
        %v3607 = vadd.f32 %v3220, %v3479
        %v3608 = vadd.f32 %v3221, %v3480
        %v3609 = vadd.f32 %v3222, %v3481
        %v3610 = vadd.f32 %v3223, %v3482
        %v3611 = vadd.f32 %v3224, %v3483
        %v3612 = vadd.f32 %v3225, %v3484
        %v3613 = vadd.f32 %v3226, %v3485
        %v3614 = vadd.f32 %v3227, %v3486
        %v3615 = vadd.f32 %v3228, %v3487
        %v3616 = vadd.f32 %v3229, %v3488
        %v3617 = vadd.f32 %v3230, %v3489
        %v3618 = vadd.f32 %v3231, %v3490
        %v3619 = vadd.f32 %v3232, %v3491
        %v3620 = vadd.f32 %v3233, %v3492
        %v3621 = vadd.f32 %v3234, %v3493
        %v3622 = vadd.f32 %v3235, %v3494
        %v3623 = vadd.f32 %v3236, %v3495
        %v3624 = vadd.f32 %v3237, %v3496
        %v3625 = vadd.f32 %v3238, %v3497
        %v3626 = vadd.f32 %v3239, %v3498
        %v3627 = vadd.f32 %v3240, %v3499
        %v3628 = vadd.f32 %v3241, %v3500
        %v3629 = vadd.f32 %v3242, %v3501
        %v3630 = vadd.f32 %v3243, %v3502
        %v3631 = vadd.f32 %v3244, %v3503
        %v3632 = vadd.f32 %v3245, %v3504
        %v3633 = vadd.f32 %v3246, %v3505
        %v3634 = vadd.f32 %v3247, %v3506
        %v3635 = vadd.f32 %v3248, %v3507
        %v3636 = vadd.f32 %v3249, %v3508
        %v3637 = vadd.f32 %v3250, %v3509
        %v3638 = vadd.f32 %v3251, %v3510
        %v3639 = vadd.f32 %v3252, %v3511
        %v3640 = vadd.f32 %v3253, %v3512
        %v3641 = vadd.f32 %v3254, %v3513
        %v3642 = vadd.f32 %v3255, %v3514
        %v3643 = vadd.f32 %v3256, %v3515
        %v3644 = vadd.f32 %v3257, %v3516
        %v3645 = vadd.f32 %v3258, %v3517
        %v3646 = vadd.f32 %v3259, %v3518
        %v3647 = vadd.f32 %v3260, %v3519
        %v3648 = vadd.f32 %v3261, %v3520
        %v3649 = vadd.f32 %v3262, %v3521
        %v3650 = vadd.f32 %v3263, %v3522
        %v3651 = vadd.f32 %v3264, %v3523
        %v3652 = vadd.f32 %v3265, %v3524
        %v3653 = vadd.f32 %v3266, %v3525
        %v3654 = vadd.f32 %v3267, %v3526
        %v3655 = vadd.f32 %v3268, %v3527
        %v3656 = vadd.f32 %v3269, %v3528
        %v3657 = vadd.f32 %v3270, %v3529
        %v3658 = vadd.f32 %v3271, %v3530
        %v3659 = vadd.f32 %v3272, %v3531
        %v3660 = vadd.f32 %v3273, %v3532
        %v3661 = vadd.f32 %v3274, %v3533
        %v3662 = vadd.f32 %v3275, %v3534
        %v3663 = vadd.f32 %v3276, %v3535
        %v3664 = vadd.f32 %v3277, %v3536
        %v3665 = vadd.f32 %v3278, %v3537
        %v3666 = vadd.f32 %v3279, %v3538
        %v3667 = vadd.f32 %v3280, %v3539
        %v3668 = vadd.f32 %v3281, %v3540
        %v3669 = vadd.f32 %v3282, %v3541
        %v3670 = vadd.f32 %v3283, %v3542
        %v3671 = vadd.f32 %v3284, %v3543
        %v3672 = vadd.f32 %v3285, %v3544
        %v3673 = vadd.f32 %v3286, %v3545
        %v3674 = vadd.f32 %v3287, %v3546
        %v3675 = vadd.f32 %v3288, %v3547
        %v3676 = vadd.f32 %v3289, %v3548
        %v3677 = vadd.f32 %v3290, %v3549
        %v3678 = vadd.f32 %v3291, %v3550
        %v3679 = vadd.f32 %v3292, %v3551
        %v3680 = vadd.f32 %v3293, %v3552
        %v3681 = vadd.f32 %v3294, %v3553
        %v3682 = vadd.f32 %v3295, %v3554
        %v3683 = vadd.f32 %v3296, %v3555
        %v3684 = vadd.f32 %v3297, %v3556
        %v3685 = vadd.f32 %v3298, %v3557
        %v3686 = vadd.f32 %v3299, %v3558
        %v3687 = vadd.f32 %v3300, %v3559
        %v3688 = vadd.f32 %v3301, %v3560
        %v3689 = vadd.f32 %v3302, %v3561
        %v3690 = vadd.f32 %v3303, %v3562
        %v3691 = vadd.f32 %v3304, %v3563
        %v3692 = vadd.f32 %v3305, %v3564
        %v3693 = vadd.f32 %v3306, %v3565
        %v3694 = vadd.f32 %v3307, %v3566
        %v3695 = vadd.f32 %v3308, %v3567
        %v3696 = vmax.f32 %v3568, 0.0
        %v3697 = vmax.f32 %v3569, 0.0
        %v3698 = vmax.f32 %v3570, 0.0
        %v3699 = vmax.f32 %v3571, 0.0
        %v3700 = vmax.f32 %v3572, 0.0
        %v3701 = vmax.f32 %v3573, 0.0
        %v3702 = vmax.f32 %v3574, 0.0
        %v3703 = vmax.f32 %v3575, 0.0
        %v3704 = vmax.f32 %v3576, 0.0
        %v3705 = vmax.f32 %v3577, 0.0
        %v3706 = vmax.f32 %v3578, 0.0
        %v3707 = vmax.f32 %v3579, 0.0
        %v3708 = vmax.f32 %v3580, 0.0
        %v3709 = vmax.f32 %v3581, 0.0
        %v3710 = vmax.f32 %v3582, 0.0
        %v3711 = vmax.f32 %v3583, 0.0
        %v3712 = vmax.f32 %v3584, 0.0
        %v3713 = vmax.f32 %v3585, 0.0
        %v3714 = vmax.f32 %v3586, 0.0
        %v3715 = vmax.f32 %v3587, 0.0
        %v3716 = vmax.f32 %v3588, 0.0
        %v3717 = vmax.f32 %v3589, 0.0
        %v3718 = vmax.f32 %v3590, 0.0
        %v3719 = vmax.f32 %v3591, 0.0
        %v3720 = vmax.f32 %v3592, 0.0
        %v3721 = vmax.f32 %v3593, 0.0
        %v3722 = vmax.f32 %v3594, 0.0
        %v3723 = vmax.f32 %v3595, 0.0
        %v3724 = vmax.f32 %v3596, 0.0
        %v3725 = vmax.f32 %v3597, 0.0
        %v3726 = vmax.f32 %v3598, 0.0
        %v3727 = vmax.f32 %v3599, 0.0
        %v3728 = vmax.f32 %v3600, 0.0
        %v3729 = vmax.f32 %v3601, 0.0
        %v3730 = vmax.f32 %v3602, 0.0
        %v3731 = vmax.f32 %v3603, 0.0
        %v3732 = vmax.f32 %v3604, 0.0
        %v3733 = vmax.f32 %v3605, 0.0
        %v3734 = vmax.f32 %v3606, 0.0
        %v3735 = vmax.f32 %v3607, 0.0
        %v3736 = vmax.f32 %v3608, 0.0
        %v3737 = vmax.f32 %v3609, 0.0
        %v3738 = vmax.f32 %v3610, 0.0
        %v3739 = vmax.f32 %v3611, 0.0
        %v3740 = vmax.f32 %v3612, 0.0
        %v3741 = vmax.f32 %v3613, 0.0
        %v3742 = vmax.f32 %v3614, 0.0
        %v3743 = vmax.f32 %v3615, 0.0
        %v3744 = vmax.f32 %v3616, 0.0
        %v3745 = vmax.f32 %v3617, 0.0
        %v3746 = vmax.f32 %v3618, 0.0
        %v3747 = vmax.f32 %v3619, 0.0
        %v3748 = vmax.f32 %v3620, 0.0
        %v3749 = vmax.f32 %v3621, 0.0
        %v3750 = vmax.f32 %v3622, 0.0
        %v3751 = vmax.f32 %v3623, 0.0
        %v3752 = vmax.f32 %v3624, 0.0
        %v3753 = vmax.f32 %v3625, 0.0
        %v3754 = vmax.f32 %v3626, 0.0
        %v3755 = vmax.f32 %v3627, 0.0
        %v3756 = vmax.f32 %v3628, 0.0
        %v3757 = vmax.f32 %v3629, 0.0
        %v3758 = vmax.f32 %v3630, 0.0
        %v3759 = vmax.f32 %v3631, 0.0
        %v3760 = vmax.f32 %v3632, 0.0
        %v3761 = vmax.f32 %v3633, 0.0
        %v3762 = vmax.f32 %v3634, 0.0
        %v3763 = vmax.f32 %v3635, 0.0
        %v3764 = vmax.f32 %v3636, 0.0
        %v3765 = vmax.f32 %v3637, 0.0
        %v3766 = vmax.f32 %v3638, 0.0
        %v3767 = vmax.f32 %v3639, 0.0
        %v3768 = vmax.f32 %v3640, 0.0
        %v3769 = vmax.f32 %v3641, 0.0
        %v3770 = vmax.f32 %v3642, 0.0
        %v3771 = vmax.f32 %v3643, 0.0
        %v3772 = vmax.f32 %v3644, 0.0
        %v3773 = vmax.f32 %v3645, 0.0
        %v3774 = vmax.f32 %v3646, 0.0
        %v3775 = vmax.f32 %v3647, 0.0
        %v3776 = vmax.f32 %v3648, 0.0
        %v3777 = vmax.f32 %v3649, 0.0
        %v3778 = vmax.f32 %v3650, 0.0
        %v3779 = vmax.f32 %v3651, 0.0
        %v3780 = vmax.f32 %v3652, 0.0
        %v3781 = vmax.f32 %v3653, 0.0
        %v3782 = vmax.f32 %v3654, 0.0
        %v3783 = vmax.f32 %v3655, 0.0
        %v3784 = vmax.f32 %v3656, 0.0
        %v3785 = vmax.f32 %v3657, 0.0
        %v3786 = vmax.f32 %v3658, 0.0
        %v3787 = vmax.f32 %v3659, 0.0
        %v3788 = vmax.f32 %v3660, 0.0
        %v3789 = vmax.f32 %v3661, 0.0
        %v3790 = vmax.f32 %v3662, 0.0
        %v3791 = vmax.f32 %v3663, 0.0
        %v3792 = vmax.f32 %v3664, 0.0
        %v3793 = vmax.f32 %v3665, 0.0
        %v3794 = vmax.f32 %v3666, 0.0
        %v3795 = vmax.f32 %v3667, 0.0
        %v3796 = vmax.f32 %v3668, 0.0
        %v3797 = vmax.f32 %v3669, 0.0
        %v3798 = vmax.f32 %v3670, 0.0
        %v3799 = vmax.f32 %v3671, 0.0
        %v3800 = vmax.f32 %v3672, 0.0
        %v3801 = vmax.f32 %v3673, 0.0
        %v3802 = vmax.f32 %v3674, 0.0
        %v3803 = vmax.f32 %v3675, 0.0
        %v3804 = vmax.f32 %v3676, 0.0
        %v3805 = vmax.f32 %v3677, 0.0
        %v3806 = vmax.f32 %v3678, 0.0
        %v3807 = vmax.f32 %v3679, 0.0
        %v3808 = vmax.f32 %v3680, 0.0
        %v3809 = vmax.f32 %v3681, 0.0
        %v3810 = vmax.f32 %v3682, 0.0
        %v3811 = vmax.f32 %v3683, 0.0
        %v3812 = vmax.f32 %v3684, 0.0
        %v3813 = vmax.f32 %v3685, 0.0
        %v3814 = vmax.f32 %v3686, 0.0
        %v3815 = vmax.f32 %v3687, 0.0
        %v3816 = vmax.f32 %v3688, 0.0
        %v3817 = vmax.f32 %v3689, 0.0
        %v3818 = vmax.f32 %v3690, 0.0
        %v3819 = vmax.f32 %v3691, 0.0
        %v3820 = vmax.f32 %v3692, 0.0
        %v3821 = vmax.f32 %v3693, 0.0
        %v3822 = vmax.f32 %v3694, 0.0
        %v3823 = vmax.f32 %v3695, 0.0
        %3824 = vst [vmem:[%s197] sm:$0x1] %v3696
        %3825 = vst [vmem:[%s197 + $0x1] sm:$0x1] %v3697
        %3826 = vst [vmem:[%s197 + $0x2] sm:$0x1] %v3698
        %3827 = vst [vmem:[%s197 + $0x3] sm:$0x1] %v3699
        %3828 = vst [vmem:[%s197 + $0x4] sm:$0x1] %v3700
        %3829 = vst [vmem:[%s197 + $0x5] sm:$0x1] %v3701
        %3830 = vst [vmem:[%s197 + $0x6] sm:$0x1] %v3702
        %3831 = vst [vmem:[%s197 + $0x7] sm:$0x1] %v3703
        %3832 = vst [vmem:[%s197 + $0x8] sm:$0x1] %v3704
        %3833 = vst [vmem:[%s197 + $0x9] sm:$0x1] %v3705
        %3834 = vst [vmem:[%s197 + $0xa] sm:$0x1] %v3706
        %3835 = vst [vmem:[%s197 + $0xb] sm:$0x1] %v3707
        %3836 = vst [vmem:[%s197 + $0xc] sm:$0x1] %v3708
        %3837 = vst [vmem:[%s197 + $0xd] sm:$0x1] %v3709
        %3838 = vst [vmem:[%s197 + $0xe] sm:$0x1] %v3710
        %3839 = vst [vmem:[%s197 + $0xf] sm:$0x1] %v3711
        %3840 = vst [vmem:[%s197 + $0x10] sm:$0x1] %v3712
        %3841 = vst [vmem:[%s197 + $0x11] sm:$0x1] %v3713
        %3842 = vst [vmem:[%s197 + $0x12] sm:$0x1] %v3714
        %3843 = vst [vmem:[%s197 + $0x13] sm:$0x1] %v3715
        %3844 = vst [vmem:[%s197 + $0x14] sm:$0x1] %v3716
        %3845 = vst [vmem:[%s197 + $0x15] sm:$0x1] %v3717
        %3846 = vst [vmem:[%s197 + $0x16] sm:$0x1] %v3718
        %3847 = vst [vmem:[%s197 + $0x17] sm:$0x1] %v3719
        %3848 = vst [vmem:[%s197 + $0x18] sm:$0x1] %v3720
        %3849 = vst [vmem:[%s197 + $0x19] sm:$0x1] %v3721
        %3850 = vst [vmem:[%s197 + $0x1a] sm:$0x1] %v3722
        %3851 = vst [vmem:[%s197 + $0x1b] sm:$0x1] %v3723
        %3852 = vst [vmem:[%s197 + $0x1c] sm:$0x1] %v3724
        %3853 = vst [vmem:[%s197 + $0x1d] sm:$0x1] %v3725
        %3854 = vst [vmem:[%s197 + $0x1e] sm:$0x1] %v3726
        %3855 = vst [vmem:[%s197 + $0x1f] sm:$0x1] %v3727
        %3856 = vst [vmem:[%s197 + $0x20] sm:$0x1] %v3728
        %3857 = vst [vmem:[%s197 + $0x21] sm:$0x1] %v3729
        %3858 = vst [vmem:[%s197 + $0x22] sm:$0x1] %v3730
        %3859 = vst [vmem:[%s197 + $0x23] sm:$0x1] %v3731
        %3860 = vst [vmem:[%s197 + $0x24] sm:$0x1] %v3732
        %3861 = vst [vmem:[%s197 + $0x25] sm:$0x1] %v3733
        %3862 = vst [vmem:[%s197 + $0x26] sm:$0x1] %v3734
        %3863 = vst [vmem:[%s197 + $0x27] sm:$0x1] %v3735
        %3864 = vst [vmem:[%s197 + $0x28] sm:$0x1] %v3736
        %3865 = vst [vmem:[%s197 + $0x29] sm:$0x1] %v3737
        %3866 = vst [vmem:[%s197 + $0x2a] sm:$0x1] %v3738
        %3867 = vst [vmem:[%s197 + $0x2b] sm:$0x1] %v3739
        %3868 = vst [vmem:[%s197 + $0x2c] sm:$0x1] %v3740
        %3869 = vst [vmem:[%s197 + $0x2d] sm:$0x1] %v3741
        %3870 = vst [vmem:[%s197 + $0x2e] sm:$0x1] %v3742
        %3871 = vst [vmem:[%s197 + $0x2f] sm:$0x1] %v3743
        %3872 = vst [vmem:[%s197 + $0x30] sm:$0x1] %v3744
        %3873 = vst [vmem:[%s197 + $0x31] sm:$0x1] %v3745
        %3874 = vst [vmem:[%s197 + $0x32] sm:$0x1] %v3746
        %3875 = vst [vmem:[%s197 + $0x33] sm:$0x1] %v3747
        %3876 = vst [vmem:[%s197 + $0x34] sm:$0x1] %v3748
        %3877 = vst [vmem:[%s197 + $0x35] sm:$0x1] %v3749
        %3878 = vst [vmem:[%s197 + $0x36] sm:$0x1] %v3750
        %3879 = vst [vmem:[%s197 + $0x37] sm:$0x1] %v3751
        %3880 = vst [vmem:[%s197 + $0x38] sm:$0x1] %v3752
        %3881 = vst [vmem:[%s197 + $0x39] sm:$0x1] %v3753
        %3882 = vst [vmem:[%s197 + $0x3a] sm:$0x1] %v3754
        %3883 = vst [vmem:[%s197 + $0x3b] sm:$0x1] %v3755
        %3884 = vst [vmem:[%s197 + $0x3c] sm:$0x1] %v3756
        %3885 = vst [vmem:[%s197 + $0x3d] sm:$0x1] %v3757
        %3886 = vst [vmem:[%s197 + $0x3e] sm:$0x1] %v3758
        %3887 = vst [vmem:[%s197 + $0x3f] sm:$0x1] %v3759
        %3888 = vst [vmem:[%s197 + $0x40] sm:$0x1] %v3760
        %3889 = vst [vmem:[%s197 + $0x41] sm:$0x1] %v3761
        %3890 = vst [vmem:[%s197 + $0x42] sm:$0x1] %v3762
        %3891 = vst [vmem:[%s197 + $0x43] sm:$0x1] %v3763
        %3892 = vst [vmem:[%s197 + $0x44] sm:$0x1] %v3764
        %3893 = vst [vmem:[%s197 + $0x45] sm:$0x1] %v3765
        %3894 = vst [vmem:[%s197 + $0x46] sm:$0x1] %v3766
        %3895 = vst [vmem:[%s197 + $0x47] sm:$0x1] %v3767
        %3896 = vst [vmem:[%s197 + $0x48] sm:$0x1] %v3768
        %3897 = vst [vmem:[%s197 + $0x49] sm:$0x1] %v3769
        %3898 = vst [vmem:[%s197 + $0x4a] sm:$0x1] %v3770
        %3899 = vst [vmem:[%s197 + $0x4b] sm:$0x1] %v3771
        %3900 = vst [vmem:[%s197 + $0x4c] sm:$0x1] %v3772
        %3901 = vst [vmem:[%s197 + $0x4d] sm:$0x1] %v3773
        %3902 = vst [vmem:[%s197 + $0x4e] sm:$0x1] %v3774
        %3903 = vst [vmem:[%s197 + $0x4f] sm:$0x1] %v3775
        %3904 = vst [vmem:[%s197 + $0x50] sm:$0x1] %v3776
        %3905 = vst [vmem:[%s197 + $0x51] sm:$0x1] %v3777
        %3906 = vst [vmem:[%s197 + $0x52] sm:$0x1] %v3778
        %3907 = vst [vmem:[%s197 + $0x53] sm:$0x1] %v3779
        %3908 = vst [vmem:[%s197 + $0x54] sm:$0x1] %v3780
        %3909 = vst [vmem:[%s197 + $0x55] sm:$0x1] %v3781
        %3910 = vst [vmem:[%s197 + $0x56] sm:$0x1] %v3782
        %3911 = vst [vmem:[%s197 + $0x57] sm:$0x1] %v3783
        %3912 = vst [vmem:[%s197 + $0x58] sm:$0x1] %v3784
        %3913 = vst [vmem:[%s197 + $0x59] sm:$0x1] %v3785
        %3914 = vst [vmem:[%s197 + $0x5a] sm:$0x1] %v3786
        %3915 = vst [vmem:[%s197 + $0x5b] sm:$0x1] %v3787
        %3916 = vst [vmem:[%s197 + $0x5c] sm:$0x1] %v3788
        %3917 = vst [vmem:[%s197 + $0x5d] sm:$0x1] %v3789
        %3918 = vst [vmem:[%s197 + $0x5e] sm:$0x1] %v3790
        %3919 = vst [vmem:[%s197 + $0x5f] sm:$0x1] %v3791
        %3920 = vst [vmem:[%s197 + $0x60] sm:$0x1] %v3792
        %3921 = vst [vmem:[%s197 + $0x61] sm:$0x1] %v3793
        %3922 = vst [vmem:[%s197 + $0x62] sm:$0x1] %v3794
        %3923 = vst [vmem:[%s197 + $0x63] sm:$0x1] %v3795
        %3924 = vst [vmem:[%s197 + $0x64] sm:$0x1] %v3796
        %3925 = vst [vmem:[%s197 + $0x65] sm:$0x1] %v3797
        %3926 = vst [vmem:[%s197 + $0x66] sm:$0x1] %v3798
        %3927 = vst [vmem:[%s197 + $0x67] sm:$0x1] %v3799
        %3928 = vst [vmem:[%s197 + $0x68] sm:$0x1] %v3800
        %3929 = vst [vmem:[%s197 + $0x69] sm:$0x1] %v3801
        %3930 = vst [vmem:[%s197 + $0x6a] sm:$0x1] %v3802
        %3931 = vst [vmem:[%s197 + $0x6b] sm:$0x1] %v3803
        %3932 = vst [vmem:[%s197 + $0x6c] sm:$0x1] %v3804
        %3933 = vst [vmem:[%s197 + $0x6d] sm:$0x1] %v3805
        %3934 = vst [vmem:[%s197 + $0x6e] sm:$0x1] %v3806
        %3935 = vst [vmem:[%s197 + $0x6f] sm:$0x1] %v3807
        %3936 = vst [vmem:[%s197 + $0x70] sm:$0x1] %v3808
        %3937 = vst [vmem:[%s197 + $0x71] sm:$0x1] %v3809
        %3938 = vst [vmem:[%s197 + $0x72] sm:$0x1] %v3810
        %3939 = vst [vmem:[%s197 + $0x73] sm:$0x1] %v3811
        %3940 = vst [vmem:[%s197 + $0x74] sm:$0x1] %v3812
        %3941 = vst [vmem:[%s197 + $0x75] sm:$0x1] %v3813
        %3942 = vst [vmem:[%s197 + $0x76] sm:$0x1] %v3814
        %3943 = vst [vmem:[%s197 + $0x77] sm:$0x1] %v3815
        %3944 = vst [vmem:[%s197 + $0x78] sm:$0x1] %v3816
        %3945 = vst [vmem:[%s197 + $0x79] sm:$0x1] %v3817
        %3946 = vst [vmem:[%s197 + $0x7a] sm:$0x1] %v3818
        %3947 = vst [vmem:[%s197 + $0x7b] sm:$0x1] %v3819
        %3948 = vst [vmem:[%s197 + $0x7c] sm:$0x1] %v3820
        %3949 = vst [vmem:[%s197 + $0x7d] sm:$0x1] %v3821
        %3950 = vst [vmem:[%s197 + $0x7e] sm:$0x1] %v3822
        %3951 = vst [vmem:[%s197 + $0x7f] sm:$0x1] %v3823
        %s3952 = sand.u32 %s110, 1
        %s3953 = scalar_lea.sflag [#allocation5], %s3952
        %s3954 = sand.u32 %s110, 1
        %s3955 = smul.addr %s3954, 128
        %s3956 = scalar_lea.vmem [#allocation8], %s3955
        // Predicated region
        $region41: #{tpu_custom_call.1} parent=31 // pred_check
          %p3957 = pneg %p120
        $region42: #{tpu_custom_call.1} parent=31 // pred_check_branch
          %3959 = sbr.rel (%p3957) target = $region44
        $region43: #{tpu_custom_call.1} parent=31 // pred_region
          %s3960 = smul.u32 8, %s25
          %s3962 = ssub.s32 2048, 2048
          %3963 = vsyncadd %s3953, %s3962
          %s3964 = smul.addr %s3960, 16
          %s3965 = sadd.s32 %s24, %s3964
          %s3966 = smul.addr %s3965, 16
          %s3967 = scalar_lea.hbm %s3, %s3966
          %s3968 = sshll.u32 %s3956, 4
          %s3969 = int_to_ptr.vmem [resolvable:$true] %s3968
          %3974 = dma.vmem_to_hbm [thread:$0]  %s3969, 2048, %s3967, %s3953, 16, 16, 1
        $region44: #{tpu_custom_call.1} parent=31 // pred_fallthru
          _
      $region32: #{tpu_custom_call.1} parent=5 // pred_fallthru
        _
      %p3975 = scmp.le.s32.totalorder 2, %s15
      // Predicated region
      $region45: #{tpu_custom_call.1} parent=5 // pred_check
        %p3976 = pneg %p3975
      $region46: #{tpu_custom_call.1} parent=5 // pred_check_branch
        %3978 = sbr.rel (%p3976) target = $region48
      $region47: #{tpu_custom_call.1} parent=5 // pred_region
        %s3979 = ssub.s32 %s15, 2
        // Predicated region
        $region49: #{tpu_custom_call.1} parent=47 // pred_check
          %p3980 = pneg %p126
        $region50: #{tpu_custom_call.1} parent=47 // pred_check_branch
          %3982 = sbr.rel (%p3980) target = $region52
        $region51: #{tpu_custom_call.1} parent=47 // pred_region
          %s3983 = sand.u32 %s111, 1
          %s3984 = scalar_lea.sflag [#allocation5], %s3983
          %s3985 = sand.u32 %s111, 1
          %s3986 = smul.addr %s3985, 128
          %s3987 = scalar_lea.vmem [#allocation8], %s3986
          %3988 = dma.done %s3984, 2048
        $region52: #{tpu_custom_call.1} parent=47 // pred_fallthru
          _
      $region48: #{tpu_custom_call.1} parent=5 // pred_fallthru
        _
    $region6: #{tpu_custom_call.1} parent=1 // loop_footer
      %s19 = sadd.s32 1, %s15
    $region7: #{tpu_custom_call.1} parent=1 // loop_footer_branch
      %14 = sbr.rel target = $region3
    $region8: #{tpu_custom_call.1} parent=1 // loop_exit
      _
    %3989 = vsyncpa [#allocation4], 1
    %s3990 = scalar_lea.sflag [#allocation4], 1
    %3991 = vsyncpa %s3990, 1
    %3992 = vsyncpa [#allocation5], 1
    %s3993 = scalar_lea.sflag [#allocation5], 1
    %3994 = vsyncpa %s3993, 1
    %3995 = vsyncpa [#allocation6], 1
    %s3996 = scalar_lea.sflag [#allocation6], 1
    %3997 = vsyncpa %s3996, 1

</llo_original>
